<compile_context>
chip_gen: v5e
topology: v5e:2x2
jax: 0.10.0
libtpu: 0.0.40
codegen_flags: <defaults>
</compile_context>

<pallas_src>
import numpy as np
import jax
import jax.numpy as jnp
from jax.experimental import pallas as pl
from jax.experimental.pallas import tpu as pltpu

# -------------------- module hyper-parameters (GroupDelay defaults) ----------
FS = 16000
N_FILTS = 80
N_FFT = 512
HOP_LENGTH = 160
WINDOW_SIZE = 400
ORDER = 16                                       # LPC order hard-coded in forward()
NFREQ = N_FFT // 2 + 1                           # 257
LPC_FFT = 1 << (WINDOW_SIZE - 1).bit_length()    # 512 (autocorr FFT size)
PREEMPH = 0.97

NF_PAD = 264                                     # 257 rounded up to multiple of 8
LAG_PAD = 24                                     # 17 rounded up to multiple of 8
_PI = float(np.pi)


# -------------------- deterministic parameter construction (numpy) -----------
def _hz_to_mel(freqs):
    freqs = np.asarray(freqs, dtype=np.float64)
    f_sp = 200.0 / 3
    mels = freqs / f_sp
    min_log_hz = 1000.0
    min_log_mel = min_log_hz / f_sp
    logstep = np.log(6.4) / 27.0
    return np.where(freqs >= min_log_hz,
                    min_log_mel + np.log(np.maximum(freqs, 1e-12) / min_log_hz) / logstep,
                    mels)


def _mel_to_hz(mels):
    mels = np.asarray(mels, dtype=np.float64)
    f_sp = 200.0 / 3
    freqs = f_sp * mels
    min_log_hz = 1000.0
    min_log_mel = min_log_hz / f_sp
    logstep = np.log(6.4) / 27.0
    return np.where(mels >= min_log_mel,
                    min_log_hz * np.exp(logstep * (mels - min_log_mel)),
                    freqs)


def _mel_filter_bank(sr, n_fft, n_mels):
    """librosa.filters.mel (htk=False, norm='slaney') re-implemented in numpy."""
    n_freqs = n_fft // 2 + 1
    fftfreqs = np.linspace(0.0, sr / 2.0, n_freqs)
    mel_f = _mel_to_hz(np.linspace(_hz_to_mel(0.0), _hz_to_mel(sr / 2.0), n_mels + 2))
    fdiff = np.diff(mel_f)
    ramps = mel_f[:, None] - fftfreqs[None, :]
    weights = np.zeros((n_mels, n_freqs))
    for i in range(n_mels):
        lower = -ramps[i] / fdiff[i]
        upper = ramps[i + 2] / fdiff[i + 1]
        weights[i] = np.maximum(0.0, np.minimum(lower, upper))
    enorm = 2.0 / (mel_f[2:n_mels + 2] - mel_f[:n_mels])
    weights *= enorm[:, None]
    return weights.astype(np.float64)


def _chebwin(M, at=30.0):
    """scipy.signal.windows.chebwin re-implemented in numpy (M even path used)."""
    order = M - 1.0
    beta = np.cosh(1.0 / order * np.arccosh(10 ** (abs(at) / 20.0)))
    k = np.arange(M, dtype=np.float64)
    x = beta * np.cos(np.pi * k / M)
    p = np.zeros_like(x)
    p[x > 1] = np.cosh(order * np.arccosh(x[x > 1]))
    p[x < -1] = (2 * (M % 2) - 1) * np.cosh(order * np.arccosh(-x[x < -1]))
    m = np.abs(x) <= 1
    p[m] = np.cos(order * np.arccos(x[m]))
    if M % 2:
        w = np.real(np.fft.fft(p))
        n = (M + 1) // 2
        w = w[:n]
        w = np.concatenate((w[n - 1:0:-1], w))
    else:
        p = p * np.exp(1.0j * np.pi / M * np.arange(M))
        w = np.real(np.fft.fft(p))
        n = M // 2 + 1
        w = np.concatenate((w[n - 1:0:-1], w[1:n]))
    w = w / np.max(w)
    return w.astype(np.float64)


# -------------------- precomputed tables ---------------------------------------
_kk = np.arange(NFREQ, dtype=np.float64)                 # bins 0..256
_tt = np.arange(WINDOW_SIZE, dtype=np.float64)           # samples 0..399 (rest is zero pad)
_lags = np.arange(ORDER + 1, dtype=np.float64)
_win = _chebwin(WINDOW_SIZE, 30.0)

# Stacked rfft basis with window folded in: rows 0..256 = win*cos(2*pi*k*t/512),
# rows 257..511 = win*sin(2*pi*k*t/512) for k = 1..255 (sin rows k=0,256 are zero).
_ang = 2.0 * np.pi * np.outer(_kk, _tt) / LPC_FFT                         # (257, 400)
_dft2 = np.zeros((LPC_FFT, WINDOW_SIZE), np.float64)
_dft2[:NFREQ] = np.cos(_ang) * _win[None, :]
_dft2[NFREQ:] = np.sin(_ang[1:NFREQ - 1]) * _win[None, :]

# irfft-of-real-even-spectrum basis restricted to lags 0..16, matched to the stacked
# power layout: r_j = sum_k w_k cos(2*pi*j*k/512)/512 * (RE_k^2 + IM_k^2).
_wk = np.full(NFREQ, 2.0); _wk[0] = 1.0; _wk[-1] = 1.0
_cjk = np.cos(2.0 * np.pi * np.outer(_lags, _kk) / LPC_FFT) * _wk[None, :] / LPC_FFT
_idft2 = np.zeros((LAG_PAD, LPC_FFT), np.float64)
_idft2[:ORDER + 1, :NFREQ] = _cjk                       # RE_k^2 terms, k = 0..256
_idft2[:ORDER + 1, NFREQ:] = _cjk[:, 1:NFREQ - 1]       # IM_k^2 terms, k = 1..255

# Stacked H(e^{jw}) basis: rows 0..263 = cos(w_k*j) (padded), rows 264..527 = -sin(w_k*j).
_wlin = np.linspace(0.0, np.pi, NFREQ)
_hkj = np.zeros((2 * NF_PAD, LAG_PAD), np.float64)
_hkj[:NFREQ, :ORDER + 1] = np.cos(np.outer(_wlin, _lags))
_hkj[NF_PAD:NF_PAD + NFREQ, :ORDER + 1] = -np.sin(np.outer(_wlin, _lags))

# Mel projection with (-diff(phase), replicate-pad of Nyquist bin) folded in:
#   mel[m] = sum_{k=0..255} W2[m,k]*(phase[k]-phase[k+1]),  W2[:,255] += melW[:,256]
#          = sum_{k=0..256} G[m,k]*phase[k]
_melw = _mel_filter_bank(FS, N_FFT, N_FILTS)             # (80, 257)
_w2 = _melw[:, :NFREQ - 1].copy()                        # (80, 256)
_w2[:, -1] += _melw[:, NFREQ - 1]
_melg = np.zeros((N_FILTS, NF_PAD), np.float64)
_melg[:, 0] = _w2[:, 0]
_melg[:, 1:NFREQ - 1] = _w2[:, 1:] - _w2[:, :-1]
_melg[:, NFREQ - 1] = -_w2[:, -1]

DFT2_W = jnp.asarray(_dft2, dtype=jnp.float32)    # (512, 400)
IDFT2 = jnp.asarray(_idft2, dtype=jnp.float32)    # (24, 512)
HKJ = jnp.asarray(_hkj, dtype=jnp.float32)        # (528, 24)
MEL_G = jnp.asarray(_melg, dtype=jnp.float32)     # (80, 264)


# -------------------- in-kernel math helpers (VPU + EUP atan2) ----------------
def _atan(x):
    # Cephes-style atan with ONE reciprocal: select numerator/denominator first.
    sgn = jnp.where(x < 0.0, -1.0, 1.0)
    ax = jnp.abs(x)
    big = ax > 2.414213562373095            # tan(3*pi/8)
    med = jnp.logical_and(ax > 0.4142135623730951, jnp.logical_not(big))
    numer = jnp.where(big, -1.0, jnp.where(med, ax - 1.0, ax))
    denom = jnp.where(big, ax, jnp.where(med, ax + 1.0, 1.0))
    xr = numer * pl.reciprocal(denom, approx=True)      # approx: ~1e-4 phase error OK
    y0 = jnp.where(big, _PI / 2, jnp.where(med, _PI / 4, 0.0))
    z = xr * xr
    p = ((((8.05374449538e-2 * z - 1.38776856032e-1) * z + 1.99777106478e-1) * z
          - 3.33329491539e-1) * z * xr + xr)
    return sgn * (y0 + p)


def _atan2(y, x):
    safe_x = jnp.where(x == 0.0, 1.0, x)                 # safe denominator
    z = _atan(y * pl.reciprocal(safe_x, approx=True))
    w = jnp.where(x < 0.0, jnp.where(y < 0.0, -_PI, _PI), 0.0)
    res = w + z
    res = jnp.where(x == 0.0,
                    jnp.where(y > 0.0, _PI / 2,
                              jnp.where(y < 0.0, -_PI / 2, 0.0)),
                    res)
    return res


# -------------------- Pallas kernel -------------------------------------------
def _gd_kernel(frames_ref, dft_ref, idft_ref, hkj_ref, melg_ref, out_ref):
    tn = frames_ref.shape[1]
    f = frames_ref[...]                                                   # (400, tn)

    # --- power spectrum |rfft(win*f, 512)|^2: ONE stacked DFT matmul + square ----
    spec = jnp.dot(dft_ref[...], f, preferred_element_type=jnp.float32)   # (512, tn)
    pwr = spec * spec                                                     # RE^2 / IM^2 stacked

    # --- autocorrelation lags 0..16 = irfft(pwr)[:17] via matmul (MXU) ----------
    rmat = jnp.dot(idft_ref[...], pwr, preferred_element_type=jnp.float32)  # (24, tn)
    r = [rmat[j:j + 1, :] for j in range(ORDER + 1)]                      # each (1, tn)

    # --- Levinson-Durbin recursion (unrolled, lane-parallel over tn frames) -----
    one = jnp.ones((1, tn), jnp.float32)
    zero = jnp.zeros((1, tn), jnp.float32)
    a = [one] + [zero] * ORDER
    e = r[0]
    for i in range(1, ORDER + 1):
        acc = r[i]                                   # a[0] == 1 term
        for j in range(1, i):
            acc = acc + a[j] * r[i - j]
        k = -acc * pl.reciprocal(e + 1e-10, approx=True)   # 16 serialized recips -> approx
        new_a = list(a)
        for j in range(1, i):
            new_a[j] = a[j] + k * a[i - j]
        new_a[i] = k
        a = new_a
        e = e * (1.0 - k * k)

    # --- H(e^{jw}) = sum_j a_j e^{-iwj}: ONE stacked (cos | -sin) matmul ---------
    A = jnp.concatenate(a + [zero] * (LAG_PAD - (ORDER + 1)), axis=0)     # (24, tn)
    HH = jnp.dot(hkj_ref[...], A, preferred_element_type=jnp.float32)     # (528, tn)
    h_re = HH[:NF_PAD, :]                                                 # (264, tn)
    h_im = HH[NF_PAD:, :]                                                 # -sin folded in table

    # --- phase; padded rows (257..263) give atan2(0,0)=0 and hit zero mel columns
    phase = _atan2(h_im, h_re)                                            # (264, tn)

    # --- group delay diff + replicate pad + mel projection, all folded into MEL_G
    mel = jnp.dot(melg_ref[...], phase, preferred_element_type=jnp.float32)  # (80, tn)
    # NOTE: identical to the reference; mel-weighted group delay can be negative,
    # in which case torch.log would also produce NaN (inherited semantics).
    out_ref[...] = jnp.log(mel + 1e-8)


def _gd_pallas(frames_T, tn):
    n_pad = frames_T.shape[1]
    grid = (n_pad // tn,)
    return pl.pallas_call(
        _gd_kernel,
        out_shape=jax.ShapeDtypeStruct((N_FILTS, n_pad), jnp.float32),
        grid_spec=pltpu.PrefetchScalarGridSpec(
            num_scalar_prefetch=0,
            grid=grid,
            in_specs=[
                pl.BlockSpec((WINDOW_SIZE, tn), lambda i: (0, i)),        # frames slab
                pl.BlockSpec((LPC_FFT, WINDOW_SIZE), lambda i: (0, 0)),   # stacked DFT (win folded)
                pl.BlockSpec((LAG_PAD, LPC_FFT), lambda i: (0, 0)),       # IDFT (lags 0..16)
                pl.BlockSpec((2 * NF_PAD, LAG_PAD), lambda i: (0, 0)),    # stacked cos|-sin
                pl.BlockSpec((N_FILTS, NF_PAD), lambda i: (0, 0)),        # mel (diff folded)
            ],
            out_specs=pl.BlockSpec((N_FILTS, tn), lambda i: (0, i)),
        ),
        compiler_params=pltpu.CompilerParams(
            dimension_semantics=("parallel",),          # independent tiles -> v7x 2 TCs
            vmem_limit_bytes=48 * 1024 * 1024),         # headroom, still < v7x physical
    )(frames_T, DFT2_W, IDFT2, HKJ, MEL_G)


def _choose_tn(n):
    """Lane-tile size: as large as practical (amortize per-step overhead) while
    keeping grid length >= 2 when possible so v7x's two TensorCores both get work.
    (1024 is a further sweep candidate; 512 keeps VMEM comfortably low on v7x.)"""
    for tn in (512, 256, 128):
        if n >= 2 * tn:
            return tn
    return 128


# -------------------- forward (glue in plain JAX) ------------------------------
def group_delay_forward(feat, ilens=None):
    """feat: (B, T) float32 raw audio -> (log_mel_group_delays (B,F,80), lens (B,))"""
    feat = feat.astype(jnp.float32)
    B, T = feat.shape

    # pre-emphasis
    x = jnp.concatenate([feat[:, :1], feat[:, 1:] - PREEMPH * feat[:, :-1]], axis=1)

    num_frames = 1 + (T - WINDOW_SIZE) // HOP_LENGTH
    n = B * num_frames
    tn = _choose_tn(n)
    n_pad = ((n + tn - 1) // tn) * tn

    # Time-major framing directly as (400, n_pad): flat-index gather, no transpose,
    # no explicit pad copy (padded columns re-read frame 0 and are discarded later).
    col0 = np.zeros((n_pad,), np.int32)
    col0[:n] = (np.arange(B, dtype=np.int64)[:, None] * T
                + np.arange(num_frames, dtype=np.int64)[None, :] * HOP_LENGTH
                ).reshape(-1).astype(np.int32)
    idx = (jnp.asarray(col0)[None, :]
           + jnp.arange(WINDOW_SIZE, dtype=jnp.int32)[:, None])           # (400, n_pad)
    frames_T = jnp.take(x.reshape(-1), idx, axis=0)                       # (400, n_pad)

    out_pad = _gd_pallas(frames_T, tn)                                    # (80, n_pad)
    log_mel_gd = out_pad[:, :n].T.reshape(B, num_frames, N_FILTS)
    out_lens = jnp.full((B,), num_frames, dtype=jnp.int32)
    return log_mel_gd, out_lens


# -------------------- demo ------------------------------------------------------
if __name__ == "__main__":
    key = jax.random.PRNGKey(0)
    B = 2
    T = WINDOW_SIZE + 7 * HOP_LENGTH          # 1520 samples -> 8 frames
    feat = 0.1 * jax.random.normal(key, (B, T), dtype=jnp.float32)

    log_mel_gd, out_lens = group_delay_forward(feat)
    jax.block_until_ready((log_mel_gd, out_lens))

    assert log_mel_gd.shape == (B, 8, N_FILTS)
    assert out_lens.shape == (B,)
    print("KERNEL_OK")
</pallas_src>

<mosaic_0001>
module attributes {stable_mosaic.version = 11 : i64} {
  func.func @_gd_kernel(%arg0: i32, %arg1: memref<400x128xf32, #tpu.memory_space<vmem>>, %arg2: memref<512x400xf32, #tpu.memory_space<vmem>>, %arg3: memref<24x512xf32, #tpu.memory_space<vmem>>, %arg4: memref<528x24xf32, #tpu.memory_space<vmem>>, %arg5: memref<80x264xf32, #tpu.memory_space<vmem>>, %arg6: memref<80x128xf32, #tpu.memory_space<vmem>>) attributes {dimension_semantics = [#tpu.dimension_semantics<parallel>], iteration_bounds = array<i64: 1>, scalar_prefetch = 0 : i64, scratch_operands = 0 : i64, tpu.core_type = #tpu.core_type<tc>, window_params = [{transform_indices = @transform_0, window_bounds = array<i64: 400, 128>}, {pipeline_mode = #tpu.pipeline_mode<synchronous>, transform_indices = @transform_1, window_bounds = array<i64: 512, 400>}, {pipeline_mode = #tpu.pipeline_mode<synchronous>, transform_indices = @transform_2, window_bounds = array<i64: 24, 512>}, {pipeline_mode = #tpu.pipeline_mode<synchronous>, transform_indices = @transform_3, window_bounds = array<i64: 528, 24>}, {pipeline_mode = #tpu.pipeline_mode<synchronous>, transform_indices = @transform_4, window_bounds = array<i64: 80, 264>}, {transform_indices = @transform_5, window_bounds = array<i64: 80, 128>}]} {
    %c0 = arith.constant 0 : index
    %c0_0 = arith.constant 0 : index
    %0 = vector.load %arg1[%c0, %c0_0] : memref<400x128xf32, #tpu.memory_space<vmem>>, vector<400x128xf32>
    %c0_1 = arith.constant 0 : index
    %c0_2 = arith.constant 0 : index
    %1 = vector.load %arg2[%c0_1, %c0_2] : memref<512x400xf32, #tpu.memory_space<vmem>>, vector<512x400xf32>
    %cst = arith.constant dense<0.000000e+00> : vector<512x128xf32>
    %2 = tpu.matmul %1, %0, %cst {dimension_numbers = #tpu.dot_dimension_numbers<[1], [0], [0], [1], [0, 0, 1, 1], [], []>} : vector<512x400xf32>, vector<400x128xf32>, vector<512x128xf32> -> vector<512x128xf32>
    %3 = arith.mulf %2, %2 : vector<512x128xf32>
    %c0_3 = arith.constant 0 : index
    %c0_4 = arith.constant 0 : index
    %4 = vector.load %arg3[%c0_3, %c0_4] : memref<24x512xf32, #tpu.memory_space<vmem>>, vector<24x512xf32>
    %cst_5 = arith.constant dense<0.000000e+00> : vector<24x128xf32>
    %5 = tpu.matmul %4, %3, %cst_5 {dimension_numbers = #tpu.dot_dimension_numbers<[1], [0], [0], [1], [0, 0, 1, 1], [], []>} : vector<24x512xf32>, vector<512x128xf32>, vector<24x128xf32> -> vector<24x128xf32>
    %6 = vector.extract_strided_slice %5 {offsets = [0, 0], sizes = [1, 128], strides = [1, 1]} : vector<24x128xf32> to vector<1x128xf32>
    %7 = vector.extract_strided_slice %5 {offsets = [1, 0], sizes = [1, 128], strides = [1, 1]} : vector<24x128xf32> to vector<1x128xf32>
    %8 = vector.extract_strided_slice %5 {offsets = [2, 0], sizes = [1, 128], strides = [1, 1]} : vector<24x128xf32> to vector<1x128xf32>
    %9 = vector.extract_strided_slice %5 {offsets = [3, 0], sizes = [1, 128], strides = [1, 1]} : vector<24x128xf32> to vector<1x128xf32>
    %10 = vector.extract_strided_slice %5 {offsets = [4, 0], sizes = [1, 128], strides = [1, 1]} : vector<24x128xf32> to vector<1x128xf32>
    %11 = vector.extract_strided_slice %5 {offsets = [5, 0], sizes = [1, 128], strides = [1, 1]} : vector<24x128xf32> to vector<1x128xf32>
    %12 = vector.extract_strided_slice %5 {offsets = [6, 0], sizes = [1, 128], strides = [1, 1]} : vector<24x128xf32> to vector<1x128xf32>
    %13 = vector.extract_strided_slice %5 {offsets = [7, 0], sizes = [1, 128], strides = [1, 1]} : vector<24x128xf32> to vector<1x128xf32>
    %14 = vector.extract_strided_slice %5 {offsets = [8, 0], sizes = [1, 128], strides = [1, 1]} : vector<24x128xf32> to vector<1x128xf32>
    %15 = vector.extract_strided_slice %5 {offsets = [9, 0], sizes = [1, 128], strides = [1, 1]} : vector<24x128xf32> to vector<1x128xf32>
    %16 = vector.extract_strided_slice %5 {offsets = [10, 0], sizes = [1, 128], strides = [1, 1]} : vector<24x128xf32> to vector<1x128xf32>
    %17 = vector.extract_strided_slice %5 {offsets = [11, 0], sizes = [1, 128], strides = [1, 1]} : vector<24x128xf32> to vector<1x128xf32>
    %18 = vector.extract_strided_slice %5 {offsets = [12, 0], sizes = [1, 128], strides = [1, 1]} : vector<24x128xf32> to vector<1x128xf32>
    %19 = vector.extract_strided_slice %5 {offsets = [13, 0], sizes = [1, 128], strides = [1, 1]} : vector<24x128xf32> to vector<1x128xf32>
    %20 = vector.extract_strided_slice %5 {offsets = [14, 0], sizes = [1, 128], strides = [1, 1]} : vector<24x128xf32> to vector<1x128xf32>
    %21 = vector.extract_strided_slice %5 {offsets = [15, 0], sizes = [1, 128], strides = [1, 1]} : vector<24x128xf32> to vector<1x128xf32>
    %22 = vector.extract_strided_slice %5 {offsets = [16, 0], sizes = [1, 128], strides = [1, 1]} : vector<24x128xf32> to vector<1x128xf32>
    %cst_6 = arith.constant 1.000000e+00 : f32
    %23 = vector.broadcast %cst_6 : f32 to vector<1x128xf32>
    %cst_7 = arith.constant 0.000000e+00 : f32
    %24 = vector.broadcast %cst_7 : f32 to vector<1x128xf32>
    %cst_8 = arith.constant 0.000000e+00 : f32
    %25 = vector.broadcast %cst_8 : f32 to vector<1x128xf32>
    %26 = arith.subf %25, %7 : vector<1x128xf32>
    %cst_9 = arith.constant 1.000000e-10 : f32
    %27 = vector.broadcast %cst_9 : f32 to vector<1x128xf32>
    %28 = arith.addf %6, %27 : vector<1x128xf32>
    %29 = tpu.reciprocal %28 {approx = true} : vector<1x128xf32> -> vector<1x128xf32>
    %30 = arith.mulf %26, %29 : vector<1x128xf32>
    %31 = arith.mulf %30, %30 : vector<1x128xf32>
    %cst_10 = arith.constant 1.000000e+00 : f32
    %32 = vector.broadcast %cst_10 : f32 to vector<1x128xf32>
    %33 = arith.subf %32, %31 : vector<1x128xf32>
    %34 = arith.mulf %6, %33 : vector<1x128xf32>
    %35 = arith.mulf %30, %7 : vector<1x128xf32>
    %36 = arith.addf %8, %35 : vector<1x128xf32>
    %cst_11 = arith.constant 0.000000e+00 : f32
    %37 = vector.broadcast %cst_11 : f32 to vector<1x128xf32>
    %38 = arith.subf %37, %36 : vector<1x128xf32>
    %cst_12 = arith.constant 1.000000e-10 : f32
    %39 = vector.broadcast %cst_12 : f32 to vector<1x128xf32>
    %40 = arith.addf %34, %39 : vector<1x128xf32>
    %41 = tpu.reciprocal %40 {approx = true} : vector<1x128xf32> -> vector<1x128xf32>
    %42 = arith.mulf %38, %41 : vector<1x128xf32>
    %43 = arith.mulf %42, %30 : vector<1x128xf32>
    %44 = arith.addf %30, %43 : vector<1x128xf32>
    %45 = arith.mulf %42, %42 : vector<1x128xf32>
    %cst_13 = arith.constant 1.000000e+00 : f32
    %46 = vector.broadcast %cst_13 : f32 to vector<1x128xf32>
    %47 = arith.subf %46, %45 : vector<1x128xf32>
    %48 = arith.mulf %34, %47 : vector<1x128xf32>
    %49 = arith.mulf %44, %8 : vector<1x128xf32>
    %50 = arith.addf %9, %49 : vector<1x128xf32>
    %51 = arith.mulf %42, %7 : vector<1x128xf32>
    %52 = arith.addf %50, %51 : vector<1x128xf32>
    %cst_14 = arith.constant 0.000000e+00 : f32
    %53 = vector.broadcast %cst_14 : f32 to vector<1x128xf32>
    %54 = arith.subf %53, %52 : vector<1x128xf32>
    %cst_15 = arith.constant 1.000000e-10 : f32
    %55 = vector.broadcast %cst_15 : f32 to vector<1x128xf32>
    %56 = arith.addf %48, %55 : vector<1x128xf32>
    %57 = tpu.reciprocal %56 {approx = true} : vector<1x128xf32> -> vector<1x128xf32>
    %58 = arith.mulf %54, %57 : vector<1x128xf32>
    %59 = arith.mulf %58, %42 : vector<1x128xf32>
    %60 = arith.addf %44, %59 : vector<1x128xf32>
    %61 = arith.mulf %58, %44 : vector<1x128xf32>
    %62 = arith.addf %42, %61 : vector<1x128xf32>
    %63 = arith.mulf %58, %58 : vector<1x128xf32>
    %cst_16 = arith.constant 1.000000e+00 : f32
    %64 = vector.broadcast %cst_16 : f32 to vector<1x128xf32>
    %65 = arith.subf %64, %63 : vector<1x128xf32>
    %66 = arith.mulf %48, %65 : vector<1x128xf32>
    %67 = arith.mulf %60, %9 : vector<1x128xf32>
    %68 = arith.addf %10, %67 : vector<1x128xf32>
    %69 = arith.mulf %62, %8 : vector<1x128xf32>
    %70 = arith.addf %68, %69 : vector<1x128xf32>
    %71 = arith.mulf %58, %7 : vector<1x128xf32>
    %72 = arith.addf %70, %71 : vector<1x128xf32>
    %cst_17 = arith.constant 0.000000e+00 : f32
    %73 = vector.broadcast %cst_17 : f32 to vector<1x128xf32>
    %74 = arith.subf %73, %72 : vector<1x128xf32>
    %cst_18 = arith.constant 1.000000e-10 : f32
    %75 = vector.broadcast %cst_18 : f32 to vector<1x128xf32>
    %76 = arith.addf %66, %75 : vector<1x128xf32>
    %77 = tpu.reciprocal %76 {approx = true} : vector<1x128xf32> -> vector<1x128xf32>
    %78 = arith.mulf %74, %77 : vector<1x128xf32>
    %79 = arith.mulf %78, %58 : vector<1x128xf32>
    %80 = arith.addf %60, %79 : vector<1x128xf32>
    %81 = arith.mulf %78, %62 : vector<1x128xf32>
    %82 = arith.addf %62, %81 : vector<1x128xf32>
    %83 = arith.mulf %78, %60 : vector<1x128xf32>
    %84 = arith.addf %58, %83 : vector<1x128xf32>
    %85 = arith.mulf %78, %78 : vector<1x128xf32>
    %cst_19 = arith.constant 1.000000e+00 : f32
    %86 = vector.broadcast %cst_19 : f32 to vector<1x128xf32>
    %87 = arith.subf %86, %85 : vector<1x128xf32>
    %88 = arith.mulf %66, %87 : vector<1x128xf32>
    %89 = arith.mulf %80, %10 : vector<1x128xf32>
    %90 = arith.addf %11, %89 : vector<1x128xf32>
    %91 = arith.mulf %82, %9 : vector<1x128xf32>
    %92 = arith.addf %90, %91 : vector<1x128xf32>
    %93 = arith.mulf %84, %8 : vector<1x128xf32>
    %94 = arith.addf %92, %93 : vector<1x128xf32>
    %95 = arith.mulf %78, %7 : vector<1x128xf32>
    %96 = arith.addf %94, %95 : vector<1x128xf32>
    %cst_20 = arith.constant 0.000000e+00 : f32
    %97 = vector.broadcast %cst_20 : f32 to vector<1x128xf32>
    %98 = arith.subf %97, %96 : vector<1x128xf32>
    %cst_21 = arith.constant 1.000000e-10 : f32
    %99 = vector.broadcast %cst_21 : f32 to vector<1x128xf32>
    %100 = arith.addf %88, %99 : vector<1x128xf32>
    %101 = tpu.reciprocal %100 {approx = true} : vector<1x128xf32> -> vector<1x128xf32>
    %102 = arith.mulf %98, %101 : vector<1x128xf32>
    %103 = arith.mulf %102, %78 : vector<1x128xf32>
    %104 = arith.addf %80, %103 : vector<1x128xf32>
    %105 = arith.mulf %102, %84 : vector<1x128xf32>
    %106 = arith.addf %82, %105 : vector<1x128xf32>
    %107 = arith.mulf %102, %82 : vector<1x128xf32>
    %108 = arith.addf %84, %107 : vector<1x128xf32>
    %109 = arith.mulf %102, %80 : vector<1x128xf32>
    %110 = arith.addf %78, %109 : vector<1x128xf32>
    %111 = arith.mulf %102, %102 : vector<1x128xf32>
    %cst_22 = arith.constant 1.000000e+00 : f32
    %112 = vector.broadcast %cst_22 : f32 to vector<1x128xf32>
    %113 = arith.subf %112, %111 : vector<1x128xf32>
    %114 = arith.mulf %88, %113 : vector<1x128xf32>
    %115 = arith.mulf %104, %11 : vector<1x128xf32>
    %116 = arith.addf %12, %115 : vector<1x128xf32>
    %117 = arith.mulf %106, %10 : vector<1x128xf32>
    %118 = arith.addf %116, %117 : vector<1x128xf32>
    %119 = arith.mulf %108, %9 : vector<1x128xf32>
    %120 = arith.addf %118, %119 : vector<1x128xf32>
    %121 = arith.mulf %110, %8 : vector<1x128xf32>
    %122 = arith.addf %120, %121 : vector<1x128xf32>
    %123 = arith.mulf %102, %7 : vector<1x128xf32>
    %124 = arith.addf %122, %123 : vector<1x128xf32>
    %cst_23 = arith.constant 0.000000e+00 : f32
    %125 = vector.broadcast %cst_23 : f32 to vector<1x128xf32>
    %126 = arith.subf %125, %124 : vector<1x128xf32>
    %cst_24 = arith.constant 1.000000e-10 : f32
    %127 = vector.broadcast %cst_24 : f32 to vector<1x128xf32>
    %128 = arith.addf %114, %127 : vector<1x128xf32>
    %129 = tpu.reciprocal %128 {approx = true} : vector<1x128xf32> -> vector<1x128xf32>
    %130 = arith.mulf %126, %129 : vector<1x128xf32>
    %131 = arith.mulf %130, %102 : vector<1x128xf32>
    %132 = arith.addf %104, %131 : vector<1x128xf32>
    %133 = arith.mulf %130, %110 : vector<1x128xf32>
    %134 = arith.addf %106, %133 : vector<1x128xf32>
    %135 = arith.mulf %130, %108 : vector<1x128xf32>
    %136 = arith.addf %108, %135 : vector<1x128xf32>
    %137 = arith.mulf %130, %106 : vector<1x128xf32>
    %138 = arith.addf %110, %137 : vector<1x128xf32>
    %139 = arith.mulf %130, %104 : vector<1x128xf32>
    %140 = arith.addf %102, %139 : vector<1x128xf32>
    %141 = arith.mulf %130, %130 : vector<1x128xf32>
    %cst_25 = arith.constant 1.000000e+00 : f32
    %142 = vector.broadcast %cst_25 : f32 to vector<1x128xf32>
    %143 = arith.subf %142, %141 : vector<1x128xf32>
    %144 = arith.mulf %114, %143 : vector<1x128xf32>
    %145 = arith.mulf %132, %12 : vector<1x128xf32>
    %146 = arith.addf %13, %145 : vector<1x128xf32>
    %147 = arith.mulf %134, %11 : vector<1x128xf32>
    %148 = arith.addf %146, %147 : vector<1x128xf32>
    %149 = arith.mulf %136, %10 : vector<1x128xf32>
    %150 = arith.addf %148, %149 : vector<1x128xf32>
    %151 = arith.mulf %138, %9 : vector<1x128xf32>
    %152 = arith.addf %150, %151 : vector<1x128xf32>
    %153 = arith.mulf %140, %8 : vector<1x128xf32>
    %154 = arith.addf %152, %153 : vector<1x128xf32>
    %155 = arith.mulf %130, %7 : vector<1x128xf32>
    %156 = arith.addf %154, %155 : vector<1x128xf32>
    %cst_26 = arith.constant 0.000000e+00 : f32
    %157 = vector.broadcast %cst_26 : f32 to vector<1x128xf32>
    %158 = arith.subf %157, %156 : vector<1x128xf32>
    %cst_27 = arith.constant 1.000000e-10 : f32
    %159 = vector.broadcast %cst_27 : f32 to vector<1x128xf32>
    %160 = arith.addf %144, %159 : vector<1x128xf32>
    %161 = tpu.reciprocal %160 {approx = true} : vector<1x128xf32> -> vector<1x128xf32>
    %162 = arith.mulf %158, %161 : vector<1x128xf32>
    %163 = arith.mulf %162, %130 : vector<1x128xf32>
    %164 = arith.addf %132, %163 : vector<1x128xf32>
    %165 = arith.mulf %162, %140 : vector<1x128xf32>
    %166 = arith.addf %134, %165 : vector<1x128xf32>
    %167 = arith.mulf %162, %138 : vector<1x128xf32>
    %168 = arith.addf %136, %167 : vector<1x128xf32>
    %169 = arith.mulf %162, %136 : vector<1x128xf32>
    %170 = arith.addf %138, %169 : vector<1x128xf32>
    %171 = arith.mulf %162, %134 : vector<1x128xf32>
    %172 = arith.addf %140, %171 : vector<1x128xf32>
    %173 = arith.mulf %162, %132 : vector<1x128xf32>
    %174 = arith.addf %130, %173 : vector<1x128xf32>
    %175 = arith.mulf %162, %162 : vector<1x128xf32>
    %cst_28 = arith.constant 1.000000e+00 : f32
    %176 = vector.broadcast %cst_28 : f32 to vector<1x128xf32>
    %177 = arith.subf %176, %175 : vector<1x128xf32>
    %178 = arith.mulf %144, %177 : vector<1x128xf32>
    %179 = arith.mulf %164, %13 : vector<1x128xf32>
    %180 = arith.addf %14, %179 : vector<1x128xf32>
    %181 = arith.mulf %166, %12 : vector<1x128xf32>
    %182 = arith.addf %180, %181 : vector<1x128xf32>
    %183 = arith.mulf %168, %11 : vector<1x128xf32>
    %184 = arith.addf %182, %183 : vector<1x128xf32>
    %185 = arith.mulf %170, %10 : vector<1x128xf32>
    %186 = arith.addf %184, %185 : vector<1x128xf32>
    %187 = arith.mulf %172, %9 : vector<1x128xf32>
    %188 = arith.addf %186, %187 : vector<1x128xf32>
    %189 = arith.mulf %174, %8 : vector<1x128xf32>
    %190 = arith.addf %188, %189 : vector<1x128xf32>
    %191 = arith.mulf %162, %7 : vector<1x128xf32>
    %192 = arith.addf %190, %191 : vector<1x128xf32>
    %cst_29 = arith.constant 0.000000e+00 : f32
    %193 = vector.broadcast %cst_29 : f32 to vector<1x128xf32>
    %194 = arith.subf %193, %192 : vector<1x128xf32>
    %cst_30 = arith.constant 1.000000e-10 : f32
    %195 = vector.broadcast %cst_30 : f32 to vector<1x128xf32>
    %196 = arith.addf %178, %195 : vector<1x128xf32>
    %197 = tpu.reciprocal %196 {approx = true} : vector<1x128xf32> -> vector<1x128xf32>
    %198 = arith.mulf %194, %197 : vector<1x128xf32>
    %199 = arith.mulf %198, %162 : vector<1x128xf32>
    %200 = arith.addf %164, %199 : vector<1x128xf32>
    %201 = arith.mulf %198, %174 : vector<1x128xf32>
    %202 = arith.addf %166, %201 : vector<1x128xf32>
    %203 = arith.mulf %198, %172 : vector<1x128xf32>
    %204 = arith.addf %168, %203 : vector<1x128xf32>
    %205 = arith.mulf %198, %170 : vector<1x128xf32>
    %206 = arith.addf %170, %205 : vector<1x128xf32>
    %207 = arith.mulf %198, %168 : vector<1x128xf32>
    %208 = arith.addf %172, %207 : vector<1x128xf32>
    %209 = arith.mulf %198, %166 : vector<1x128xf32>
    %210 = arith.addf %174, %209 : vector<1x128xf32>
    %211 = arith.mulf %198, %164 : vector<1x128xf32>
    %212 = arith.addf %162, %211 : vector<1x128xf32>
    %213 = arith.mulf %198, %198 : vector<1x128xf32>
    %cst_31 = arith.constant 1.000000e+00 : f32
    %214 = vector.broadcast %cst_31 : f32 to vector<1x128xf32>
    %215 = arith.subf %214, %213 : vector<1x128xf32>
    %216 = arith.mulf %178, %215 : vector<1x128xf32>
    %217 = arith.mulf %200, %14 : vector<1x128xf32>
    %218 = arith.addf %15, %217 : vector<1x128xf32>
    %219 = arith.mulf %202, %13 : vector<1x128xf32>
    %220 = arith.addf %218, %219 : vector<1x128xf32>
    %221 = arith.mulf %204, %12 : vector<1x128xf32>
    %222 = arith.addf %220, %221 : vector<1x128xf32>
    %223 = arith.mulf %206, %11 : vector<1x128xf32>
    %224 = arith.addf %222, %223 : vector<1x128xf32>
    %225 = arith.mulf %208, %10 : vector<1x128xf32>
    %226 = arith.addf %224, %225 : vector<1x128xf32>
    %227 = arith.mulf %210, %9 : vector<1x128xf32>
    %228 = arith.addf %226, %227 : vector<1x128xf32>
    %229 = arith.mulf %212, %8 : vector<1x128xf32>
    %230 = arith.addf %228, %229 : vector<1x128xf32>
    %231 = arith.mulf %198, %7 : vector<1x128xf32>
    %232 = arith.addf %230, %231 : vector<1x128xf32>
    %cst_32 = arith.constant 0.000000e+00 : f32
    %233 = vector.broadcast %cst_32 : f32 to vector<1x128xf32>
    %234 = arith.subf %233, %232 : vector<1x128xf32>
    %cst_33 = arith.constant 1.000000e-10 : f32
    %235 = vector.broadcast %cst_33 : f32 to vector<1x128xf32>
    %236 = arith.addf %216, %235 : vector<1x128xf32>
    %237 = tpu.reciprocal %236 {approx = true} : vector<1x128xf32> -> vector<1x128xf32>
    %238 = arith.mulf %234, %237 : vector<1x128xf32>
    %239 = arith.mulf %238, %198 : vector<1x128xf32>
    %240 = arith.addf %200, %239 : vector<1x128xf32>
    %241 = arith.mulf %238, %212 : vector<1x128xf32>
    %242 = arith.addf %202, %241 : vector<1x128xf32>
    %243 = arith.mulf %238, %210 : vector<1x128xf32>
    %244 = arith.addf %204, %243 : vector<1x128xf32>
    %245 = arith.mulf %238, %208 : vector<1x128xf32>
    %246 = arith.addf %206, %245 : vector<1x128xf32>
    %247 = arith.mulf %238, %206 : vector<1x128xf32>
    %248 = arith.addf %208, %247 : vector<1x128xf32>
    %249 = arith.mulf %238, %204 : vector<1x128xf32>
    %250 = arith.addf %210, %249 : vector<1x128xf32>
    %251 = arith.mulf %238, %202 : vector<1x128xf32>
    %252 = arith.addf %212, %251 : vector<1x128xf32>
    %253 = arith.mulf %238, %200 : vector<1x128xf32>
    %254 = arith.addf %198, %253 : vector<1x128xf32>
    %255 = arith.mulf %238, %238 : vector<1x128xf32>
    %cst_34 = arith.constant 1.000000e+00 : f32
    %256 = vector.broadcast %cst_34 : f32 to vector<1x128xf32>
    %257 = arith.subf %256, %255 : vector<1x128xf32>
    %258 = arith.mulf %216, %257 : vector<1x128xf32>
    %259 = arith.mulf %240, %15 : vector<1x128xf32>
    %260 = arith.addf %16, %259 : vector<1x128xf32>
    %261 = arith.mulf %242, %14 : vector<1x128xf32>
    %262 = arith.addf %260, %261 : vector<1x128xf32>
    %263 = arith.mulf %244, %13 : vector<1x128xf32>
    %264 = arith.addf %262, %263 : vector<1x128xf32>
    %265 = arith.mulf %246, %12 : vector<1x128xf32>
    %266 = arith.addf %264, %265 : vector<1x128xf32>
    %267 = arith.mulf %248, %11 : vector<1x128xf32>
    %268 = arith.addf %266, %267 : vector<1x128xf32>
    %269 = arith.mulf %250, %10 : vector<1x128xf32>
    %270 = arith.addf %268, %269 : vector<1x128xf32>
    %271 = arith.mulf %252, %9 : vector<1x128xf32>
    %272 = arith.addf %270, %271 : vector<1x128xf32>
    %273 = arith.mulf %254, %8 : vector<1x128xf32>
    %274 = arith.addf %272, %273 : vector<1x128xf32>
    %275 = arith.mulf %238, %7 : vector<1x128xf32>
    %276 = arith.addf %274, %275 : vector<1x128xf32>
    %cst_35 = arith.constant 0.000000e+00 : f32
    %277 = vector.broadcast %cst_35 : f32 to vector<1x128xf32>
    %278 = arith.subf %277, %276 : vector<1x128xf32>
    %cst_36 = arith.constant 1.000000e-10 : f32
    %279 = vector.broadcast %cst_36 : f32 to vector<1x128xf32>
    %280 = arith.addf %258, %279 : vector<1x128xf32>
    %281 = tpu.reciprocal %280 {approx = true} : vector<1x128xf32> -> vector<1x128xf32>
    %282 = arith.mulf %278, %281 : vector<1x128xf32>
    %283 = arith.mulf %282, %238 : vector<1x128xf32>
    %284 = arith.addf %240, %283 : vector<1x128xf32>
    %285 = arith.mulf %282, %254 : vector<1x128xf32>
    %286 = arith.addf %242, %285 : vector<1x128xf32>
    %287 = arith.mulf %282, %252 : vector<1x128xf32>
    %288 = arith.addf %244, %287 : vector<1x128xf32>
    %289 = arith.mulf %282, %250 : vector<1x128xf32>
    %290 = arith.addf %246, %289 : vector<1x128xf32>
    %291 = arith.mulf %282, %248 : vector<1x128xf32>
    %292 = arith.addf %248, %291 : vector<1x128xf32>
    %293 = arith.mulf %282, %246 : vector<1x128xf32>
    %294 = arith.addf %250, %293 : vector<1x128xf32>
    %295 = arith.mulf %282, %244 : vector<1x128xf32>
    %296 = arith.addf %252, %295 : vector<1x128xf32>
    %297 = arith.mulf %282, %242 : vector<1x128xf32>
    %298 = arith.addf %254, %297 : vector<1x128xf32>
    %299 = arith.mulf %282, %240 : vector<1x128xf32>
    %300 = arith.addf %238, %299 : vector<1x128xf32>
    %301 = arith.mulf %282, %282 : vector<1x128xf32>
    %cst_37 = arith.constant 1.000000e+00 : f32
    %302 = vector.broadcast %cst_37 : f32 to vector<1x128xf32>
    %303 = arith.subf %302, %301 : vector<1x128xf32>
    %304 = arith.mulf %258, %303 : vector<1x128xf32>
    %305 = arith.mulf %284, %16 : vector<1x128xf32>
    %306 = arith.addf %17, %305 : vector<1x128xf32>
    %307 = arith.mulf %286, %15 : vector<1x128xf32>
    %308 = arith.addf %306, %307 : vector<1x128xf32>
    %309 = arith.mulf %288, %14 : vector<1x128xf32>
    %310 = arith.addf %308, %309 : vector<1x128xf32>
    %311 = arith.mulf %290, %13 : vector<1x128xf32>
    %312 = arith.addf %310, %311 : vector<1x128xf32>
    %313 = arith.mulf %292, %12 : vector<1x128xf32>
    %314 = arith.addf %312, %313 : vector<1x128xf32>
    %315 = arith.mulf %294, %11 : vector<1x128xf32>
    %316 = arith.addf %314, %315 : vector<1x128xf32>
    %317 = arith.mulf %296, %10 : vector<1x128xf32>
    %318 = arith.addf %316, %317 : vector<1x128xf32>
    %319 = arith.mulf %298, %9 : vector<1x128xf32>
    %320 = arith.addf %318, %319 : vector<1x128xf32>
    %321 = arith.mulf %300, %8 : vector<1x128xf32>
    %322 = arith.addf %320, %321 : vector<1x128xf32>
    %323 = arith.mulf %282, %7 : vector<1x128xf32>
    %324 = arith.addf %322, %323 : vector<1x128xf32>
    %cst_38 = arith.constant 0.000000e+00 : f32
    %325 = vector.broadcast %cst_38 : f32 to vector<1x128xf32>
    %326 = arith.subf %325, %324 : vector<1x128xf32>
    %cst_39 = arith.constant 1.000000e-10 : f32
    %327 = vector.broadcast %cst_39 : f32 to vector<1x128xf32>
    %328 = arith.addf %304, %327 : vector<1x128xf32>
    %329 = tpu.reciprocal %328 {approx = true} : vector<1x128xf32> -> vector<1x128xf32>
    %330 = arith.mulf %326, %329 : vector<1x128xf32>
    %331 = arith.mulf %330, %282 : vector<1x128xf32>
    %332 = arith.addf %284, %331 : vector<1x128xf32>
    %333 = arith.mulf %330, %300 : vector<1x128xf32>
    %334 = arith.addf %286, %333 : vector<1x128xf32>
    %335 = arith.mulf %330, %298 : vector<1x128xf32>
    %336 = arith.addf %288, %335 : vector<1x128xf32>
    %337 = arith.mulf %330, %296 : vector<1x128xf32>
    %338 = arith.addf %290, %337 : vector<1x128xf32>
    %339 = arith.mulf %330, %294 : vector<1x128xf32>
    %340 = arith.addf %292, %339 : vector<1x128xf32>
    %341 = arith.mulf %330, %292 : vector<1x128xf32>
    %342 = arith.addf %294, %341 : vector<1x128xf32>
    %343 = arith.mulf %330, %290 : vector<1x128xf32>
    %344 = arith.addf %296, %343 : vector<1x128xf32>
    %345 = arith.mulf %330, %288 : vector<1x128xf32>
    %346 = arith.addf %298, %345 : vector<1x128xf32>
    %347 = arith.mulf %330, %286 : vector<1x128xf32>
    %348 = arith.addf %300, %347 : vector<1x128xf32>
    %349 = arith.mulf %330, %284 : vector<1x128xf32>
    %350 = arith.addf %282, %349 : vector<1x128xf32>
    %351 = arith.mulf %330, %330 : vector<1x128xf32>
    %cst_40 = arith.constant 1.000000e+00 : f32
    %352 = vector.broadcast %cst_40 : f32 to vector<1x128xf32>
    %353 = arith.subf %352, %351 : vector<1x128xf32>
    %354 = arith.mulf %304, %353 : vector<1x128xf32>
    %355 = arith.mulf %332, %17 : vector<1x128xf32>
    %356 = arith.addf %18, %355 : vector<1x128xf32>
    %357 = arith.mulf %334, %16 : vector<1x128xf32>
    %358 = arith.addf %356, %357 : vector<1x128xf32>
    %359 = arith.mulf %336, %15 : vector<1x128xf32>
    %360 = arith.addf %358, %359 : vector<1x128xf32>
    %361 = arith.mulf %338, %14 : vector<1x128xf32>
    %362 = arith.addf %360, %361 : vector<1x128xf32>
    %363 = arith.mulf %340, %13 : vector<1x128xf32>
    %364 = arith.addf %362, %363 : vector<1x128xf32>
    %365 = arith.mulf %342, %12 : vector<1x128xf32>
    %366 = arith.addf %364, %365 : vector<1x128xf32>
    %367 = arith.mulf %344, %11 : vector<1x128xf32>
    %368 = arith.addf %366, %367 : vector<1x128xf32>
    %369 = arith.mulf %346, %10 : vector<1x128xf32>
    %370 = arith.addf %368, %369 : vector<1x128xf32>
    %371 = arith.mulf %348, %9 : vector<1x128xf32>
    %372 = arith.addf %370, %371 : vector<1x128xf32>
    %373 = arith.mulf %350, %8 : vector<1x128xf32>
    %374 = arith.addf %372, %373 : vector<1x128xf32>
    %375 = arith.mulf %330, %7 : vector<1x128xf32>
    %376 = arith.addf %374, %375 : vector<1x128xf32>
    %cst_41 = arith.constant 0.000000e+00 : f32
    %377 = vector.broadcast %cst_41 : f32 to vector<1x128xf32>
    %378 = arith.subf %377, %376 : vector<1x128xf32>
    %cst_42 = arith.constant 1.000000e-10 : f32
    %379 = vector.broadcast %cst_42 : f32 to vector<1x128xf32>
    %380 = arith.addf %354, %379 : vector<1x128xf32>
    %381 = tpu.reciprocal %380 {approx = true} : vector<1x128xf32> -> vector<1x128xf32>
    %382 = arith.mulf %378, %381 : vector<1x128xf32>
    %383 = arith.mulf %382, %330 : vector<1x128xf32>
    %384 = arith.addf %332, %383 : vector<1x128xf32>
    %385 = arith.mulf %382, %350 : vector<1x128xf32>
    %386 = arith.addf %334, %385 : vector<1x128xf32>
    %387 = arith.mulf %382, %348 : vector<1x128xf32>
    %388 = arith.addf %336, %387 : vector<1x128xf32>
    %389 = arith.mulf %382, %346 : vector<1x128xf32>
    %390 = arith.addf %338, %389 : vector<1x128xf32>
    %391 = arith.mulf %382, %344 : vector<1x128xf32>
    %392 = arith.addf %340, %391 : vector<1x128xf32>
    %393 = arith.mulf %382, %342 : vector<1x128xf32>
    %394 = arith.addf %342, %393 : vector<1x128xf32>
    %395 = arith.mulf %382, %340 : vector<1x128xf32>
    %396 = arith.addf %344, %395 : vector<1x128xf32>
    %397 = arith.mulf %382, %338 : vector<1x128xf32>
    %398 = arith.addf %346, %397 : vector<1x128xf32>
    %399 = arith.mulf %382, %336 : vector<1x128xf32>
    %400 = arith.addf %348, %399 : vector<1x128xf32>
    %401 = arith.mulf %382, %334 : vector<1x128xf32>
    %402 = arith.addf %350, %401 : vector<1x128xf32>
    %403 = arith.mulf %382, %332 : vector<1x128xf32>
    %404 = arith.addf %330, %403 : vector<1x128xf32>
    %405 = arith.mulf %382, %382 : vector<1x128xf32>
    %cst_43 = arith.constant 1.000000e+00 : f32
    %406 = vector.broadcast %cst_43 : f32 to vector<1x128xf32>
    %407 = arith.subf %406, %405 : vector<1x128xf32>
    %408 = arith.mulf %354, %407 : vector<1x128xf32>
    %409 = arith.mulf %384, %18 : vector<1x128xf32>
    %410 = arith.addf %19, %409 : vector<1x128xf32>
    %411 = arith.mulf %386, %17 : vector<1x128xf32>
    %412 = arith.addf %410, %411 : vector<1x128xf32>
    %413 = arith.mulf %388, %16 : vector<1x128xf32>
    %414 = arith.addf %412, %413 : vector<1x128xf32>
    %415 = arith.mulf %390, %15 : vector<1x128xf32>
    %416 = arith.addf %414, %415 : vector<1x128xf32>
    %417 = arith.mulf %392, %14 : vector<1x128xf32>
    %418 = arith.addf %416, %417 : vector<1x128xf32>
    %419 = arith.mulf %394, %13 : vector<1x128xf32>
    %420 = arith.addf %418, %419 : vector<1x128xf32>
    %421 = arith.mulf %396, %12 : vector<1x128xf32>
    %422 = arith.addf %420, %421 : vector<1x128xf32>
    %423 = arith.mulf %398, %11 : vector<1x128xf32>
    %424 = arith.addf %422, %423 : vector<1x128xf32>
    %425 = arith.mulf %400, %10 : vector<1x128xf32>
    %426 = arith.addf %424, %425 : vector<1x128xf32>
    %427 = arith.mulf %402, %9 : vector<1x128xf32>
    %428 = arith.addf %426, %427 : vector<1x128xf32>
    %429 = arith.mulf %404, %8 : vector<1x128xf32>
    %430 = arith.addf %428, %429 : vector<1x128xf32>
    %431 = arith.mulf %382, %7 : vector<1x128xf32>
    %432 = arith.addf %430, %431 : vector<1x128xf32>
    %cst_44 = arith.constant 0.000000e+00 : f32
    %433 = vector.broadcast %cst_44 : f32 to vector<1x128xf32>
    %434 = arith.subf %433, %432 : vector<1x128xf32>
    %cst_45 = arith.constant 1.000000e-10 : f32
    %435 = vector.broadcast %cst_45 : f32 to vector<1x128xf32>
    %436 = arith.addf %408, %435 : vector<1x128xf32>
    %437 = tpu.reciprocal %436 {approx = true} : vector<1x128xf32> -> vector<1x128xf32>
    %438 = arith.mulf %434, %437 : vector<1x128xf32>
    %439 = arith.mulf %438, %382 : vector<1x128xf32>
    %440 = arith.addf %384, %439 : vector<1x128xf32>
    %441 = arith.mulf %438, %404 : vector<1x128xf32>
    %442 = arith.addf %386, %441 : vector<1x128xf32>
    %443 = arith.mulf %438, %402 : vector<1x128xf32>
    %444 = arith.addf %388, %443 : vector<1x128xf32>
    %445 = arith.mulf %438, %400 : vector<1x128xf32>
    %446 = arith.addf %390, %445 : vector<1x128xf32>
    %447 = arith.mulf %438, %398 : vector<1x128xf32>
    %448 = arith.addf %392, %447 : vector<1x128xf32>
    %449 = arith.mulf %438, %396 : vector<1x128xf32>
    %450 = arith.addf %394, %449 : vector<1x128xf32>
    %451 = arith.mulf %438, %394 : vector<1x128xf32>
    %452 = arith.addf %396, %451 : vector<1x128xf32>
    %453 = arith.mulf %438, %392 : vector<1x128xf32>
    %454 = arith.addf %398, %453 : vector<1x128xf32>
    %455 = arith.mulf %438, %390 : vector<1x128xf32>
    %456 = arith.addf %400, %455 : vector<1x128xf32>
    %457 = arith.mulf %438, %388 : vector<1x128xf32>
    %458 = arith.addf %402, %457 : vector<1x128xf32>
    %459 = arith.mulf %438, %386 : vector<1x128xf32>
    %460 = arith.addf %404, %459 : vector<1x128xf32>
    %461 = arith.mulf %438, %384 : vector<1x128xf32>
    %462 = arith.addf %382, %461 : vector<1x128xf32>
    %463 = arith.mulf %438, %438 : vector<1x128xf32>
    %cst_46 = arith.constant 1.000000e+00 : f32
    %464 = vector.broadcast %cst_46 : f32 to vector<1x128xf32>
    %465 = arith.subf %464, %463 : vector<1x128xf32>
    %466 = arith.mulf %408, %465 : vector<1x128xf32>
    %467 = arith.mulf %440, %19 : vector<1x128xf32>
    %468 = arith.addf %20, %467 : vector<1x128xf32>
    %469 = arith.mulf %442, %18 : vector<1x128xf32>
    %470 = arith.addf %468, %469 : vector<1x128xf32>
    %471 = arith.mulf %444, %17 : vector<1x128xf32>
    %472 = arith.addf %470, %471 : vector<1x128xf32>
    %473 = arith.mulf %446, %16 : vector<1x128xf32>
    %474 = arith.addf %472, %473 : vector<1x128xf32>
    %475 = arith.mulf %448, %15 : vector<1x128xf32>
    %476 = arith.addf %474, %475 : vector<1x128xf32>
    %477 = arith.mulf %450, %14 : vector<1x128xf32>
    %478 = arith.addf %476, %477 : vector<1x128xf32>
    %479 = arith.mulf %452, %13 : vector<1x128xf32>
    %480 = arith.addf %478, %479 : vector<1x128xf32>
    %481 = arith.mulf %454, %12 : vector<1x128xf32>
    %482 = arith.addf %480, %481 : vector<1x128xf32>
    %483 = arith.mulf %456, %11 : vector<1x128xf32>
    %484 = arith.addf %482, %483 : vector<1x128xf32>
    %485 = arith.mulf %458, %10 : vector<1x128xf32>
    %486 = arith.addf %484, %485 : vector<1x128xf32>
    %487 = arith.mulf %460, %9 : vector<1x128xf32>
    %488 = arith.addf %486, %487 : vector<1x128xf32>
    %489 = arith.mulf %462, %8 : vector<1x128xf32>
    %490 = arith.addf %488, %489 : vector<1x128xf32>
    %491 = arith.mulf %438, %7 : vector<1x128xf32>
    %492 = arith.addf %490, %491 : vector<1x128xf32>
    %cst_47 = arith.constant 0.000000e+00 : f32
    %493 = vector.broadcast %cst_47 : f32 to vector<1x128xf32>
    %494 = arith.subf %493, %492 : vector<1x128xf32>
    %cst_48 = arith.constant 1.000000e-10 : f32
    %495 = vector.broadcast %cst_48 : f32 to vector<1x128xf32>
    %496 = arith.addf %466, %495 : vector<1x128xf32>
    %497 = tpu.reciprocal %496 {approx = true} : vector<1x128xf32> -> vector<1x128xf32>
    %498 = arith.mulf %494, %497 : vector<1x128xf32>
    %499 = arith.mulf %498, %438 : vector<1x128xf32>
    %500 = arith.addf %440, %499 : vector<1x128xf32>
    %501 = arith.mulf %498, %462 : vector<1x128xf32>
    %502 = arith.addf %442, %501 : vector<1x128xf32>
    %503 = arith.mulf %498, %460 : vector<1x128xf32>
    %504 = arith.addf %444, %503 : vector<1x128xf32>
    %505 = arith.mulf %498, %458 : vector<1x128xf32>
    %506 = arith.addf %446, %505 : vector<1x128xf32>
    %507 = arith.mulf %498, %456 : vector<1x128xf32>
    %508 = arith.addf %448, %507 : vector<1x128xf32>
    %509 = arith.mulf %498, %454 : vector<1x128xf32>
    %510 = arith.addf %450, %509 : vector<1x128xf32>
    %511 = arith.mulf %498, %452 : vector<1x128xf32>
    %512 = arith.addf %452, %511 : vector<1x128xf32>
    %513 = arith.mulf %498, %450 : vector<1x128xf32>
    %514 = arith.addf %454, %513 : vector<1x128xf32>
    %515 = arith.mulf %498, %448 : vector<1x128xf32>
    %516 = arith.addf %456, %515 : vector<1x128xf32>
    %517 = arith.mulf %498, %446 : vector<1x128xf32>
    %518 = arith.addf %458, %517 : vector<1x128xf32>
    %519 = arith.mulf %498, %444 : vector<1x128xf32>
    %520 = arith.addf %460, %519 : vector<1x128xf32>
    %521 = arith.mulf %498, %442 : vector<1x128xf32>
    %522 = arith.addf %462, %521 : vector<1x128xf32>
    %523 = arith.mulf %498, %440 : vector<1x128xf32>
    %524 = arith.addf %438, %523 : vector<1x128xf32>
    %525 = arith.mulf %498, %498 : vector<1x128xf32>
    %cst_49 = arith.constant 1.000000e+00 : f32
    %526 = vector.broadcast %cst_49 : f32 to vector<1x128xf32>
    %527 = arith.subf %526, %525 : vector<1x128xf32>
    %528 = arith.mulf %466, %527 : vector<1x128xf32>
    %529 = arith.mulf %500, %20 : vector<1x128xf32>
    %530 = arith.addf %21, %529 : vector<1x128xf32>
    %531 = arith.mulf %502, %19 : vector<1x128xf32>
    %532 = arith.addf %530, %531 : vector<1x128xf32>
    %533 = arith.mulf %504, %18 : vector<1x128xf32>
    %534 = arith.addf %532, %533 : vector<1x128xf32>
    %535 = arith.mulf %506, %17 : vector<1x128xf32>
    %536 = arith.addf %534, %535 : vector<1x128xf32>
    %537 = arith.mulf %508, %16 : vector<1x128xf32>
    %538 = arith.addf %536, %537 : vector<1x128xf32>
    %539 = arith.mulf %510, %15 : vector<1x128xf32>
    %540 = arith.addf %538, %539 : vector<1x128xf32>
    %541 = arith.mulf %512, %14 : vector<1x128xf32>
    %542 = arith.addf %540, %541 : vector<1x128xf32>
    %543 = arith.mulf %514, %13 : vector<1x128xf32>
    %544 = arith.addf %542, %543 : vector<1x128xf32>
    %545 = arith.mulf %516, %12 : vector<1x128xf32>
    %546 = arith.addf %544, %545 : vector<1x128xf32>
    %547 = arith.mulf %518, %11 : vector<1x128xf32>
    %548 = arith.addf %546, %547 : vector<1x128xf32>
    %549 = arith.mulf %520, %10 : vector<1x128xf32>
    %550 = arith.addf %548, %549 : vector<1x128xf32>
    %551 = arith.mulf %522, %9 : vector<1x128xf32>
    %552 = arith.addf %550, %551 : vector<1x128xf32>
    %553 = arith.mulf %524, %8 : vector<1x128xf32>
    %554 = arith.addf %552, %553 : vector<1x128xf32>
    %555 = arith.mulf %498, %7 : vector<1x128xf32>
    %556 = arith.addf %554, %555 : vector<1x128xf32>
    %cst_50 = arith.constant 0.000000e+00 : f32
    %557 = vector.broadcast %cst_50 : f32 to vector<1x128xf32>
    %558 = arith.subf %557, %556 : vector<1x128xf32>
    %cst_51 = arith.constant 1.000000e-10 : f32
    %559 = vector.broadcast %cst_51 : f32 to vector<1x128xf32>
    %560 = arith.addf %528, %559 : vector<1x128xf32>
    %561 = tpu.reciprocal %560 {approx = true} : vector<1x128xf32> -> vector<1x128xf32>
    %562 = arith.mulf %558, %561 : vector<1x128xf32>
    %563 = arith.mulf %562, %498 : vector<1x128xf32>
    %564 = arith.addf %500, %563 : vector<1x128xf32>
    %565 = arith.mulf %562, %524 : vector<1x128xf32>
    %566 = arith.addf %502, %565 : vector<1x128xf32>
    %567 = arith.mulf %562, %522 : vector<1x128xf32>
    %568 = arith.addf %504, %567 : vector<1x128xf32>
    %569 = arith.mulf %562, %520 : vector<1x128xf32>
    %570 = arith.addf %506, %569 : vector<1x128xf32>
    %571 = arith.mulf %562, %518 : vector<1x128xf32>
    %572 = arith.addf %508, %571 : vector<1x128xf32>
    %573 = arith.mulf %562, %516 : vector<1x128xf32>
    %574 = arith.addf %510, %573 : vector<1x128xf32>
    %575 = arith.mulf %562, %514 : vector<1x128xf32>
    %576 = arith.addf %512, %575 : vector<1x128xf32>
    %577 = arith.mulf %562, %512 : vector<1x128xf32>
    %578 = arith.addf %514, %577 : vector<1x128xf32>
    %579 = arith.mulf %562, %510 : vector<1x128xf32>
    %580 = arith.addf %516, %579 : vector<1x128xf32>
    %581 = arith.mulf %562, %508 : vector<1x128xf32>
    %582 = arith.addf %518, %581 : vector<1x128xf32>
    %583 = arith.mulf %562, %506 : vector<1x128xf32>
    %584 = arith.addf %520, %583 : vector<1x128xf32>
    %585 = arith.mulf %562, %504 : vector<1x128xf32>
    %586 = arith.addf %522, %585 : vector<1x128xf32>
    %587 = arith.mulf %562, %502 : vector<1x128xf32>
    %588 = arith.addf %524, %587 : vector<1x128xf32>
    %589 = arith.mulf %562, %500 : vector<1x128xf32>
    %590 = arith.addf %498, %589 : vector<1x128xf32>
    %591 = arith.mulf %562, %562 : vector<1x128xf32>
    %cst_52 = arith.constant 1.000000e+00 : f32
    %592 = vector.broadcast %cst_52 : f32 to vector<1x128xf32>
    %593 = arith.subf %592, %591 : vector<1x128xf32>
    %594 = arith.mulf %528, %593 : vector<1x128xf32>
    %595 = arith.mulf %564, %21 : vector<1x128xf32>
    %596 = arith.addf %22, %595 : vector<1x128xf32>
    %597 = arith.mulf %566, %20 : vector<1x128xf32>
    %598 = arith.addf %596, %597 : vector<1x128xf32>
    %599 = arith.mulf %568, %19 : vector<1x128xf32>
    %600 = arith.addf %598, %599 : vector<1x128xf32>
    %601 = arith.mulf %570, %18 : vector<1x128xf32>
    %602 = arith.addf %600, %601 : vector<1x128xf32>
    %603 = arith.mulf %572, %17 : vector<1x128xf32>
    %604 = arith.addf %602, %603 : vector<1x128xf32>
    %605 = arith.mulf %574, %16 : vector<1x128xf32>
    %606 = arith.addf %604, %605 : vector<1x128xf32>
    %607 = arith.mulf %576, %15 : vector<1x128xf32>
    %608 = arith.addf %606, %607 : vector<1x128xf32>
    %609 = arith.mulf %578, %14 : vector<1x128xf32>
    %610 = arith.addf %608, %609 : vector<1x128xf32>
    %611 = arith.mulf %580, %13 : vector<1x128xf32>
    %612 = arith.addf %610, %611 : vector<1x128xf32>
    %613 = arith.mulf %582, %12 : vector<1x128xf32>
    %614 = arith.addf %612, %613 : vector<1x128xf32>
    %615 = arith.mulf %584, %11 : vector<1x128xf32>
    %616 = arith.addf %614, %615 : vector<1x128xf32>
    %617 = arith.mulf %586, %10 : vector<1x128xf32>
    %618 = arith.addf %616, %617 : vector<1x128xf32>
    %619 = arith.mulf %588, %9 : vector<1x128xf32>
    %620 = arith.addf %618, %619 : vector<1x128xf32>
    %621 = arith.mulf %590, %8 : vector<1x128xf32>
    %622 = arith.addf %620, %621 : vector<1x128xf32>
    %623 = arith.mulf %562, %7 : vector<1x128xf32>
    %624 = arith.addf %622, %623 : vector<1x128xf32>
    %cst_53 = arith.constant 0.000000e+00 : f32
    %625 = vector.broadcast %cst_53 : f32 to vector<1x128xf32>
    %626 = arith.subf %625, %624 : vector<1x128xf32>
    %cst_54 = arith.constant 1.000000e-10 : f32
    %627 = vector.broadcast %cst_54 : f32 to vector<1x128xf32>
    %628 = arith.addf %594, %627 : vector<1x128xf32>
    %629 = tpu.reciprocal %628 {approx = true} : vector<1x128xf32> -> vector<1x128xf32>
    %630 = arith.mulf %626, %629 : vector<1x128xf32>
    %631 = arith.mulf %630, %562 : vector<1x128xf32>
    %632 = arith.addf %564, %631 : vector<1x128xf32>
    %633 = arith.mulf %630, %590 : vector<1x128xf32>
    %634 = arith.addf %566, %633 : vector<1x128xf32>
    %635 = arith.mulf %630, %588 : vector<1x128xf32>
    %636 = arith.addf %568, %635 : vector<1x128xf32>
    %637 = arith.mulf %630, %586 : vector<1x128xf32>
    %638 = arith.addf %570, %637 : vector<1x128xf32>
    %639 = arith.mulf %630, %584 : vector<1x128xf32>
    %640 = arith.addf %572, %639 : vector<1x128xf32>
    %641 = arith.mulf %630, %582 : vector<1x128xf32>
    %642 = arith.addf %574, %641 : vector<1x128xf32>
    %643 = arith.mulf %630, %580 : vector<1x128xf32>
    %644 = arith.addf %576, %643 : vector<1x128xf32>
    %645 = arith.mulf %630, %578 : vector<1x128xf32>
    %646 = arith.addf %578, %645 : vector<1x128xf32>
    %647 = arith.mulf %630, %576 : vector<1x128xf32>
    %648 = arith.addf %580, %647 : vector<1x128xf32>
    %649 = arith.mulf %630, %574 : vector<1x128xf32>
    %650 = arith.addf %582, %649 : vector<1x128xf32>
    %651 = arith.mulf %630, %572 : vector<1x128xf32>
    %652 = arith.addf %584, %651 : vector<1x128xf32>
    %653 = arith.mulf %630, %570 : vector<1x128xf32>
    %654 = arith.addf %586, %653 : vector<1x128xf32>
    %655 = arith.mulf %630, %568 : vector<1x128xf32>
    %656 = arith.addf %588, %655 : vector<1x128xf32>
    %657 = arith.mulf %630, %566 : vector<1x128xf32>
    %658 = arith.addf %590, %657 : vector<1x128xf32>
    %659 = arith.mulf %630, %564 : vector<1x128xf32>
    %660 = arith.addf %562, %659 : vector<1x128xf32>
    %661 = tpu.concatenate %23, %632, %634, %636, %638, %640, %642, %644, %646, %648, %650, %652, %654, %656, %658, %660 in 0 : vector<1x128xf32>, vector<1x128xf32>, vector<1x128xf32>, vector<1x128xf32>, vector<1x128xf32>, vector<1x128xf32>, vector<1x128xf32>, vector<1x128xf32>, vector<1x128xf32>, vector<1x128xf32>, vector<1x128xf32>, vector<1x128xf32>, vector<1x128xf32>, vector<1x128xf32>, vector<1x128xf32>, vector<1x128xf32> -> vector<16x128xf32>
    %662 = tpu.concatenate %630, %24, %24, %24, %24, %24, %24, %24 in 0 : vector<1x128xf32>, vector<1x128xf32>, vector<1x128xf32>, vector<1x128xf32>, vector<1x128xf32>, vector<1x128xf32>, vector<1x128xf32>, vector<1x128xf32> -> vector<8x128xf32>
    %663 = tpu.concatenate %661, %662 in 0 : vector<16x128xf32>, vector<8x128xf32> -> vector<24x128xf32>
    %c0_55 = arith.constant 0 : index
    %c0_56 = arith.constant 0 : index
    %664 = vector.load %arg4[%c0_55, %c0_56] : memref<528x24xf32, #tpu.memory_space<vmem>>, vector<528x24xf32>
    %cst_57 = arith.constant dense<0.000000e+00> : vector<528x128xf32>
    %665 = tpu.matmul %664, %663, %cst_57 {dimension_numbers = #tpu.dot_dimension_numbers<[1], [0], [0], [1], [0, 0, 1, 1], [], []>} : vector<528x24xf32>, vector<24x128xf32>, vector<528x128xf32> -> vector<528x128xf32>
    %666 = vector.extract_strided_slice %665 {offsets = [0, 0], sizes = [264, 128], strides = [1, 1]} : vector<528x128xf32> to vector<264x128xf32>
    %667 = vector.extract_strided_slice %665 {offsets = [264, 0], sizes = [264, 128], strides = [1, 1]} : vector<528x128xf32> to vector<264x128xf32>
    %cst_58 = arith.constant 0.000000e+00 : f32
    %668 = vector.broadcast %cst_58 : f32 to vector<264x128xf32>
    %669 = arith.cmpf oeq, %666, %668 : vector<264x128xf32>
    %cst_59 = arith.constant 1.000000e+00 : f32
    %670 = vector.broadcast %cst_59 : f32 to vector<264x128xf32>
    %671 = arith.select %669, %670, %666 : vector<264x128xi1>, vector<264x128xf32>
    %672 = tpu.reciprocal %671 {approx = true} : vector<264x128xf32> -> vector<264x128xf32>
    %673 = arith.mulf %667, %672 : vector<264x128xf32>
    %cst_60 = arith.constant 0.000000e+00 : f32
    %674 = vector.broadcast %cst_60 : f32 to vector<264x128xf32>
    %675 = arith.cmpf olt, %673, %674 : vector<264x128xf32>
    %cst_61 = arith.constant -1.000000e+00 : f32
    %cst_62 = arith.constant 1.000000e+00 : f32
    %676 = vector.broadcast %cst_61 : f32 to vector<264x128xf32>
    %677 = vector.broadcast %cst_62 : f32 to vector<264x128xf32>
    %678 = arith.select %675, %676, %677 : vector<264x128xi1>, vector<264x128xf32>
    %679 = math.absf %673 : vector<264x128xf32>
    %cst_63 = arith.constant 2.41421366 : f32
    %680 = vector.broadcast %cst_63 : f32 to vector<264x128xf32>
    %681 = arith.cmpf ogt, %679, %680 : vector<264x128xf32>
    %cst_64 = arith.constant 0.414213568 : f32
    %682 = vector.broadcast %cst_64 : f32 to vector<264x128xf32>
    %683 = arith.cmpf ogt, %679, %682 : vector<264x128xf32>
    %cst_65 = arith.constant dense<true> : vector<264x128xi1>
    %684 = arith.xori %681, %cst_65 : vector<264x128xi1>
    %685 = arith.andi %683, %684 : vector<264x128xi1>
    %cst_66 = arith.constant 1.000000e+00 : f32
    %686 = vector.broadcast %cst_66 : f32 to vector<264x128xf32>
    %687 = arith.subf %679, %686 : vector<264x128xf32>
    %688 = arith.select %685, %687, %679 : vector<264x128xi1>, vector<264x128xf32>
    %cst_67 = arith.constant -1.000000e+00 : f32
    %689 = vector.broadcast %cst_67 : f32 to vector<264x128xf32>
    %690 = arith.select %681, %689, %688 : vector<264x128xi1>, vector<264x128xf32>
    %cst_68 = arith.constant 1.000000e+00 : f32
    %691 = vector.broadcast %cst_68 : f32 to vector<264x128xf32>
    %692 = arith.addf %679, %691 : vector<264x128xf32>
    %cst_69 = arith.constant 1.000000e+00 : f32
    %693 = vector.broadcast %cst_69 : f32 to vector<264x128xf32>
    %694 = arith.select %685, %692, %693 : vector<264x128xi1>, vector<264x128xf32>
    %695 = arith.select %681, %679, %694 : vector<264x128xi1>, vector<264x128xf32>
    %696 = tpu.reciprocal %695 {approx = true} : vector<264x128xf32> -> vector<264x128xf32>
    %697 = arith.mulf %690, %696 : vector<264x128xf32>
    %cst_70 = arith.constant 0.785398185 : f32
    %cst_71 = arith.constant 0.000000e+00 : f32
    %698 = vector.broadcast %cst_70 : f32 to vector<264x128xf32>
    %699 = vector.broadcast %cst_71 : f32 to vector<264x128xf32>
    %700 = arith.select %685, %698, %699 : vector<264x128xi1>, vector<264x128xf32>
    %cst_72 = arith.constant 1.57079637 : f32
    %701 = vector.broadcast %cst_72 : f32 to vector<264x128xf32>
    %702 = arith.select %681, %701, %700 : vector<264x128xi1>, vector<264x128xf32>
    %703 = arith.mulf %697, %697 : vector<264x128xf32>
    %cst_73 = arith.constant 0.0805374458 : f32
    %704 = vector.broadcast %cst_73 : f32 to vector<264x128xf32>
    %705 = arith.mulf %704, %703 : vector<264x128xf32>
    %cst_74 = arith.constant 0.138776854 : f32
    %706 = vector.broadcast %cst_74 : f32 to vector<264x128xf32>
    %707 = arith.subf %705, %706 : vector<264x128xf32>
    %708 = arith.mulf %707, %703 : vector<264x128xf32>
    %cst_75 = arith.constant 0.199777111 : f32
    %709 = vector.broadcast %cst_75 : f32 to vector<264x128xf32>
    %710 = arith.addf %708, %709 : vector<264x128xf32>
    %711 = arith.mulf %710, %703 : vector<264x128xf32>
    %cst_76 = arith.constant 0.333329499 : f32
    %712 = vector.broadcast %cst_76 : f32 to vector<264x128xf32>
    %713 = arith.subf %711, %712 : vector<264x128xf32>
    %714 = arith.mulf %713, %703 : vector<264x128xf32>
    %715 = arith.mulf %714, %697 : vector<264x128xf32>
    %716 = arith.addf %715, %697 : vector<264x128xf32>
    %717 = arith.addf %702, %716 : vector<264x128xf32>
    %718 = arith.mulf %678, %717 : vector<264x128xf32>
    %cst_77 = arith.constant 0.000000e+00 : f32
    %719 = vector.broadcast %cst_77 : f32 to vector<264x128xf32>
    %720 = arith.cmpf olt, %666, %719 : vector<264x128xf32>
    %cst_78 = arith.constant 0.000000e+00 : f32
    %721 = vector.broadcast %cst_78 : f32 to vector<264x128xf32>
    %722 = arith.cmpf olt, %667, %721 : vector<264x128xf32>
    %cst_79 = arith.constant -3.14159274 : f32
    %cst_80 = arith.constant 3.14159274 : f32
    %723 = vector.broadcast %cst_79 : f32 to vector<264x128xf32>
    %724 = vector.broadcast %cst_80 : f32 to vector<264x128xf32>
    %725 = arith.select %722, %723, %724 : vector<264x128xi1>, vector<264x128xf32>
    %cst_81 = arith.constant 0.000000e+00 : f32
    %726 = vector.broadcast %cst_81 : f32 to vector<264x128xf32>
    %727 = arith.select %720, %725, %726 : vector<264x128xi1>, vector<264x128xf32>
    %728 = arith.addf %727, %718 : vector<264x128xf32>
    %cst_82 = arith.constant 0.000000e+00 : f32
    %729 = vector.broadcast %cst_82 : f32 to vector<264x128xf32>
    %730 = arith.cmpf oeq, %666, %729 : vector<264x128xf32>
    %cst_83 = arith.constant 0.000000e+00 : f32
    %731 = vector.broadcast %cst_83 : f32 to vector<264x128xf32>
    %732 = arith.cmpf ogt, %667, %731 : vector<264x128xf32>
    %cst_84 = arith.constant 0.000000e+00 : f32
    %733 = vector.broadcast %cst_84 : f32 to vector<264x128xf32>
    %734 = arith.cmpf olt, %667, %733 : vector<264x128xf32>
    %cst_85 = arith.constant -1.57079637 : f32
    %cst_86 = arith.constant 0.000000e+00 : f32
    %735 = vector.broadcast %cst_85 : f32 to vector<264x128xf32>
    %736 = vector.broadcast %cst_86 : f32 to vector<264x128xf32>
    %737 = arith.select %734, %735, %736 : vector<264x128xi1>, vector<264x128xf32>
    %cst_87 = arith.constant 1.57079637 : f32
    %738 = vector.broadcast %cst_87 : f32 to vector<264x128xf32>
    %739 = arith.select %732, %738, %737 : vector<264x128xi1>, vector<264x128xf32>
    %740 = arith.select %730, %739, %728 : vector<264x128xi1>, vector<264x128xf32>
    %c0_88 = arith.constant 0 : index
    %c0_89 = arith.constant 0 : index
    %741 = vector.load %arg5[%c0_88, %c0_89] : memref<80x264xf32, #tpu.memory_space<vmem>>, vector<80x264xf32>
    %cst_90 = arith.constant dense<0.000000e+00> : vector<80x128xf32>
    %742 = tpu.matmul %741, %740, %cst_90 {dimension_numbers = #tpu.dot_dimension_numbers<[1], [0], [0], [1], [0, 0, 1, 1], [], []>} : vector<80x264xf32>, vector<264x128xf32>, vector<80x128xf32> -> vector<80x128xf32>
    %cst_91 = arith.constant 9.99999993E-9 : f32
    %743 = vector.broadcast %cst_91 : f32 to vector<80x128xf32>
    %744 = arith.addf %742, %743 : vector<80x128xf32>
    %745 = math.log %744 : vector<80x128xf32>
    %c0_92 = arith.constant 0 : index
    %c0_93 = arith.constant 0 : index
    %746 = vector.load %arg6[%c0_92, %c0_93] : memref<80x128xf32, #tpu.memory_space<vmem>>, vector<80x128xf32>
    tpu.vector_store %arg6[%c0_92, %c0_93], %745 {strides = array<i32>} : memref<80x128xf32, #tpu.memory_space<vmem>>, vector<80x128xf32>,
    return
  }
  func.func @transform_0(%arg0: i32) -> (i32, i32) {
    %c0_i32 = arith.constant 0 : i32
    %c0_i32_0 = arith.constant 0 : i32
    return %c0_i32, %arg0 : i32, i32
  }
  func.func @transform_1(%arg0: i32) -> (i32, i32) {
    %c0_i32 = arith.constant 0 : i32
    %c0_i32_0 = arith.constant 0 : i32
    %c0_i32_1 = arith.constant 0 : i32
    return %c0_i32, %c0_i32_0 : i32, i32
  }
  func.func @transform_2(%arg0: i32) -> (i32, i32) {
    %c0_i32 = arith.constant 0 : i32
    %c0_i32_0 = arith.constant 0 : i32
    %c0_i32_1 = arith.constant 0 : i32
    return %c0_i32, %c0_i32_0 : i32, i32
  }
  func.func @transform_3(%arg0: i32) -> (i32, i32) {
    %c0_i32 = arith.constant 0 : i32
    %c0_i32_0 = arith.constant 0 : i32
    %c0_i32_1 = arith.constant 0 : i32
    return %c0_i32, %c0_i32_0 : i32, i32
  }
  func.func @transform_4(%arg0: i32) -> (i32, i32) {
    %c0_i32 = arith.constant 0 : i32
    %c0_i32_0 = arith.constant 0 : i32
    %c0_i32_1 = arith.constant 0 : i32
    return %c0_i32, %c0_i32_0 : i32, i32
  }
  func.func @transform_5(%arg0: i32) -> (i32, i32) {
    %c0_i32 = arith.constant 0 : i32
    %c0_i32_0 = arith.constant 0 : i32
    return %c0_i32, %arg0 : i32, i32
  }
}

</mosaic_0001>

<llo_original>
// kernel: tpu_custom_call.1
$region0: #{tpu_custom_call.1}
  #allocation0 [shape = 'u32[]', space=smem, size = 0x4, offset = 0x4, fixed_abs, tag = 'smem constant byte address 0x4 - core index']
  #allocation1 [shape = 'u32[72,128]{1,0:T(1,128)}', space=vmem, size = 0x9000, scoped, tag = 'internal scratch']
  %s0 = inlined_call_operand.vmem [shape: f32[400,128], index: 0, kind: input, shape index: {}]
  %s1 = inlined_call_operand.vmem [shape: f32[512,400], index: 1, kind: input, shape index: {}]
  %s2 = inlined_call_operand.vmem [shape: f32[24,512], index: 2, kind: input, shape index: {}]
  %s3 = inlined_call_operand.vmem [shape: f32[528,24], index: 3, kind: input, shape index: {}]
  %s4 = inlined_call_operand.vmem [shape: f32[80,264], index: 4, kind: input, shape index: {}]
  %s5 = inlined_call_operand.hbm [shape: f32[80,128], index: 5, kind: output, shape index: {}]
  %s6 = sld [smem:[#allocation0]]
  $region30: #{tpu_custom_call.1} parent=0
    _
  %s8 = ssub.s32 1, %s6
  %s9 = scalar_select 0, %s8, %s6
  $region1: #{tpu_custom_call.1} parent=0
    #allocation2 [shape = 'u8[40960]{0}', space=vmem, size = 0xa000, scoped, tag = 'output window, operand 0, single buffered']
    #allocation3 [shape = 's32[1]{0}', space=sflag, size = 0x4, scoped, tag = 'scoped memory for tpu_custom_call.1']
    %10 = vsyncpa [#allocation3], 0
    // Predicated region
    $region2: #{tpu_custom_call.1} parent=1 // pred_check
      _
    $region3: #{tpu_custom_call.1} parent=1 // pred_check_branch
      %12 = sbr.rel (0) target = $region5
    $region4: #{tpu_custom_call.1} parent=1 // pred_region
      _
    $region5: #{tpu_custom_call.1} parent=1 // pred_fallthru
      _
    // Predicated region
    $region6: #{tpu_custom_call.1} parent=1 // pred_check
      _
    $region7: #{tpu_custom_call.1} parent=1 // pred_check_branch
      %14 = sbr.rel (0) target = $region9
    $region8: #{tpu_custom_call.1} parent=1 // pred_region
      _
    $region9: #{tpu_custom_call.1} parent=1 // pred_fallthru
      _
    // Predicated region
    $region10: #{tpu_custom_call.1} parent=1 // pred_check
      _
    $region11: #{tpu_custom_call.1} parent=1 // pred_check_branch
      %16 = sbr.rel (0) target = $region13
    $region12: #{tpu_custom_call.1} parent=1 // pred_region
      _
    $region13: #{tpu_custom_call.1} parent=1 // pred_fallthru
      _
    // Predicated region
    $region14: #{tpu_custom_call.1} parent=1 // pred_check
      _
    $region15: #{tpu_custom_call.1} parent=1 // pred_check_branch
      %18 = sbr.rel (0) target = $region17
    $region16: #{tpu_custom_call.1} parent=1 // pred_region
      _
    $region17: #{tpu_custom_call.1} parent=1 // pred_fallthru
      _
    // Predicated region
    $region18: #{tpu_custom_call.1} parent=1 // pred_check
      _
    $region19: #{tpu_custom_call.1} parent=1 // pred_check_branch
      %20 = sbr.rel (0) target = $region21
    $region20: #{tpu_custom_call.1} parent=1 // pred_region
      _
    $region21: #{tpu_custom_call.1} parent=1 // pred_fallthru
      _
    %v21 = vld [vmem:[%s0] sm:$0xff]
    %v22 = vld [vmem:[%s0 + $0x8] sm:$0xff]
    %v23 = vld [vmem:[%s0 + $0x10] sm:$0xff]
    %v24 = vld [vmem:[%s0 + $0x18] sm:$0xff]
    %v25 = vld [vmem:[%s0 + $0x20] sm:$0xff]
    %v26 = vld [vmem:[%s0 + $0x28] sm:$0xff]
    %v27 = vld [vmem:[%s0 + $0x30] sm:$0xff]
    %v28 = vld [vmem:[%s0 + $0x38] sm:$0xff]
    %v29 = vld [vmem:[%s0 + $0x40] sm:$0xff]
    %v30 = vld [vmem:[%s0 + $0x48] sm:$0xff]
    %v31 = vld [vmem:[%s0 + $0x50] sm:$0xff]
    %v32 = vld [vmem:[%s0 + $0x58] sm:$0xff]
    %v33 = vld [vmem:[%s0 + $0x60] sm:$0xff]
    %v34 = vld [vmem:[%s0 + $0x68] sm:$0xff]
    %v35 = vld [vmem:[%s0 + $0x70] sm:$0xff]
    %v36 = vld [vmem:[%s0 + $0x78] sm:$0xff]
    %v37 = vld [vmem:[%s0 + $0x80] sm:$0xff]
    %v38 = vld [vmem:[%s0 + $0x88] sm:$0xff]
    %v39 = vld [vmem:[%s0 + $0x90] sm:$0xff]
    %v40 = vld [vmem:[%s0 + $0x98] sm:$0xff]
    %v41 = vld [vmem:[%s0 + $0xa0] sm:$0xff]
    %v42 = vld [vmem:[%s0 + $0xa8] sm:$0xff]
    %v43 = vld [vmem:[%s0 + $0xb0] sm:$0xff]
    %v44 = vld [vmem:[%s0 + $0xb8] sm:$0xff]
    %v45 = vld [vmem:[%s0 + $0xc0] sm:$0xff]
    %v46 = vld [vmem:[%s0 + $0xc8] sm:$0xff]
    %v47 = vld [vmem:[%s0 + $0xd0] sm:$0xff]
    %v48 = vld [vmem:[%s0 + $0xd8] sm:$0xff]
    %v49 = vld [vmem:[%s0 + $0xe0] sm:$0xff]
    %v50 = vld [vmem:[%s0 + $0xe8] sm:$0xff]
    %v51 = vld [vmem:[%s0 + $0xf0] sm:$0xff]
    %v52 = vld [vmem:[%s0 + $0xf8] sm:$0xff]
    %v53 = vld [vmem:[%s0 + $0x100] sm:$0xff]
    %v54 = vld [vmem:[%s0 + $0x108] sm:$0xff]
    %v55 = vld [vmem:[%s0 + $0x110] sm:$0xff]
    %v56 = vld [vmem:[%s0 + $0x118] sm:$0xff]
    %v57 = vld [vmem:[%s0 + $0x120] sm:$0xff]
    %v58 = vld [vmem:[%s0 + $0x128] sm:$0xff]
    %v59 = vld [vmem:[%s0 + $0x130] sm:$0xff]
    %v60 = vld [vmem:[%s0 + $0x138] sm:$0xff]
    %v61 = vld [vmem:[%s0 + $0x140] sm:$0xff]
    %v62 = vld [vmem:[%s0 + $0x148] sm:$0xff]
    %v63 = vld [vmem:[%s0 + $0x150] sm:$0xff]
    %v64 = vld [vmem:[%s0 + $0x158] sm:$0xff]
    %v65 = vld [vmem:[%s0 + $0x160] sm:$0xff]
    %v66 = vld [vmem:[%s0 + $0x168] sm:$0xff]
    %v67 = vld [vmem:[%s0 + $0x170] sm:$0xff]
    %v68 = vld [vmem:[%s0 + $0x178] sm:$0xff]
    %v69 = vld [vmem:[%s0 + $0x180] sm:$0xff]
    %v70 = vld [vmem:[%s0 + $0x188] sm:$0xff]
    %v71 = vld [vmem:[%s1] sm:$0xff]
    %v72 = vld [vmem:[%s1 + $0x8] sm:$0xff]
    %v73 = vld [vmem:[%s1 + $0x10] sm:$0xff]
    %v74 = vld [vmem:[%s1 + $0x18] sm:$0xff]
    %v75 = vld [vmem:[%s1 + $0x20] sm:$0xff]
    %v76 = vld [vmem:[%s1 + $0x28] sm:$0xff]
    %v77 = vld [vmem:[%s1 + $0x30] sm:$0xff]
    %v78 = vld [vmem:[%s1 + $0x38] sm:$0xff]
    %v79 = vld [vmem:[%s1 + $0x40] sm:$0xff]
    %v80 = vld [vmem:[%s1 + $0x48] sm:$0xff]
    %v81 = vld [vmem:[%s1 + $0x50] sm:$0xff]
    %v82 = vld [vmem:[%s1 + $0x58] sm:$0xff]
    %v83 = vld [vmem:[%s1 + $0x60] sm:$0xff]
    %v84 = vld [vmem:[%s1 + $0x68] sm:$0xff]
    %v85 = vld [vmem:[%s1 + $0x70] sm:$0xff]
    %v86 = vld [vmem:[%s1 + $0x78] sm:$0xff]
    %v87 = vld [vmem:[%s1 + $0x80] sm:$0xff]
    %v88 = vld [vmem:[%s1 + $0x88] sm:$0xff]
    %v89 = vld [vmem:[%s1 + $0x90] sm:$0xff]
    %v90 = vld [vmem:[%s1 + $0x98] sm:$0xff]
    %v91 = vld [vmem:[%s1 + $0xa0] sm:$0xff]
    %v92 = vld [vmem:[%s1 + $0xa8] sm:$0xff]
    %v93 = vld [vmem:[%s1 + $0xb0] sm:$0xff]
    %v94 = vld [vmem:[%s1 + $0xb8] sm:$0xff]
    %v95 = vld [vmem:[%s1 + $0xc0] sm:$0xff]
    %v96 = vld [vmem:[%s1 + $0xc8] sm:$0xff]
    %v97 = vld [vmem:[%s1 + $0xd0] sm:$0xff]
    %v98 = vld [vmem:[%s1 + $0xd8] sm:$0xff]
    %v99 = vld [vmem:[%s1 + $0xe0] sm:$0xff]
    %v100 = vld [vmem:[%s1 + $0xe8] sm:$0xff]
    %v101 = vld [vmem:[%s1 + $0xf0] sm:$0xff]
    %v102 = vld [vmem:[%s1 + $0xf8] sm:$0xff]
    %v103 = vld [vmem:[%s1 + $0x100] sm:$0xff]
    %v104 = vld [vmem:[%s1 + $0x108] sm:$0xff]
    %v105 = vld [vmem:[%s1 + $0x110] sm:$0xff]
    %v106 = vld [vmem:[%s1 + $0x118] sm:$0xff]
    %v107 = vld [vmem:[%s1 + $0x120] sm:$0xff]
    %v108 = vld [vmem:[%s1 + $0x128] sm:$0xff]
    %v109 = vld [vmem:[%s1 + $0x130] sm:$0xff]
    %v110 = vld [vmem:[%s1 + $0x138] sm:$0xff]
    %v111 = vld [vmem:[%s1 + $0x140] sm:$0xff]
    %v112 = vld [vmem:[%s1 + $0x148] sm:$0xff]
    %v113 = vld [vmem:[%s1 + $0x150] sm:$0xff]
    %v114 = vld [vmem:[%s1 + $0x158] sm:$0xff]
    %v115 = vld [vmem:[%s1 + $0x160] sm:$0xff]
    %v116 = vld [vmem:[%s1 + $0x168] sm:$0xff]
    %v117 = vld [vmem:[%s1 + $0x170] sm:$0xff]
    %v118 = vld [vmem:[%s1 + $0x178] sm:$0xff]
    %v119 = vld [vmem:[%s1 + $0x180] sm:$0xff]
    %v120 = vld [vmem:[%s1 + $0x188] sm:$0xff]
    %v121 = vld [vmem:[%s1 + $0x190] sm:$0xff]
    %v122 = vld [vmem:[%s1 + $0x198] sm:$0xff]
    %v123 = vld [vmem:[%s1 + $0x1a0] sm:$0xff]
    %v124 = vld [vmem:[%s1 + $0x1a8] sm:$0xff]
    %v125 = vld [vmem:[%s1 + $0x1b0] sm:$0xff]
    %v126 = vld [vmem:[%s1 + $0x1b8] sm:$0xff]
    %v127 = vld [vmem:[%s1 + $0x1c0] sm:$0xff]
    %v128 = vld [vmem:[%s1 + $0x1c8] sm:$0xff]
    %v129 = vld [vmem:[%s1 + $0x1d0] sm:$0xff]
    %v130 = vld [vmem:[%s1 + $0x1d8] sm:$0xff]
    %v131 = vld [vmem:[%s1 + $0x1e0] sm:$0xff]
    %v132 = vld [vmem:[%s1 + $0x1e8] sm:$0xff]
    %v133 = vld [vmem:[%s1 + $0x1f0] sm:$0xff]
    %v134 = vld [vmem:[%s1 + $0x1f8] sm:$0xff]
    %v135 = vld [vmem:[%s1 + $0x200] sm:$0xff]
    %v136 = vld [vmem:[%s1 + $0x208] sm:$0xff]
    %v137 = vld [vmem:[%s1 + $0x210] sm:$0xff]
    %v138 = vld [vmem:[%s1 + $0x218] sm:$0xff]
    %v139 = vld [vmem:[%s1 + $0x220] sm:$0xff]
    %v140 = vld [vmem:[%s1 + $0x228] sm:$0xff]
    %v141 = vld [vmem:[%s1 + $0x230] sm:$0xff]
    %v142 = vld [vmem:[%s1 + $0x238] sm:$0xff]
    %v143 = vld [vmem:[%s1 + $0x240] sm:$0xff]
    %v144 = vld [vmem:[%s1 + $0x248] sm:$0xff]
    %v145 = vld [vmem:[%s1 + $0x250] sm:$0xff]
    %v146 = vld [vmem:[%s1 + $0x258] sm:$0xff]
    %v147 = vld [vmem:[%s1 + $0x260] sm:$0xff]
    %v148 = vld [vmem:[%s1 + $0x268] sm:$0xff]
    %v149 = vld [vmem:[%s1 + $0x270] sm:$0xff]
    %v150 = vld [vmem:[%s1 + $0x278] sm:$0xff]
    %v151 = vld [vmem:[%s1 + $0x280] sm:$0xff]
    %v152 = vld [vmem:[%s1 + $0x288] sm:$0xff]
    %v153 = vld [vmem:[%s1 + $0x290] sm:$0xff]
    %v154 = vld [vmem:[%s1 + $0x298] sm:$0xff]
    %v155 = vld [vmem:[%s1 + $0x2a0] sm:$0xff]
    %v156 = vld [vmem:[%s1 + $0x2a8] sm:$0xff]
    %v157 = vld [vmem:[%s1 + $0x2b0] sm:$0xff]
    %v158 = vld [vmem:[%s1 + $0x2b8] sm:$0xff]
    %v159 = vld [vmem:[%s1 + $0x2c0] sm:$0xff]
    %v160 = vld [vmem:[%s1 + $0x2c8] sm:$0xff]
    %v161 = vld [vmem:[%s1 + $0x2d0] sm:$0xff]
    %v162 = vld [vmem:[%s1 + $0x2d8] sm:$0xff]
    %v163 = vld [vmem:[%s1 + $0x2e0] sm:$0xff]
    %v164 = vld [vmem:[%s1 + $0x2e8] sm:$0xff]
    %v165 = vld [vmem:[%s1 + $0x2f0] sm:$0xff]
    %v166 = vld [vmem:[%s1 + $0x2f8] sm:$0xff]
    %v167 = vld [vmem:[%s1 + $0x300] sm:$0xff]
    %v168 = vld [vmem:[%s1 + $0x308] sm:$0xff]
    %v169 = vld [vmem:[%s1 + $0x310] sm:$0xff]
    %v170 = vld [vmem:[%s1 + $0x318] sm:$0xff]
    %v171 = vld [vmem:[%s1 + $0x320] sm:$0xff]
    %v172 = vld [vmem:[%s1 + $0x328] sm:$0xff]
    %v173 = vld [vmem:[%s1 + $0x330] sm:$0xff]
    %v174 = vld [vmem:[%s1 + $0x338] sm:$0xff]
    %v175 = vld [vmem:[%s1 + $0x340] sm:$0xff]
    %v176 = vld [vmem:[%s1 + $0x348] sm:$0xff]
    %v177 = vld [vmem:[%s1 + $0x350] sm:$0xff]
    %v178 = vld [vmem:[%s1 + $0x358] sm:$0xff]
    %v179 = vld [vmem:[%s1 + $0x360] sm:$0xff]
    %v180 = vld [vmem:[%s1 + $0x368] sm:$0xff]
    %v181 = vld [vmem:[%s1 + $0x370] sm:$0xff]
    %v182 = vld [vmem:[%s1 + $0x378] sm:$0xff]
    %v183 = vld [vmem:[%s1 + $0x380] sm:$0xff]
    %v184 = vld [vmem:[%s1 + $0x388] sm:$0xff]
    %v185 = vld [vmem:[%s1 + $0x390] sm:$0xff]
    %v186 = vld [vmem:[%s1 + $0x398] sm:$0xff]
    %v187 = vld [vmem:[%s1 + $0x3a0] sm:$0xff]
    %v188 = vld [vmem:[%s1 + $0x3a8] sm:$0xff]
    %v189 = vld [vmem:[%s1 + $0x3b0] sm:$0xff]
    %v190 = vld [vmem:[%s1 + $0x3b8] sm:$0xff]
    %v191 = vld [vmem:[%s1 + $0x3c0] sm:$0xff]
    %v192 = vld [vmem:[%s1 + $0x3c8] sm:$0xff]
    %v193 = vld [vmem:[%s1 + $0x3d0] sm:$0xff]
    %v194 = vld [vmem:[%s1 + $0x3d8] sm:$0xff]
    %v195 = vld [vmem:[%s1 + $0x3e0] sm:$0xff]
    %v196 = vld [vmem:[%s1 + $0x3e8] sm:$0xff]
    %v197 = vld [vmem:[%s1 + $0x3f0] sm:$0xff]
    %v198 = vld [vmem:[%s1 + $0x3f8] sm:$0xff]
    %v199 = vld [vmem:[%s1 + $0x400] sm:$0xff]
    %v200 = vld [vmem:[%s1 + $0x408] sm:$0xff]
    %v201 = vld [vmem:[%s1 + $0x410] sm:$0xff]
    %v202 = vld [vmem:[%s1 + $0x418] sm:$0xff]
    %v203 = vld [vmem:[%s1 + $0x420] sm:$0xff]
    %v204 = vld [vmem:[%s1 + $0x428] sm:$0xff]
    %v205 = vld [vmem:[%s1 + $0x430] sm:$0xff]
    %v206 = vld [vmem:[%s1 + $0x438] sm:$0xff]
    %v207 = vld [vmem:[%s1 + $0x440] sm:$0xff]
    %v208 = vld [vmem:[%s1 + $0x448] sm:$0xff]
    %v209 = vld [vmem:[%s1 + $0x450] sm:$0xff]
    %v210 = vld [vmem:[%s1 + $0x458] sm:$0xff]
    %v211 = vld [vmem:[%s1 + $0x460] sm:$0xff]
    %v212 = vld [vmem:[%s1 + $0x468] sm:$0xff]
    %v213 = vld [vmem:[%s1 + $0x470] sm:$0xff]
    %v214 = vld [vmem:[%s1 + $0x478] sm:$0xff]
    %v215 = vld [vmem:[%s1 + $0x480] sm:$0xff]
    %v216 = vld [vmem:[%s1 + $0x488] sm:$0xff]
    %v217 = vld [vmem:[%s1 + $0x490] sm:$0xff]
    %v218 = vld [vmem:[%s1 + $0x498] sm:$0xff]
    %v219 = vld [vmem:[%s1 + $0x4a0] sm:$0xff]
    %v220 = vld [vmem:[%s1 + $0x4a8] sm:$0xff]
    %v221 = vld [vmem:[%s1 + $0x4b0] sm:$0xff]
    %v222 = vld [vmem:[%s1 + $0x4b8] sm:$0xff]
    %v223 = vld [vmem:[%s1 + $0x4c0] sm:$0xff]
    %v224 = vld [vmem:[%s1 + $0x4c8] sm:$0xff]
    %v225 = vld [vmem:[%s1 + $0x4d0] sm:$0xff]
    %v226 = vld [vmem:[%s1 + $0x4d8] sm:$0xff]
    %v227 = vld [vmem:[%s1 + $0x4e0] sm:$0xff]
    %v228 = vld [vmem:[%s1 + $0x4e8] sm:$0xff]
    %v229 = vld [vmem:[%s1 + $0x4f0] sm:$0xff]
    %v230 = vld [vmem:[%s1 + $0x4f8] sm:$0xff]
    %v231 = vld [vmem:[%s1 + $0x500] sm:$0xff]
    %v232 = vld [vmem:[%s1 + $0x508] sm:$0xff]
    %v233 = vld [vmem:[%s1 + $0x510] sm:$0xff]
    %v234 = vld [vmem:[%s1 + $0x518] sm:$0xff]
    %v235 = vld [vmem:[%s1 + $0x520] sm:$0xff]
    %v236 = vld [vmem:[%s1 + $0x528] sm:$0xff]
    %v237 = vld [vmem:[%s1 + $0x530] sm:$0xff]
    %v238 = vld [vmem:[%s1 + $0x538] sm:$0xff]
    %v239 = vld [vmem:[%s1 + $0x540] sm:$0xff]
    %v240 = vld [vmem:[%s1 + $0x548] sm:$0xff]
    %v241 = vld [vmem:[%s1 + $0x550] sm:$0xff]
    %v242 = vld [vmem:[%s1 + $0x558] sm:$0xff]
    %v243 = vld [vmem:[%s1 + $0x560] sm:$0xff]
    %v244 = vld [vmem:[%s1 + $0x568] sm:$0xff]
    %v245 = vld [vmem:[%s1 + $0x570] sm:$0xff]
    %v246 = vld [vmem:[%s1 + $0x578] sm:$0xff]
    %v247 = vld [vmem:[%s1 + $0x580] sm:$0xff]
    %v248 = vld [vmem:[%s1 + $0x588] sm:$0xff]
    %v249 = vld [vmem:[%s1 + $0x590] sm:$0xff]
    %v250 = vld [vmem:[%s1 + $0x598] sm:$0xff]
    %v251 = vld [vmem:[%s1 + $0x5a0] sm:$0xff]
    %v252 = vld [vmem:[%s1 + $0x5a8] sm:$0xff]
    %v253 = vld [vmem:[%s1 + $0x5b0] sm:$0xff]
    %v254 = vld [vmem:[%s1 + $0x5b8] sm:$0xff]
    %v255 = vld [vmem:[%s1 + $0x5c0] sm:$0xff]
    %v256 = vld [vmem:[%s1 + $0x5c8] sm:$0xff]
    %v257 = vld [vmem:[%s1 + $0x5d0] sm:$0xff]
    %v258 = vld [vmem:[%s1 + $0x5d8] sm:$0xff]
    %v259 = vld [vmem:[%s1 + $0x5e0] sm:$0xff]
    %v260 = vld [vmem:[%s1 + $0x5e8] sm:$0xff]
    %v261 = vld [vmem:[%s1 + $0x5f0] sm:$0xff]
    %v262 = vld [vmem:[%s1 + $0x5f8] sm:$0xff]
    %v263 = vld [vmem:[%s1 + $0x600] sm:$0xff]
    %v264 = vld [vmem:[%s1 + $0x608] sm:$0xff]
    %v265 = vld [vmem:[%s1 + $0x610] sm:$0xff]
    %v266 = vld [vmem:[%s1 + $0x618] sm:$0xff]
    %v267 = vld [vmem:[%s1 + $0x620] sm:$0xff]
    %v268 = vld [vmem:[%s1 + $0x628] sm:$0xff]
    %v269 = vld [vmem:[%s1 + $0x630] sm:$0xff]
    %v270 = vld [vmem:[%s1 + $0x638] sm:$0xff]
    %v271 = vld [vmem:[%s1 + $0x640] sm:$0xff]
    %v272 = vld [vmem:[%s1 + $0x648] sm:$0xff]
    %v273 = vld [vmem:[%s1 + $0x650] sm:$0xff]
    %v274 = vld [vmem:[%s1 + $0x658] sm:$0xff]
    %v275 = vld [vmem:[%s1 + $0x660] sm:$0xff]
    %v276 = vld [vmem:[%s1 + $0x668] sm:$0xff]
    %v277 = vld [vmem:[%s1 + $0x670] sm:$0xff]
    %v278 = vld [vmem:[%s1 + $0x678] sm:$0xff]
    %v279 = vld [vmem:[%s1 + $0x680] sm:$0xff]
    %v280 = vld [vmem:[%s1 + $0x688] sm:$0xff]
    %v281 = vld [vmem:[%s1 + $0x690] sm:$0xff]
    %v282 = vld [vmem:[%s1 + $0x698] sm:$0xff]
    %v283 = vld [vmem:[%s1 + $0x6a0] sm:$0xff]
    %v284 = vld [vmem:[%s1 + $0x6a8] sm:$0xff]
    %v285 = vld [vmem:[%s1 + $0x6b0] sm:$0xff]
    %v286 = vld [vmem:[%s1 + $0x6b8] sm:$0xff]
    %v287 = vld [vmem:[%s1 + $0x6c0] sm:$0xff]
    %v288 = vld [vmem:[%s1 + $0x6c8] sm:$0xff]
    %v289 = vld [vmem:[%s1 + $0x6d0] sm:$0xff]
    %v290 = vld [vmem:[%s1 + $0x6d8] sm:$0xff]
    %v291 = vld [vmem:[%s1 + $0x6e0] sm:$0xff]
    %v292 = vld [vmem:[%s1 + $0x6e8] sm:$0xff]
    %v293 = vld [vmem:[%s1 + $0x6f0] sm:$0xff]
    %v294 = vld [vmem:[%s1 + $0x6f8] sm:$0xff]
    %v295 = vld [vmem:[%s1 + $0x700] sm:$0xff]
    %v296 = vld [vmem:[%s1 + $0x708] sm:$0xff]
    %v297 = vld [vmem:[%s1 + $0x710] sm:$0xff]
    %v298 = vld [vmem:[%s1 + $0x718] sm:$0xff]
    %v299 = vld [vmem:[%s1 + $0x720] sm:$0xff]
    %v300 = vld [vmem:[%s1 + $0x728] sm:$0xff]
    %v301 = vld [vmem:[%s1 + $0x730] sm:$0xff]
    %v302 = vld [vmem:[%s1 + $0x738] sm:$0xff]
    %v303 = vld [vmem:[%s1 + $0x740] sm:$0xff]
    %v304 = vld [vmem:[%s1 + $0x748] sm:$0xff]
    %v305 = vld [vmem:[%s1 + $0x750] sm:$0xff]
    %v306 = vld [vmem:[%s1 + $0x758] sm:$0xff]
    %v307 = vld [vmem:[%s1 + $0x760] sm:$0xff]
    %v308 = vld [vmem:[%s1 + $0x768] sm:$0xff]
    %v309 = vld [vmem:[%s1 + $0x770] sm:$0xff]
    %v310 = vld [vmem:[%s1 + $0x778] sm:$0xff]
    %v311 = vld [vmem:[%s1 + $0x780] sm:$0xff]
    %v312 = vld [vmem:[%s1 + $0x788] sm:$0xff]
    %v313 = vld [vmem:[%s1 + $0x790] sm:$0xff]
    %v314 = vld [vmem:[%s1 + $0x798] sm:$0xff]
    %v315 = vld [vmem:[%s1 + $0x7a0] sm:$0xff]
    %v316 = vld [vmem:[%s1 + $0x7a8] sm:$0xff]
    %v317 = vld [vmem:[%s1 + $0x7b0] sm:$0xff]
    %v318 = vld [vmem:[%s1 + $0x7b8] sm:$0xff]
    %v319 = vld [vmem:[%s1 + $0x7c0] sm:$0xff]
    %v320 = vld [vmem:[%s1 + $0x7c8] sm:$0xff]
    %v321 = vld [vmem:[%s1 + $0x7d0] sm:$0xff]
    %v322 = vld [vmem:[%s1 + $0x7d8] sm:$0xff]
    %v323 = vld [vmem:[%s1 + $0x7e0] sm:$0xff]
    %v324 = vld [vmem:[%s1 + $0x7e8] sm:$0xff]
    %v325 = vld [vmem:[%s1 + $0x7f0] sm:$0xff]
    %v326 = vld [vmem:[%s1 + $0x7f8] sm:$0xff]
    %vm327 = vcmask 130048
    %v329 = vsel %vm327, %v74, 0
    %v332 = vsel %vm327, %v78, 0
    %v335 = vsel %vm327, %v82, 0
    %v338 = vsel %vm327, %v86, 0
    %v341 = vsel %vm327, %v90, 0
    %v344 = vsel %vm327, %v94, 0
    %v347 = vsel %vm327, %v98, 0
    %v350 = vsel %vm327, %v102, 0
    %v353 = vsel %vm327, %v106, 0
    %v356 = vsel %vm327, %v110, 0
    %v359 = vsel %vm327, %v114, 0
    %v362 = vsel %vm327, %v118, 0
    %v365 = vsel %vm327, %v122, 0
    %v368 = vsel %vm327, %v126, 0
    %v371 = vsel %vm327, %v130, 0
    %v374 = vsel %vm327, %v134, 0
    %v377 = vsel %vm327, %v138, 0
    %v380 = vsel %vm327, %v142, 0
    %v383 = vsel %vm327, %v146, 0
    %v386 = vsel %vm327, %v150, 0
    %v389 = vsel %vm327, %v154, 0
    %v392 = vsel %vm327, %v158, 0
    %v395 = vsel %vm327, %v162, 0
    %v398 = vsel %vm327, %v166, 0
    %v401 = vsel %vm327, %v170, 0
    %v404 = vsel %vm327, %v174, 0
    %v407 = vsel %vm327, %v178, 0
    %v410 = vsel %vm327, %v182, 0
    %v413 = vsel %vm327, %v186, 0
    %v416 = vsel %vm327, %v190, 0
    %v419 = vsel %vm327, %v194, 0
    %v422 = vsel %vm327, %v198, 0
    %v425 = vsel %vm327, %v202, 0
    %v428 = vsel %vm327, %v206, 0
    %v431 = vsel %vm327, %v210, 0
    %v434 = vsel %vm327, %v214, 0
    %v437 = vsel %vm327, %v218, 0
    %v440 = vsel %vm327, %v222, 0
    %v443 = vsel %vm327, %v226, 0
    %v446 = vsel %vm327, %v230, 0
    %v449 = vsel %vm327, %v234, 0
    %v452 = vsel %vm327, %v238, 0
    %v455 = vsel %vm327, %v242, 0
    %v458 = vsel %vm327, %v246, 0
    %v461 = vsel %vm327, %v250, 0
    %v464 = vsel %vm327, %v254, 0
    %v467 = vsel %vm327, %v258, 0
    %v470 = vsel %vm327, %v262, 0
    %v473 = vsel %vm327, %v266, 0
    %v476 = vsel %vm327, %v270, 0
    %v479 = vsel %vm327, %v274, 0
    %v482 = vsel %vm327, %v278, 0
    %v485 = vsel %vm327, %v282, 0
    %v488 = vsel %vm327, %v286, 0
    %v491 = vsel %vm327, %v290, 0
    %v494 = vsel %vm327, %v294, 0
    %v497 = vsel %vm327, %v298, 0
    %v500 = vsel %vm327, %v302, 0
    %v503 = vsel %vm327, %v306, 0
    %v506 = vsel %vm327, %v310, 0
    %v509 = vsel %vm327, %v314, 0
    %v512 = vsel %vm327, %v318, 0
    %v515 = vsel %vm327, %v322, 0
    %v518 = vsel %vm327, %v326, 0
    %520 = vmatpush.msra.mxu0 %v36
    %521 = vmatpush.msra.mxu0 %v35
    %522 = vmatpush.msra.mxu0 %v34
    %523 = vmatpush.msra.mxu0 %v33
    %524 = vmatpush.msra.mxu0 %v32
    %525 = vmatpush.msra.mxu0 %v31
    %526 = vmatpush.msra.mxu0 %v30
    %527 = vmatpush.msra.mxu0 %v29
    %528 = vmatpush.msra.mxu0 %v28
    %529 = vmatpush.msra.mxu0 %v27
    %530 = vmatpush.msra.mxu0 %v26
    %531 = vmatpush.msra.mxu0 %v25
    %532 = vmatpush.msra.mxu0 %v24
    %533 = vmatpush.msra.mxu0 %v23
    %534 = vmatpush.msra.mxu0 %v22
    %535 = vmatpush.msra.mxu0 %v21
    %536 = vmatmul.f32.gmra.mxu0 %v71
    %v537 = vpop.f32.mrf.mxu0
    %v538 = vadd.f32 0.0, %v537
    %539 = vmatmul.f32.gmra.mxu0 %v75
    %v540 = vpop.f32.mrf.mxu0
    %v541 = vadd.f32 0.0, %v540
    %542 = vmatmul.f32.gmra.mxu0 %v79
    %v543 = vpop.f32.mrf.mxu0
    %v544 = vadd.f32 0.0, %v543
    %545 = vmatmul.f32.gmra.mxu0 %v83
    %v546 = vpop.f32.mrf.mxu0
    %v547 = vadd.f32 0.0, %v546
    %548 = vmatmul.f32.gmra.mxu0 %v87
    %v549 = vpop.f32.mrf.mxu0
    %v550 = vadd.f32 0.0, %v549
    %551 = vmatmul.f32.gmra.mxu0 %v91
    %v552 = vpop.f32.mrf.mxu0
    %v553 = vadd.f32 0.0, %v552
    %554 = vmatmul.f32.gmra.mxu0 %v95
    %v555 = vpop.f32.mrf.mxu0
    %v556 = vadd.f32 0.0, %v555
    %557 = vmatmul.f32.gmra.mxu0 %v99
    %v558 = vpop.f32.mrf.mxu0
    %v559 = vadd.f32 0.0, %v558
    %560 = vmatmul.f32.gmra.mxu0 %v103
    %v561 = vpop.f32.mrf.mxu0
    %v562 = vadd.f32 0.0, %v561
    %563 = vmatmul.f32.gmra.mxu0 %v107
    %v564 = vpop.f32.mrf.mxu0
    %v565 = vadd.f32 0.0, %v564
    %566 = vmatmul.f32.gmra.mxu0 %v111
    %v567 = vpop.f32.mrf.mxu0
    %v568 = vadd.f32 0.0, %v567
    %569 = vmatmul.f32.gmra.mxu0 %v115
    %v570 = vpop.f32.mrf.mxu0
    %v571 = vadd.f32 0.0, %v570
    %572 = vmatmul.f32.gmra.mxu0 %v119
    %v573 = vpop.f32.mrf.mxu0
    %v574 = vadd.f32 0.0, %v573
    %575 = vmatmul.f32.gmra.mxu0 %v123
    %v576 = vpop.f32.mrf.mxu0
    %v577 = vadd.f32 0.0, %v576
    %578 = vmatmul.f32.gmra.mxu0 %v127
    %v579 = vpop.f32.mrf.mxu0
    %v580 = vadd.f32 0.0, %v579
    %581 = vmatmul.f32.gmra.mxu0 %v131
    %v582 = vpop.f32.mrf.mxu0
    %v583 = vadd.f32 0.0, %v582
    %584 = vmatmul.f32.gmra.mxu0 %v135
    %v585 = vpop.f32.mrf.mxu0
    %v586 = vadd.f32 0.0, %v585
    %587 = vmatmul.f32.gmra.mxu0 %v139
    %v588 = vpop.f32.mrf.mxu0
    %v589 = vadd.f32 0.0, %v588
    %590 = vmatmul.f32.gmra.mxu0 %v143
    %v591 = vpop.f32.mrf.mxu0
    %v592 = vadd.f32 0.0, %v591
    %593 = vmatmul.f32.gmra.mxu0 %v147
    %v594 = vpop.f32.mrf.mxu0
    %v595 = vadd.f32 0.0, %v594
    %596 = vmatmul.f32.gmra.mxu0 %v151
    %v597 = vpop.f32.mrf.mxu0
    %v598 = vadd.f32 0.0, %v597
    %599 = vmatmul.f32.gmra.mxu0 %v155
    %v600 = vpop.f32.mrf.mxu0
    %v601 = vadd.f32 0.0, %v600
    %602 = vmatmul.f32.gmra.mxu0 %v159
    %v603 = vpop.f32.mrf.mxu0
    %v604 = vadd.f32 0.0, %v603
    %605 = vmatmul.f32.gmra.mxu0 %v163
    %v606 = vpop.f32.mrf.mxu0
    %v607 = vadd.f32 0.0, %v606
    %608 = vmatmul.f32.gmra.mxu0 %v167
    %v609 = vpop.f32.mrf.mxu0
    %v610 = vadd.f32 0.0, %v609
    %611 = vmatmul.f32.gmra.mxu0 %v171
    %v612 = vpop.f32.mrf.mxu0
    %v613 = vadd.f32 0.0, %v612
    %614 = vmatmul.f32.gmra.mxu0 %v175
    %v615 = vpop.f32.mrf.mxu0
    %v616 = vadd.f32 0.0, %v615
    %617 = vmatmul.f32.gmra.mxu0 %v179
    %v618 = vpop.f32.mrf.mxu0
    %v619 = vadd.f32 0.0, %v618
    %620 = vmatmul.f32.gmra.mxu0 %v183
    %v621 = vpop.f32.mrf.mxu0
    %v622 = vadd.f32 0.0, %v621
    %623 = vmatmul.f32.gmra.mxu0 %v187
    %v624 = vpop.f32.mrf.mxu0
    %v625 = vadd.f32 0.0, %v624
    %626 = vmatmul.f32.gmra.mxu0 %v191
    %v627 = vpop.f32.mrf.mxu0
    %v628 = vadd.f32 0.0, %v627
    %629 = vmatmul.f32.gmra.mxu0 %v195
    %v630 = vpop.f32.mrf.mxu0
    %v631 = vadd.f32 0.0, %v630
    %632 = vmatmul.f32.gmra.mxu0 %v199
    %v633 = vpop.f32.mrf.mxu0
    %v634 = vadd.f32 0.0, %v633
    %635 = vmatmul.f32.gmra.mxu0 %v203
    %v636 = vpop.f32.mrf.mxu0
    %v637 = vadd.f32 0.0, %v636
    %638 = vmatmul.f32.gmra.mxu0 %v207
    %v639 = vpop.f32.mrf.mxu0
    %v640 = vadd.f32 0.0, %v639
    %641 = vmatmul.f32.gmra.mxu0 %v211
    %v642 = vpop.f32.mrf.mxu0
    %v643 = vadd.f32 0.0, %v642
    %644 = vmatmul.f32.gmra.mxu0 %v215
    %v645 = vpop.f32.mrf.mxu0
    %v646 = vadd.f32 0.0, %v645
    %647 = vmatmul.f32.gmra.mxu0 %v219
    %v648 = vpop.f32.mrf.mxu0
    %v649 = vadd.f32 0.0, %v648
    %650 = vmatmul.f32.gmra.mxu0 %v223
    %v651 = vpop.f32.mrf.mxu0
    %v652 = vadd.f32 0.0, %v651
    %653 = vmatmul.f32.gmra.mxu0 %v227
    %v654 = vpop.f32.mrf.mxu0
    %v655 = vadd.f32 0.0, %v654
    %656 = vmatmul.f32.gmra.mxu0 %v231
    %v657 = vpop.f32.mrf.mxu0
    %v658 = vadd.f32 0.0, %v657
    %659 = vmatmul.f32.gmra.mxu0 %v235
    %v660 = vpop.f32.mrf.mxu0
    %v661 = vadd.f32 0.0, %v660
    %662 = vmatmul.f32.gmra.mxu0 %v239
    %v663 = vpop.f32.mrf.mxu0
    %v664 = vadd.f32 0.0, %v663
    %665 = vmatmul.f32.gmra.mxu0 %v243
    %v666 = vpop.f32.mrf.mxu0
    %v667 = vadd.f32 0.0, %v666
    %668 = vmatmul.f32.gmra.mxu0 %v247
    %v669 = vpop.f32.mrf.mxu0
    %v670 = vadd.f32 0.0, %v669
    %671 = vmatmul.f32.gmra.mxu0 %v251
    %v672 = vpop.f32.mrf.mxu0
    %v673 = vadd.f32 0.0, %v672
    %674 = vmatmul.f32.gmra.mxu0 %v255
    %v675 = vpop.f32.mrf.mxu0
    %v676 = vadd.f32 0.0, %v675
    %677 = vmatmul.f32.gmra.mxu0 %v259
    %v678 = vpop.f32.mrf.mxu0
    %v679 = vadd.f32 0.0, %v678
    %680 = vmatmul.f32.gmra.mxu0 %v263
    %v681 = vpop.f32.mrf.mxu0
    %v682 = vadd.f32 0.0, %v681
    %683 = vmatmul.f32.gmra.mxu0 %v267
    %v684 = vpop.f32.mrf.mxu0
    %v685 = vadd.f32 0.0, %v684
    %686 = vmatmul.f32.gmra.mxu0 %v271
    %v687 = vpop.f32.mrf.mxu0
    %v688 = vadd.f32 0.0, %v687
    %689 = vmatmul.f32.gmra.mxu0 %v275
    %v690 = vpop.f32.mrf.mxu0
    %v691 = vadd.f32 0.0, %v690
    %692 = vmatmul.f32.gmra.mxu0 %v279
    %v693 = vpop.f32.mrf.mxu0
    %v694 = vadd.f32 0.0, %v693
    %695 = vmatmul.f32.gmra.mxu0 %v283
    %v696 = vpop.f32.mrf.mxu0
    %v697 = vadd.f32 0.0, %v696
    %698 = vmatmul.f32.gmra.mxu0 %v287
    %v699 = vpop.f32.mrf.mxu0
    %v700 = vadd.f32 0.0, %v699
    %701 = vmatmul.f32.gmra.mxu0 %v291
    %v702 = vpop.f32.mrf.mxu0
    %v703 = vadd.f32 0.0, %v702
    %704 = vmatmul.f32.gmra.mxu0 %v295
    %v705 = vpop.f32.mrf.mxu0
    %v706 = vadd.f32 0.0, %v705
    %707 = vmatmul.f32.gmra.mxu0 %v299
    %v708 = vpop.f32.mrf.mxu0
    %v709 = vadd.f32 0.0, %v708
    %710 = vmatmul.f32.gmra.mxu0 %v303
    %v711 = vpop.f32.mrf.mxu0
    %v712 = vadd.f32 0.0, %v711
    %713 = vmatmul.f32.gmra.mxu0 %v307
    %v714 = vpop.f32.mrf.mxu0
    %v715 = vadd.f32 0.0, %v714
    %716 = vmatmul.f32.gmra.mxu0 %v311
    %v717 = vpop.f32.mrf.mxu0
    %v718 = vadd.f32 0.0, %v717
    %719 = vmatmul.f32.gmra.mxu0 %v315
    %v720 = vpop.f32.mrf.mxu0
    %v721 = vadd.f32 0.0, %v720
    %722 = vmatmul.f32.gmra.mxu0 %v319
    %v723 = vpop.f32.mrf.mxu0
    %v724 = vadd.f32 0.0, %v723
    %725 = vmatmul.f32.gmra.mxu0 %v323
    %v726 = vpop.f32.mrf.mxu0
    %v727 = vadd.f32 0.0, %v726
    %728 = vdwg.mxu0
    %729 = vmatpush.msra.mxu0 %v52
    %730 = vmatpush.msra.mxu0 %v51
    %731 = vmatpush.msra.mxu0 %v50
    %732 = vmatpush.msra.mxu0 %v49
    %733 = vmatpush.msra.mxu0 %v48
    %734 = vmatpush.msra.mxu0 %v47
    %735 = vmatpush.msra.mxu0 %v46
    %736 = vmatpush.msra.mxu0 %v45
    %737 = vmatpush.msra.mxu0 %v44
    %738 = vmatpush.msra.mxu0 %v43
    %739 = vmatpush.msra.mxu0 %v42
    %740 = vmatpush.msra.mxu0 %v41
    %741 = vmatpush.msra.mxu0 %v40
    %742 = vmatpush.msra.mxu0 %v39
    %743 = vmatpush.msra.mxu0 %v38
    %744 = vmatpush.msra.mxu0 %v37
    %745 = vmatmul.f32.gmra.mxu0 %v72
    %v746 = vpop.f32.mrf.mxu0
    %v747 = vadd.f32 %v538, %v746
    %748 = vmatmul.f32.gmra.mxu0 %v76
    %v749 = vpop.f32.mrf.mxu0
    %v750 = vadd.f32 %v541, %v749
    %751 = vmatmul.f32.gmra.mxu0 %v80
    %v752 = vpop.f32.mrf.mxu0
    %v753 = vadd.f32 %v544, %v752
    %754 = vmatmul.f32.gmra.mxu0 %v84
    %v755 = vpop.f32.mrf.mxu0
    %v756 = vadd.f32 %v547, %v755
    %757 = vmatmul.f32.gmra.mxu0 %v88
    %v758 = vpop.f32.mrf.mxu0
    %v759 = vadd.f32 %v550, %v758
    %760 = vmatmul.f32.gmra.mxu0 %v92
    %v761 = vpop.f32.mrf.mxu0
    %v762 = vadd.f32 %v553, %v761
    %763 = vmatmul.f32.gmra.mxu0 %v96
    %v764 = vpop.f32.mrf.mxu0
    %v765 = vadd.f32 %v556, %v764
    %766 = vmatmul.f32.gmra.mxu0 %v100
    %v767 = vpop.f32.mrf.mxu0
    %v768 = vadd.f32 %v559, %v767
    %769 = vmatmul.f32.gmra.mxu0 %v104
    %v770 = vpop.f32.mrf.mxu0
    %v771 = vadd.f32 %v562, %v770
    %772 = vmatmul.f32.gmra.mxu0 %v108
    %v773 = vpop.f32.mrf.mxu0
    %v774 = vadd.f32 %v565, %v773
    %775 = vmatmul.f32.gmra.mxu0 %v112
    %v776 = vpop.f32.mrf.mxu0
    %v777 = vadd.f32 %v568, %v776
    %778 = vmatmul.f32.gmra.mxu0 %v116
    %v779 = vpop.f32.mrf.mxu0
    %v780 = vadd.f32 %v571, %v779
    %781 = vmatmul.f32.gmra.mxu0 %v120
    %v782 = vpop.f32.mrf.mxu0
    %v783 = vadd.f32 %v574, %v782
    %784 = vmatmul.f32.gmra.mxu0 %v124
    %v785 = vpop.f32.mrf.mxu0
    %v786 = vadd.f32 %v577, %v785
    %787 = vmatmul.f32.gmra.mxu0 %v128
    %v788 = vpop.f32.mrf.mxu0
    %v789 = vadd.f32 %v580, %v788
    %790 = vmatmul.f32.gmra.mxu0 %v132
    %v791 = vpop.f32.mrf.mxu0
    %v792 = vadd.f32 %v583, %v791
    %793 = vmatmul.f32.gmra.mxu0 %v136
    %v794 = vpop.f32.mrf.mxu0
    %v795 = vadd.f32 %v586, %v794
    %796 = vmatmul.f32.gmra.mxu0 %v140
    %v797 = vpop.f32.mrf.mxu0
    %v798 = vadd.f32 %v589, %v797
    %799 = vmatmul.f32.gmra.mxu0 %v144
    %v800 = vpop.f32.mrf.mxu0
    %v801 = vadd.f32 %v592, %v800
    %802 = vmatmul.f32.gmra.mxu0 %v148
    %v803 = vpop.f32.mrf.mxu0
    %v804 = vadd.f32 %v595, %v803
    %805 = vmatmul.f32.gmra.mxu0 %v152
    %v806 = vpop.f32.mrf.mxu0
    %v807 = vadd.f32 %v598, %v806
    %808 = vmatmul.f32.gmra.mxu0 %v156
    %v809 = vpop.f32.mrf.mxu0
    %v810 = vadd.f32 %v601, %v809
    %811 = vmatmul.f32.gmra.mxu0 %v160
    %v812 = vpop.f32.mrf.mxu0
    %v813 = vadd.f32 %v604, %v812
    %814 = vmatmul.f32.gmra.mxu0 %v164
    %v815 = vpop.f32.mrf.mxu0
    %v816 = vadd.f32 %v607, %v815
    %817 = vmatmul.f32.gmra.mxu0 %v168
    %v818 = vpop.f32.mrf.mxu0
    %v819 = vadd.f32 %v610, %v818
    %820 = vmatmul.f32.gmra.mxu0 %v172
    %v821 = vpop.f32.mrf.mxu0
    %v822 = vadd.f32 %v613, %v821
    %823 = vmatmul.f32.gmra.mxu0 %v176
    %v824 = vpop.f32.mrf.mxu0
    %v825 = vadd.f32 %v616, %v824
    %826 = vmatmul.f32.gmra.mxu0 %v180
    %v827 = vpop.f32.mrf.mxu0
    %v828 = vadd.f32 %v619, %v827
    %829 = vmatmul.f32.gmra.mxu0 %v184
    %v830 = vpop.f32.mrf.mxu0
    %v831 = vadd.f32 %v622, %v830
    %832 = vmatmul.f32.gmra.mxu0 %v188
    %v833 = vpop.f32.mrf.mxu0
    %v834 = vadd.f32 %v625, %v833
    %835 = vmatmul.f32.gmra.mxu0 %v192
    %v836 = vpop.f32.mrf.mxu0
    %v837 = vadd.f32 %v628, %v836
    %838 = vmatmul.f32.gmra.mxu0 %v196
    %v839 = vpop.f32.mrf.mxu0
    %v840 = vadd.f32 %v631, %v839
    %841 = vmatmul.f32.gmra.mxu0 %v200
    %v842 = vpop.f32.mrf.mxu0
    %v843 = vadd.f32 %v634, %v842
    %844 = vmatmul.f32.gmra.mxu0 %v204
    %v845 = vpop.f32.mrf.mxu0
    %v846 = vadd.f32 %v637, %v845
    %847 = vmatmul.f32.gmra.mxu0 %v208
    %v848 = vpop.f32.mrf.mxu0
    %v849 = vadd.f32 %v640, %v848
    %850 = vmatmul.f32.gmra.mxu0 %v212
    %v851 = vpop.f32.mrf.mxu0
    %v852 = vadd.f32 %v643, %v851
    %853 = vmatmul.f32.gmra.mxu0 %v216
    %v854 = vpop.f32.mrf.mxu0
    %v855 = vadd.f32 %v646, %v854
    %856 = vmatmul.f32.gmra.mxu0 %v220
    %v857 = vpop.f32.mrf.mxu0
    %v858 = vadd.f32 %v649, %v857
    %859 = vmatmul.f32.gmra.mxu0 %v224
    %v860 = vpop.f32.mrf.mxu0
    %v861 = vadd.f32 %v652, %v860
    %862 = vmatmul.f32.gmra.mxu0 %v228
    %v863 = vpop.f32.mrf.mxu0
    %v864 = vadd.f32 %v655, %v863
    %865 = vmatmul.f32.gmra.mxu0 %v232
    %v866 = vpop.f32.mrf.mxu0
    %v867 = vadd.f32 %v658, %v866
    %868 = vmatmul.f32.gmra.mxu0 %v236
    %v869 = vpop.f32.mrf.mxu0
    %v870 = vadd.f32 %v661, %v869
    %871 = vmatmul.f32.gmra.mxu0 %v240
    %v872 = vpop.f32.mrf.mxu0
    %v873 = vadd.f32 %v664, %v872
    %874 = vmatmul.f32.gmra.mxu0 %v244
    %v875 = vpop.f32.mrf.mxu0
    %v876 = vadd.f32 %v667, %v875
    %877 = vmatmul.f32.gmra.mxu0 %v248
    %v878 = vpop.f32.mrf.mxu0
    %v879 = vadd.f32 %v670, %v878
    %880 = vmatmul.f32.gmra.mxu0 %v252
    %v881 = vpop.f32.mrf.mxu0
    %v882 = vadd.f32 %v673, %v881
    %883 = vmatmul.f32.gmra.mxu0 %v256
    %v884 = vpop.f32.mrf.mxu0
    %v885 = vadd.f32 %v676, %v884
    %886 = vmatmul.f32.gmra.mxu0 %v260
    %v887 = vpop.f32.mrf.mxu0
    %v888 = vadd.f32 %v679, %v887
    %889 = vmatmul.f32.gmra.mxu0 %v264
    %v890 = vpop.f32.mrf.mxu0
    %v891 = vadd.f32 %v682, %v890
    %892 = vmatmul.f32.gmra.mxu0 %v268
    %v893 = vpop.f32.mrf.mxu0
    %v894 = vadd.f32 %v685, %v893
    %895 = vmatmul.f32.gmra.mxu0 %v272
    %v896 = vpop.f32.mrf.mxu0
    %v897 = vadd.f32 %v688, %v896
    %898 = vmatmul.f32.gmra.mxu0 %v276
    %v899 = vpop.f32.mrf.mxu0
    %v900 = vadd.f32 %v691, %v899
    %901 = vmatmul.f32.gmra.mxu0 %v280
    %v902 = vpop.f32.mrf.mxu0
    %v903 = vadd.f32 %v694, %v902
    %904 = vmatmul.f32.gmra.mxu0 %v284
    %v905 = vpop.f32.mrf.mxu0
    %v906 = vadd.f32 %v697, %v905
    %907 = vmatmul.f32.gmra.mxu0 %v288
    %v908 = vpop.f32.mrf.mxu0
    %v909 = vadd.f32 %v700, %v908
    %910 = vmatmul.f32.gmra.mxu0 %v292
    %v911 = vpop.f32.mrf.mxu0
    %v912 = vadd.f32 %v703, %v911
    %913 = vmatmul.f32.gmra.mxu0 %v296
    %v914 = vpop.f32.mrf.mxu0
    %v915 = vadd.f32 %v706, %v914
    %916 = vmatmul.f32.gmra.mxu0 %v300
    %v917 = vpop.f32.mrf.mxu0
    %v918 = vadd.f32 %v709, %v917
    %919 = vmatmul.f32.gmra.mxu0 %v304
    %v920 = vpop.f32.mrf.mxu0
    %v921 = vadd.f32 %v712, %v920
    %922 = vmatmul.f32.gmra.mxu0 %v308
    %v923 = vpop.f32.mrf.mxu0
    %v924 = vadd.f32 %v715, %v923
    %925 = vmatmul.f32.gmra.mxu0 %v312
    %v926 = vpop.f32.mrf.mxu0
    %v927 = vadd.f32 %v718, %v926
    %928 = vmatmul.f32.gmra.mxu0 %v316
    %v929 = vpop.f32.mrf.mxu0
    %v930 = vadd.f32 %v721, %v929
    %931 = vmatmul.f32.gmra.mxu0 %v320
    %v932 = vpop.f32.mrf.mxu0
    %v933 = vadd.f32 %v724, %v932
    %934 = vmatmul.f32.gmra.mxu0 %v324
    %v935 = vpop.f32.mrf.mxu0
    %v936 = vadd.f32 %v727, %v935
    %937 = vdwg.mxu0
    %938 = vmatpush.msra.mxu0 %v68
    %939 = vmatpush.msra.mxu0 %v67
    %940 = vmatpush.msra.mxu0 %v66
    %941 = vmatpush.msra.mxu0 %v65
    %942 = vmatpush.msra.mxu0 %v64
    %943 = vmatpush.msra.mxu0 %v63
    %944 = vmatpush.msra.mxu0 %v62
    %945 = vmatpush.msra.mxu0 %v61
    %946 = vmatpush.msra.mxu0 %v60
    %947 = vmatpush.msra.mxu0 %v59
    %948 = vmatpush.msra.mxu0 %v58
    %949 = vmatpush.msra.mxu0 %v57
    %950 = vmatpush.msra.mxu0 %v56
    %951 = vmatpush.msra.mxu0 %v55
    %952 = vmatpush.msra.mxu0 %v54
    %953 = vmatpush.msra.mxu0 %v53
    %954 = vmatmul.f32.gmra.mxu0 %v73
    %v955 = vpop.f32.mrf.mxu0
    %v956 = vadd.f32 %v747, %v955
    %957 = vmatmul.f32.gmra.mxu0 %v77
    %v958 = vpop.f32.mrf.mxu0
    %v959 = vadd.f32 %v750, %v958
    %960 = vmatmul.f32.gmra.mxu0 %v81
    %v961 = vpop.f32.mrf.mxu0
    %v962 = vadd.f32 %v753, %v961
    %963 = vmatmul.f32.gmra.mxu0 %v85
    %v964 = vpop.f32.mrf.mxu0
    %v965 = vadd.f32 %v756, %v964
    %966 = vmatmul.f32.gmra.mxu0 %v89
    %v967 = vpop.f32.mrf.mxu0
    %v968 = vadd.f32 %v759, %v967
    %969 = vmatmul.f32.gmra.mxu0 %v93
    %v970 = vpop.f32.mrf.mxu0
    %v971 = vadd.f32 %v762, %v970
    %972 = vmatmul.f32.gmra.mxu0 %v97
    %v973 = vpop.f32.mrf.mxu0
    %v974 = vadd.f32 %v765, %v973
    %975 = vmatmul.f32.gmra.mxu0 %v101
    %v976 = vpop.f32.mrf.mxu0
    %v977 = vadd.f32 %v768, %v976
    %978 = vmatmul.f32.gmra.mxu0 %v105
    %v979 = vpop.f32.mrf.mxu0
    %v980 = vadd.f32 %v771, %v979
    %981 = vmatmul.f32.gmra.mxu0 %v109
    %v982 = vpop.f32.mrf.mxu0
    %v983 = vadd.f32 %v774, %v982
    %984 = vmatmul.f32.gmra.mxu0 %v113
    %v985 = vpop.f32.mrf.mxu0
    %v986 = vadd.f32 %v777, %v985
    %987 = vmatmul.f32.gmra.mxu0 %v117
    %v988 = vpop.f32.mrf.mxu0
    %v989 = vadd.f32 %v780, %v988
    %990 = vmatmul.f32.gmra.mxu0 %v121
    %v991 = vpop.f32.mrf.mxu0
    %v992 = vadd.f32 %v783, %v991
    %993 = vmatmul.f32.gmra.mxu0 %v125
    %v994 = vpop.f32.mrf.mxu0
    %v995 = vadd.f32 %v786, %v994
    %996 = vmatmul.f32.gmra.mxu0 %v129
    %v997 = vpop.f32.mrf.mxu0
    %v998 = vadd.f32 %v789, %v997
    %999 = vmatmul.f32.gmra.mxu0 %v133
    %v1000 = vpop.f32.mrf.mxu0
    %v1001 = vadd.f32 %v792, %v1000
    %1002 = vmatmul.f32.gmra.mxu0 %v137
    %v1003 = vpop.f32.mrf.mxu0
    %v1004 = vadd.f32 %v795, %v1003
    %1005 = vmatmul.f32.gmra.mxu0 %v141
    %v1006 = vpop.f32.mrf.mxu0
    %v1007 = vadd.f32 %v798, %v1006
    %1008 = vmatmul.f32.gmra.mxu0 %v145
    %v1009 = vpop.f32.mrf.mxu0
    %v1010 = vadd.f32 %v801, %v1009
    %1011 = vmatmul.f32.gmra.mxu0 %v149
    %v1012 = vpop.f32.mrf.mxu0
    %v1013 = vadd.f32 %v804, %v1012
    %1014 = vmatmul.f32.gmra.mxu0 %v153
    %v1015 = vpop.f32.mrf.mxu0
    %v1016 = vadd.f32 %v807, %v1015
    %1017 = vmatmul.f32.gmra.mxu0 %v157
    %v1018 = vpop.f32.mrf.mxu0
    %v1019 = vadd.f32 %v810, %v1018
    %1020 = vmatmul.f32.gmra.mxu0 %v161
    %v1021 = vpop.f32.mrf.mxu0
    %v1022 = vadd.f32 %v813, %v1021
    %1023 = vmatmul.f32.gmra.mxu0 %v165
    %v1024 = vpop.f32.mrf.mxu0
    %v1025 = vadd.f32 %v816, %v1024
    %1026 = vmatmul.f32.gmra.mxu0 %v169
    %v1027 = vpop.f32.mrf.mxu0
    %v1028 = vadd.f32 %v819, %v1027
    %1029 = vmatmul.f32.gmra.mxu0 %v173
    %v1030 = vpop.f32.mrf.mxu0
    %v1031 = vadd.f32 %v822, %v1030
    %1032 = vmatmul.f32.gmra.mxu0 %v177
    %v1033 = vpop.f32.mrf.mxu0
    %v1034 = vadd.f32 %v825, %v1033
    %1035 = vmatmul.f32.gmra.mxu0 %v181
    %v1036 = vpop.f32.mrf.mxu0
    %v1037 = vadd.f32 %v828, %v1036
    %1038 = vmatmul.f32.gmra.mxu0 %v185
    %v1039 = vpop.f32.mrf.mxu0
    %v1040 = vadd.f32 %v831, %v1039
    %1041 = vmatmul.f32.gmra.mxu0 %v189
    %v1042 = vpop.f32.mrf.mxu0
    %v1043 = vadd.f32 %v834, %v1042
    %1044 = vmatmul.f32.gmra.mxu0 %v193
    %v1045 = vpop.f32.mrf.mxu0
    %v1046 = vadd.f32 %v837, %v1045
    %1047 = vmatmul.f32.gmra.mxu0 %v197
    %v1048 = vpop.f32.mrf.mxu0
    %v1049 = vadd.f32 %v840, %v1048
    %1050 = vmatmul.f32.gmra.mxu0 %v201
    %v1051 = vpop.f32.mrf.mxu0
    %v1052 = vadd.f32 %v843, %v1051
    %1053 = vmatmul.f32.gmra.mxu0 %v205
    %v1054 = vpop.f32.mrf.mxu0
    %v1055 = vadd.f32 %v846, %v1054
    %1056 = vmatmul.f32.gmra.mxu0 %v209
    %v1057 = vpop.f32.mrf.mxu0
    %v1058 = vadd.f32 %v849, %v1057
    %1059 = vmatmul.f32.gmra.mxu0 %v213
    %v1060 = vpop.f32.mrf.mxu0
    %v1061 = vadd.f32 %v852, %v1060
    %1062 = vmatmul.f32.gmra.mxu0 %v217
    %v1063 = vpop.f32.mrf.mxu0
    %v1064 = vadd.f32 %v855, %v1063
    %1065 = vmatmul.f32.gmra.mxu0 %v221
    %v1066 = vpop.f32.mrf.mxu0
    %v1067 = vadd.f32 %v858, %v1066
    %1068 = vmatmul.f32.gmra.mxu0 %v225
    %v1069 = vpop.f32.mrf.mxu0
    %v1070 = vadd.f32 %v861, %v1069
    %1071 = vmatmul.f32.gmra.mxu0 %v229
    %v1072 = vpop.f32.mrf.mxu0
    %v1073 = vadd.f32 %v864, %v1072
    %1074 = vmatmul.f32.gmra.mxu0 %v233
    %v1075 = vpop.f32.mrf.mxu0
    %v1076 = vadd.f32 %v867, %v1075
    %1077 = vmatmul.f32.gmra.mxu0 %v237
    %v1078 = vpop.f32.mrf.mxu0
    %v1079 = vadd.f32 %v870, %v1078
    %1080 = vmatmul.f32.gmra.mxu0 %v241
    %v1081 = vpop.f32.mrf.mxu0
    %v1082 = vadd.f32 %v873, %v1081
    %1083 = vmatmul.f32.gmra.mxu0 %v245
    %v1084 = vpop.f32.mrf.mxu0
    %v1085 = vadd.f32 %v876, %v1084
    %1086 = vmatmul.f32.gmra.mxu0 %v249
    %v1087 = vpop.f32.mrf.mxu0
    %v1088 = vadd.f32 %v879, %v1087
    %1089 = vmatmul.f32.gmra.mxu0 %v253
    %v1090 = vpop.f32.mrf.mxu0
    %v1091 = vadd.f32 %v882, %v1090
    %1092 = vmatmul.f32.gmra.mxu0 %v257
    %v1093 = vpop.f32.mrf.mxu0
    %v1094 = vadd.f32 %v885, %v1093
    %1095 = vmatmul.f32.gmra.mxu0 %v261
    %v1096 = vpop.f32.mrf.mxu0
    %v1097 = vadd.f32 %v888, %v1096
    %1098 = vmatmul.f32.gmra.mxu0 %v265
    %v1099 = vpop.f32.mrf.mxu0
    %v1100 = vadd.f32 %v891, %v1099
    %1101 = vmatmul.f32.gmra.mxu0 %v269
    %v1102 = vpop.f32.mrf.mxu0
    %v1103 = vadd.f32 %v894, %v1102
    %1104 = vmatmul.f32.gmra.mxu0 %v273
    %v1105 = vpop.f32.mrf.mxu0
    %v1106 = vadd.f32 %v897, %v1105
    %1107 = vmatmul.f32.gmra.mxu0 %v277
    %v1108 = vpop.f32.mrf.mxu0
    %v1109 = vadd.f32 %v900, %v1108
    %1110 = vmatmul.f32.gmra.mxu0 %v281
    %v1111 = vpop.f32.mrf.mxu0
    %v1112 = vadd.f32 %v903, %v1111
    %1113 = vmatmul.f32.gmra.mxu0 %v285
    %v1114 = vpop.f32.mrf.mxu0
    %v1115 = vadd.f32 %v906, %v1114
    %1116 = vmatmul.f32.gmra.mxu0 %v289
    %v1117 = vpop.f32.mrf.mxu0
    %v1118 = vadd.f32 %v909, %v1117
    %1119 = vmatmul.f32.gmra.mxu0 %v293
    %v1120 = vpop.f32.mrf.mxu0
    %v1121 = vadd.f32 %v912, %v1120
    %1122 = vmatmul.f32.gmra.mxu0 %v297
    %v1123 = vpop.f32.mrf.mxu0
    %v1124 = vadd.f32 %v915, %v1123
    %1125 = vmatmul.f32.gmra.mxu0 %v301
    %v1126 = vpop.f32.mrf.mxu0
    %v1127 = vadd.f32 %v918, %v1126
    %1128 = vmatmul.f32.gmra.mxu0 %v305
    %v1129 = vpop.f32.mrf.mxu0
    %v1130 = vadd.f32 %v921, %v1129
    %1131 = vmatmul.f32.gmra.mxu0 %v309
    %v1132 = vpop.f32.mrf.mxu0
    %v1133 = vadd.f32 %v924, %v1132
    %1134 = vmatmul.f32.gmra.mxu0 %v313
    %v1135 = vpop.f32.mrf.mxu0
    %v1136 = vadd.f32 %v927, %v1135
    %1137 = vmatmul.f32.gmra.mxu0 %v317
    %v1138 = vpop.f32.mrf.mxu0
    %v1139 = vadd.f32 %v930, %v1138
    %1140 = vmatmul.f32.gmra.mxu0 %v321
    %v1141 = vpop.f32.mrf.mxu0
    %v1142 = vadd.f32 %v933, %v1141
    %1143 = vmatmul.f32.gmra.mxu0 %v325
    %v1144 = vpop.f32.mrf.mxu0
    %v1145 = vadd.f32 %v936, %v1144
    %1146 = vdwg.mxu0
    %1147 = vmatpush.msra.mxu0 0.0
    %1148 = vmatpush.msra.mxu0 0.0
    %1149 = vmatpush.msra.mxu0 0.0
    %1150 = vmatpush.msra.mxu0 0.0
    %1151 = vmatpush.msra.mxu0 0.0
    %1152 = vmatpush.msra.mxu0 0.0
    %1153 = vmatpush.msra.mxu0 0.0
    %1154 = vmatpush.msra.mxu0 0.0
    %1155 = vmatpush.msra.mxu0 0.0
    %1156 = vmatpush.msra.mxu0 0.0
    %1157 = vmatpush.msra.mxu0 0.0
    %1158 = vmatpush.msra.mxu0 0.0
    %1159 = vmatpush.msra.mxu0 0.0
    %1160 = vmatpush.msra.mxu0 0.0
    %1161 = vmatpush.msra.mxu0 %v70
    %1162 = vmatpush.msra.mxu0 %v69
    %1163 = vmatmul.f32.gmra.mxu0 %v329
    %v1164 = vpop.f32.mrf.mxu0
    %v1165 = vadd.f32 %v956, %v1164
    %1166 = vmatmul.f32.gmra.mxu0 %v332
    %v1167 = vpop.f32.mrf.mxu0
    %v1168 = vadd.f32 %v959, %v1167
    %1169 = vmatmul.f32.gmra.mxu0 %v335
    %v1170 = vpop.f32.mrf.mxu0
    %v1171 = vadd.f32 %v962, %v1170
    %1172 = vmatmul.f32.gmra.mxu0 %v338
    %v1173 = vpop.f32.mrf.mxu0
    %v1174 = vadd.f32 %v965, %v1173
    %1175 = vmatmul.f32.gmra.mxu0 %v341
    %v1176 = vpop.f32.mrf.mxu0
    %v1177 = vadd.f32 %v968, %v1176
    %1178 = vmatmul.f32.gmra.mxu0 %v344
    %v1179 = vpop.f32.mrf.mxu0
    %v1180 = vadd.f32 %v971, %v1179
    %1181 = vmatmul.f32.gmra.mxu0 %v347
    %v1182 = vpop.f32.mrf.mxu0
    %v1183 = vadd.f32 %v974, %v1182
    %1184 = vmatmul.f32.gmra.mxu0 %v350
    %v1185 = vpop.f32.mrf.mxu0
    %v1186 = vadd.f32 %v977, %v1185
    %1187 = vmatmul.f32.gmra.mxu0 %v353
    %v1188 = vpop.f32.mrf.mxu0
    %v1189 = vadd.f32 %v980, %v1188
    %1190 = vmatmul.f32.gmra.mxu0 %v356
    %v1191 = vpop.f32.mrf.mxu0
    %v1192 = vadd.f32 %v983, %v1191
    %1193 = vmatmul.f32.gmra.mxu0 %v359
    %v1194 = vpop.f32.mrf.mxu0
    %v1195 = vadd.f32 %v986, %v1194
    %1196 = vmatmul.f32.gmra.mxu0 %v362
    %v1197 = vpop.f32.mrf.mxu0
    %v1198 = vadd.f32 %v989, %v1197
    %1199 = vmatmul.f32.gmra.mxu0 %v365
    %v1200 = vpop.f32.mrf.mxu0
    %v1201 = vadd.f32 %v992, %v1200
    %1202 = vmatmul.f32.gmra.mxu0 %v368
    %v1203 = vpop.f32.mrf.mxu0
    %v1204 = vadd.f32 %v995, %v1203
    %1205 = vmatmul.f32.gmra.mxu0 %v371
    %v1206 = vpop.f32.mrf.mxu0
    %v1207 = vadd.f32 %v998, %v1206
    %1208 = vmatmul.f32.gmra.mxu0 %v374
    %v1209 = vpop.f32.mrf.mxu0
    %v1210 = vadd.f32 %v1001, %v1209
    %1211 = vmatmul.f32.gmra.mxu0 %v377
    %v1212 = vpop.f32.mrf.mxu0
    %v1213 = vadd.f32 %v1004, %v1212
    %1214 = vmatmul.f32.gmra.mxu0 %v380
    %v1215 = vpop.f32.mrf.mxu0
    %v1216 = vadd.f32 %v1007, %v1215
    %1217 = vmatmul.f32.gmra.mxu0 %v383
    %v1218 = vpop.f32.mrf.mxu0
    %v1219 = vadd.f32 %v1010, %v1218
    %1220 = vmatmul.f32.gmra.mxu0 %v386
    %v1221 = vpop.f32.mrf.mxu0
    %v1222 = vadd.f32 %v1013, %v1221
    %1223 = vmatmul.f32.gmra.mxu0 %v389
    %v1224 = vpop.f32.mrf.mxu0
    %v1225 = vadd.f32 %v1016, %v1224
    %1226 = vmatmul.f32.gmra.mxu0 %v392
    %v1227 = vpop.f32.mrf.mxu0
    %v1228 = vadd.f32 %v1019, %v1227
    %1229 = vmatmul.f32.gmra.mxu0 %v395
    %v1230 = vpop.f32.mrf.mxu0
    %v1231 = vadd.f32 %v1022, %v1230
    %1232 = vmatmul.f32.gmra.mxu0 %v398
    %v1233 = vpop.f32.mrf.mxu0
    %v1234 = vadd.f32 %v1025, %v1233
    %1235 = vmatmul.f32.gmra.mxu0 %v401
    %v1236 = vpop.f32.mrf.mxu0
    %v1237 = vadd.f32 %v1028, %v1236
    %1238 = vmatmul.f32.gmra.mxu0 %v404
    %v1239 = vpop.f32.mrf.mxu0
    %v1240 = vadd.f32 %v1031, %v1239
    %1241 = vmatmul.f32.gmra.mxu0 %v407
    %v1242 = vpop.f32.mrf.mxu0
    %v1243 = vadd.f32 %v1034, %v1242
    %1244 = vmatmul.f32.gmra.mxu0 %v410
    %v1245 = vpop.f32.mrf.mxu0
    %v1246 = vadd.f32 %v1037, %v1245
    %1247 = vmatmul.f32.gmra.mxu0 %v413
    %v1248 = vpop.f32.mrf.mxu0
    %v1249 = vadd.f32 %v1040, %v1248
    %1250 = vmatmul.f32.gmra.mxu0 %v416
    %v1251 = vpop.f32.mrf.mxu0
    %v1252 = vadd.f32 %v1043, %v1251
    %1253 = vmatmul.f32.gmra.mxu0 %v419
    %v1254 = vpop.f32.mrf.mxu0
    %v1255 = vadd.f32 %v1046, %v1254
    %1256 = vmatmul.f32.gmra.mxu0 %v422
    %v1257 = vpop.f32.mrf.mxu0
    %v1258 = vadd.f32 %v1049, %v1257
    %1259 = vmatmul.f32.gmra.mxu0 %v425
    %v1260 = vpop.f32.mrf.mxu0
    %v1261 = vadd.f32 %v1052, %v1260
    %1262 = vmatmul.f32.gmra.mxu0 %v428
    %v1263 = vpop.f32.mrf.mxu0
    %v1264 = vadd.f32 %v1055, %v1263
    %1265 = vmatmul.f32.gmra.mxu0 %v431
    %v1266 = vpop.f32.mrf.mxu0
    %v1267 = vadd.f32 %v1058, %v1266
    %1268 = vmatmul.f32.gmra.mxu0 %v434
    %v1269 = vpop.f32.mrf.mxu0
    %v1270 = vadd.f32 %v1061, %v1269
    %1271 = vmatmul.f32.gmra.mxu0 %v437
    %v1272 = vpop.f32.mrf.mxu0
    %v1273 = vadd.f32 %v1064, %v1272
    %1274 = vmatmul.f32.gmra.mxu0 %v440
    %v1275 = vpop.f32.mrf.mxu0
    %v1276 = vadd.f32 %v1067, %v1275
    %1277 = vmatmul.f32.gmra.mxu0 %v443
    %v1278 = vpop.f32.mrf.mxu0
    %v1279 = vadd.f32 %v1070, %v1278
    %1280 = vmatmul.f32.gmra.mxu0 %v446
    %v1281 = vpop.f32.mrf.mxu0
    %v1282 = vadd.f32 %v1073, %v1281
    %1283 = vmatmul.f32.gmra.mxu0 %v449
    %v1284 = vpop.f32.mrf.mxu0
    %v1285 = vadd.f32 %v1076, %v1284
    %1286 = vmatmul.f32.gmra.mxu0 %v452
    %v1287 = vpop.f32.mrf.mxu0
    %v1288 = vadd.f32 %v1079, %v1287
    %1289 = vmatmul.f32.gmra.mxu0 %v455
    %v1290 = vpop.f32.mrf.mxu0
    %v1291 = vadd.f32 %v1082, %v1290
    %1292 = vmatmul.f32.gmra.mxu0 %v458
    %v1293 = vpop.f32.mrf.mxu0
    %v1294 = vadd.f32 %v1085, %v1293
    %1295 = vmatmul.f32.gmra.mxu0 %v461
    %v1296 = vpop.f32.mrf.mxu0
    %v1297 = vadd.f32 %v1088, %v1296
    %1298 = vmatmul.f32.gmra.mxu0 %v464
    %v1299 = vpop.f32.mrf.mxu0
    %v1300 = vadd.f32 %v1091, %v1299
    %1301 = vmatmul.f32.gmra.mxu0 %v467
    %v1302 = vpop.f32.mrf.mxu0
    %v1303 = vadd.f32 %v1094, %v1302
    %1304 = vmatmul.f32.gmra.mxu0 %v470
    %v1305 = vpop.f32.mrf.mxu0
    %v1306 = vadd.f32 %v1097, %v1305
    %1307 = vmatmul.f32.gmra.mxu0 %v473
    %v1308 = vpop.f32.mrf.mxu0
    %v1309 = vadd.f32 %v1100, %v1308
    %1310 = vmatmul.f32.gmra.mxu0 %v476
    %v1311 = vpop.f32.mrf.mxu0
    %v1312 = vadd.f32 %v1103, %v1311
    %1313 = vmatmul.f32.gmra.mxu0 %v479
    %v1314 = vpop.f32.mrf.mxu0
    %v1315 = vadd.f32 %v1106, %v1314
    %1316 = vmatmul.f32.gmra.mxu0 %v482
    %v1317 = vpop.f32.mrf.mxu0
    %v1318 = vadd.f32 %v1109, %v1317
    %1319 = vmatmul.f32.gmra.mxu0 %v485
    %v1320 = vpop.f32.mrf.mxu0
    %v1321 = vadd.f32 %v1112, %v1320
    %1322 = vmatmul.f32.gmra.mxu0 %v488
    %v1323 = vpop.f32.mrf.mxu0
    %v1324 = vadd.f32 %v1115, %v1323
    %1325 = vmatmul.f32.gmra.mxu0 %v491
    %v1326 = vpop.f32.mrf.mxu0
    %v1327 = vadd.f32 %v1118, %v1326
    %1328 = vmatmul.f32.gmra.mxu0 %v494
    %v1329 = vpop.f32.mrf.mxu0
    %v1330 = vadd.f32 %v1121, %v1329
    %1331 = vmatmul.f32.gmra.mxu0 %v497
    %v1332 = vpop.f32.mrf.mxu0
    %v1333 = vadd.f32 %v1124, %v1332
    %1334 = vmatmul.f32.gmra.mxu0 %v500
    %v1335 = vpop.f32.mrf.mxu0
    %v1336 = vadd.f32 %v1127, %v1335
    %1337 = vmatmul.f32.gmra.mxu0 %v503
    %v1338 = vpop.f32.mrf.mxu0
    %v1339 = vadd.f32 %v1130, %v1338
    %1340 = vmatmul.f32.gmra.mxu0 %v506
    %v1341 = vpop.f32.mrf.mxu0
    %v1342 = vadd.f32 %v1133, %v1341
    %1343 = vmatmul.f32.gmra.mxu0 %v509
    %v1344 = vpop.f32.mrf.mxu0
    %v1345 = vadd.f32 %v1136, %v1344
    %1346 = vmatmul.f32.gmra.mxu0 %v512
    %v1347 = vpop.f32.mrf.mxu0
    %v1348 = vadd.f32 %v1139, %v1347
    %1349 = vmatmul.f32.gmra.mxu0 %v515
    %v1350 = vpop.f32.mrf.mxu0
    %v1351 = vadd.f32 %v1142, %v1350
    %1352 = vmatmul.f32.gmra.mxu0 %v518
    %v1353 = vpop.f32.mrf.mxu0
    %v1354 = vadd.f32 %v1145, %v1353
    %1355 = vdwg.mxu0
    %v1356 = vmul.f32 %v1165, %v1165
    %v1357 = vmul.f32 %v1168, %v1168
    %v1358 = vmul.f32 %v1171, %v1171
    %v1359 = vmul.f32 %v1174, %v1174
    %v1360 = vmul.f32 %v1177, %v1177
    %v1361 = vmul.f32 %v1180, %v1180
    %v1362 = vmul.f32 %v1183, %v1183
    %v1363 = vmul.f32 %v1186, %v1186
    %v1364 = vmul.f32 %v1189, %v1189
    %v1365 = vmul.f32 %v1192, %v1192
    %v1366 = vmul.f32 %v1195, %v1195
    %v1367 = vmul.f32 %v1198, %v1198
    %v1368 = vmul.f32 %v1201, %v1201
    %v1369 = vmul.f32 %v1204, %v1204
    %v1370 = vmul.f32 %v1207, %v1207
    %v1371 = vmul.f32 %v1210, %v1210
    %v1372 = vmul.f32 %v1213, %v1213
    %v1373 = vmul.f32 %v1216, %v1216
    %v1374 = vmul.f32 %v1219, %v1219
    %v1375 = vmul.f32 %v1222, %v1222
    %v1376 = vmul.f32 %v1225, %v1225
    %v1377 = vmul.f32 %v1228, %v1228
    %v1378 = vmul.f32 %v1231, %v1231
    %v1379 = vmul.f32 %v1234, %v1234
    %v1380 = vmul.f32 %v1237, %v1237
    %v1381 = vmul.f32 %v1240, %v1240
    %v1382 = vmul.f32 %v1243, %v1243
    %v1383 = vmul.f32 %v1246, %v1246
    %v1384 = vmul.f32 %v1249, %v1249
    %v1385 = vmul.f32 %v1252, %v1252
    %v1386 = vmul.f32 %v1255, %v1255
    %v1387 = vmul.f32 %v1258, %v1258
    %v1388 = vmul.f32 %v1261, %v1261
    %v1389 = vmul.f32 %v1264, %v1264
    %v1390 = vmul.f32 %v1267, %v1267
    %v1391 = vmul.f32 %v1270, %v1270
    %v1392 = vmul.f32 %v1273, %v1273
    %v1393 = vmul.f32 %v1276, %v1276
    %v1394 = vmul.f32 %v1279, %v1279
    %v1395 = vmul.f32 %v1282, %v1282
    %v1396 = vmul.f32 %v1285, %v1285
    %v1397 = vmul.f32 %v1288, %v1288
    %v1398 = vmul.f32 %v1291, %v1291
    %v1399 = vmul.f32 %v1294, %v1294
    %v1400 = vmul.f32 %v1297, %v1297
    %v1401 = vmul.f32 %v1300, %v1300
    %v1402 = vmul.f32 %v1303, %v1303
    %v1403 = vmul.f32 %v1306, %v1306
    %v1404 = vmul.f32 %v1309, %v1309
    %v1405 = vmul.f32 %v1312, %v1312
    %v1406 = vmul.f32 %v1315, %v1315
    %v1407 = vmul.f32 %v1318, %v1318
    %v1408 = vmul.f32 %v1321, %v1321
    %v1409 = vmul.f32 %v1324, %v1324
    %v1410 = vmul.f32 %v1327, %v1327
    %v1411 = vmul.f32 %v1330, %v1330
    %v1412 = vmul.f32 %v1333, %v1333
    %v1413 = vmul.f32 %v1336, %v1336
    %v1414 = vmul.f32 %v1339, %v1339
    %v1415 = vmul.f32 %v1342, %v1342
    %v1416 = vmul.f32 %v1345, %v1345
    %v1417 = vmul.f32 %v1348, %v1348
    %v1418 = vmul.f32 %v1351, %v1351
    %v1419 = vmul.f32 %v1354, %v1354
    %v1420 = vld [vmem:[%s2] sm:$0xff]
    %v1421 = vld [vmem:[%s2 + $0x8] sm:$0xff]
    %v1422 = vld [vmem:[%s2 + $0x10] sm:$0xff]
    %v1423 = vld [vmem:[%s2 + $0x18] sm:$0xff]
    %v1424 = vld [vmem:[%s2 + $0x20] sm:$0xff]
    %v1425 = vld [vmem:[%s2 + $0x28] sm:$0xff]
    %v1426 = vld [vmem:[%s2 + $0x30] sm:$0xff]
    %v1427 = vld [vmem:[%s2 + $0x38] sm:$0xff]
    %v1428 = vld [vmem:[%s2 + $0x40] sm:$0xff]
    %v1429 = vld [vmem:[%s2 + $0x48] sm:$0xff]
    %v1430 = vld [vmem:[%s2 + $0x50] sm:$0xff]
    %v1431 = vld [vmem:[%s2 + $0x58] sm:$0xff]
    %1432 = vmatpush.msra.mxu0 %v1371
    %1433 = vmatpush.msra.mxu0 %v1370
    %1434 = vmatpush.msra.mxu0 %v1369
    %1435 = vmatpush.msra.mxu0 %v1368
    %1436 = vmatpush.msra.mxu0 %v1367
    %1437 = vmatpush.msra.mxu0 %v1366
    %1438 = vmatpush.msra.mxu0 %v1365
    %1439 = vmatpush.msra.mxu0 %v1364
    %1440 = vmatpush.msra.mxu0 %v1363
    %1441 = vmatpush.msra.mxu0 %v1362
    %1442 = vmatpush.msra.mxu0 %v1361
    %1443 = vmatpush.msra.mxu0 %v1360
    %1444 = vmatpush.msra.mxu0 %v1359
    %1445 = vmatpush.msra.mxu0 %v1358
    %1446 = vmatpush.msra.mxu0 %v1357
    %1447 = vmatpush.msra.mxu0 %v1356
    %1448 = vmatmul.f32.gmra.mxu0 %v1420
    %v1449 = vpop.f32.mrf.mxu0
    %v1450 = vadd.f32 0.0, %v1449
    %1451 = vmatmul.f32.gmra.mxu0 %v1424
    %v1452 = vpop.f32.mrf.mxu0
    %v1453 = vadd.f32 0.0, %v1452
    %1454 = vmatmul.f32.gmra.mxu0 %v1428
    %v1455 = vpop.f32.mrf.mxu0
    %v1456 = vadd.f32 0.0, %v1455
    %1457 = vdwg.mxu0
    %1458 = vmatpush.msra.mxu0 %v1387
    %1459 = vmatpush.msra.mxu0 %v1386
    %1460 = vmatpush.msra.mxu0 %v1385
    %1461 = vmatpush.msra.mxu0 %v1384
    %1462 = vmatpush.msra.mxu0 %v1383
    %1463 = vmatpush.msra.mxu0 %v1382
    %1464 = vmatpush.msra.mxu0 %v1381
    %1465 = vmatpush.msra.mxu0 %v1380
    %1466 = vmatpush.msra.mxu0 %v1379
    %1467 = vmatpush.msra.mxu0 %v1378
    %1468 = vmatpush.msra.mxu0 %v1377
    %1469 = vmatpush.msra.mxu0 %v1376
    %1470 = vmatpush.msra.mxu0 %v1375
    %1471 = vmatpush.msra.mxu0 %v1374
    %1472 = vmatpush.msra.mxu0 %v1373
    %1473 = vmatpush.msra.mxu0 %v1372
    %1474 = vmatmul.f32.gmra.mxu0 %v1421
    %v1475 = vpop.f32.mrf.mxu0
    %v1476 = vadd.f32 %v1450, %v1475
    %1477 = vmatmul.f32.gmra.mxu0 %v1425
    %v1478 = vpop.f32.mrf.mxu0
    %v1479 = vadd.f32 %v1453, %v1478
    %1480 = vmatmul.f32.gmra.mxu0 %v1429
    %v1481 = vpop.f32.mrf.mxu0
    %v1482 = vadd.f32 %v1456, %v1481
    %1483 = vdwg.mxu0
    %1484 = vmatpush.msra.mxu0 %v1403
    %1485 = vmatpush.msra.mxu0 %v1402
    %1486 = vmatpush.msra.mxu0 %v1401
    %1487 = vmatpush.msra.mxu0 %v1400
    %1488 = vmatpush.msra.mxu0 %v1399
    %1489 = vmatpush.msra.mxu0 %v1398
    %1490 = vmatpush.msra.mxu0 %v1397
    %1491 = vmatpush.msra.mxu0 %v1396
    %1492 = vmatpush.msra.mxu0 %v1395
    %1493 = vmatpush.msra.mxu0 %v1394
    %1494 = vmatpush.msra.mxu0 %v1393
    %1495 = vmatpush.msra.mxu0 %v1392
    %1496 = vmatpush.msra.mxu0 %v1391
    %1497 = vmatpush.msra.mxu0 %v1390
    %1498 = vmatpush.msra.mxu0 %v1389
    %1499 = vmatpush.msra.mxu0 %v1388
    %1500 = vmatmul.f32.gmra.mxu0 %v1422
    %v1501 = vpop.f32.mrf.mxu0
    %v1502 = vadd.f32 %v1476, %v1501
    %1503 = vmatmul.f32.gmra.mxu0 %v1426
    %v1504 = vpop.f32.mrf.mxu0
    %v1505 = vadd.f32 %v1479, %v1504
    %1506 = vmatmul.f32.gmra.mxu0 %v1430
    %v1507 = vpop.f32.mrf.mxu0
    %v1508 = vadd.f32 %v1482, %v1507
    %1509 = vdwg.mxu0
    %1510 = vmatpush.msra.mxu0 %v1419
    %1511 = vmatpush.msra.mxu0 %v1418
    %1512 = vmatpush.msra.mxu0 %v1417
    %1513 = vmatpush.msra.mxu0 %v1416
    %1514 = vmatpush.msra.mxu0 %v1415
    %1515 = vmatpush.msra.mxu0 %v1414
    %1516 = vmatpush.msra.mxu0 %v1413
    %1517 = vmatpush.msra.mxu0 %v1412
    %1518 = vmatpush.msra.mxu0 %v1411
    %1519 = vmatpush.msra.mxu0 %v1410
    %1520 = vmatpush.msra.mxu0 %v1409
    %1521 = vmatpush.msra.mxu0 %v1408
    %1522 = vmatpush.msra.mxu0 %v1407
    %1523 = vmatpush.msra.mxu0 %v1406
    %1524 = vmatpush.msra.mxu0 %v1405
    %1525 = vmatpush.msra.mxu0 %v1404
    %1526 = vmatmul.f32.gmra.mxu0 %v1423
    %v1527 = vpop.f32.mrf.mxu0
    %v1528 = vadd.f32 %v1502, %v1527
    %1529 = vmatmul.f32.gmra.mxu0 %v1427
    %v1530 = vpop.f32.mrf.mxu0
    %v1531 = vadd.f32 %v1505, %v1530
    %1532 = vmatmul.f32.gmra.mxu0 %v1431
    %v1533 = vpop.f32.mrf.mxu0
    %v1534 = vadd.f32 %v1508, %v1533
    %1535 = vdwg.mxu0
    %v1536 = vsub.f32 0.0, %v1528
    %v1537 = vadd.f32 %v1528, 1e-10
    %v1538 = vrcp.pop %v1537
    %v1540 = vrot.slane %v1538, 7
    %v1542 = vmul.f32 %v1536, %v1540
    %v1543 = vmul.f32 %v1542, %v1542
    %v1544 = vsub.f32 1.0, %v1543
    %v1546 = vrot.slane %v1544, 1
    %v1548 = vmul.f32 %v1528, %v1546
    %v1549 = vmul.f32 %v1542, %v1528
    %v1551 = vrot.slane %v1549, 7
    %v1553 = vadd.f32 %v1528, %v1551
    %v1554 = vsub.f32 0.0, %v1553
    %v1555 = vadd.f32 %v1548, 1e-10
    %v1556 = vrcp.pop %v1555
    %v1558 = vrot.slane %v1556, 6
    %v1560 = vmul.f32 %v1554, %v1558
    %v1562 = vrot.slane %v1542, 7
    %v1564 = vmul.f32 %v1560, %v1562
    %v1566 = vrot.slane %v1564, 1
    %v1568 = vadd.f32 %v1542, %v1566
    %v1569 = vmul.f32 %v1560, %v1560
    %v1570 = vsub.f32 1.0, %v1569
    %v1572 = vrot.slane %v1570, 2
    %v1574 = vmul.f32 %v1548, %v1572
    %v1576 = vrot.slane %v1528, 1
    %v1578 = vmul.f32 %v1568, %v1576
    %v1580 = vrot.slane %v1578, 6
    %v1582 = vadd.f32 %v1528, %v1580
    %v1583 = vrot.slane %v1528, 7
    %v1585 = vmul.f32 %v1560, %v1583
    %v1587 = vrot.slane %v1585, 7
    %v1589 = vadd.f32 %v1582, %v1587
    %v1590 = vsub.f32 0.0, %v1589
    %v1591 = vadd.f32 %v1574, 1e-10
    %v1592 = vrcp.pop %v1591
    %v1594 = vrot.slane %v1592, 5
    %v1596 = vmul.f32 %v1590, %v1594
    %v1598 = vrot.slane %v1560, 7
    %v1600 = vmul.f32 %v1596, %v1598
    %v1602 = vrot.slane %v1600, 2
    %v1604 = vadd.f32 %v1568, %v1602
    %v1606 = vrot.slane %v1568, 6
    %v1608 = vmul.f32 %v1596, %v1606
    %v1610 = vrot.slane %v1608, 1
    %v1612 = vadd.f32 %v1560, %v1610
    %v1613 = vmul.f32 %v1596, %v1596
    %v1614 = vsub.f32 1.0, %v1613
    %v1616 = vrot.slane %v1614, 3
    %v1618 = vmul.f32 %v1574, %v1616
    %v1619 = vrot.slane %v1528, 2
    %v1621 = vmul.f32 %v1604, %v1619
    %v1623 = vrot.slane %v1621, 5
    %v1625 = vadd.f32 %v1528, %v1623
    %v1626 = vmul.f32 %v1612, %v1528
    %v1628 = vrot.slane %v1626, 6
    %v1630 = vadd.f32 %v1625, %v1628
    %v1631 = vrot.slane %v1528, 6
    %v1633 = vmul.f32 %v1596, %v1631
    %v1635 = vrot.slane %v1633, 7
    %v1637 = vadd.f32 %v1630, %v1635
    %v1638 = vsub.f32 0.0, %v1637
    %v1639 = vadd.f32 %v1618, 1e-10
    %v1640 = vrcp.pop %v1639
    %v1642 = vrot.slane %v1640, 4
    %v1644 = vmul.f32 %v1638, %v1642
    %v1646 = vrot.slane %v1596, 7
    %v1648 = vmul.f32 %v1644, %v1646
    %v1650 = vrot.slane %v1648, 3
    %v1652 = vadd.f32 %v1604, %v1650
    %v1654 = vrot.slane %v1612, 6
    %v1656 = vmul.f32 %v1644, %v1654
    %v1658 = vrot.slane %v1656, 2
    %v1660 = vadd.f32 %v1612, %v1658
    %v1662 = vrot.slane %v1604, 5
    %v1664 = vmul.f32 %v1644, %v1662
    %v1666 = vrot.slane %v1664, 1
    %v1668 = vadd.f32 %v1596, %v1666
    %v1669 = vmul.f32 %v1644, %v1644
    %v1670 = vsub.f32 1.0, %v1669
    %v1672 = vrot.slane %v1670, 4
    %v1674 = vmul.f32 %v1618, %v1672
    %v1675 = vrot.slane %v1528, 3
    %v1677 = vmul.f32 %v1652, %v1675
    %v1679 = vrot.slane %v1677, 4
    %v1681 = vadd.f32 %v1528, %v1679
    %v1682 = vmul.f32 %v1660, %v1576
    %v1684 = vrot.slane %v1682, 5
    %v1686 = vadd.f32 %v1681, %v1684
    %v1687 = vmul.f32 %v1668, %v1583
    %v1689 = vrot.slane %v1687, 6
    %v1691 = vadd.f32 %v1686, %v1689
    %v1692 = vrot.slane %v1528, 5
    %v1694 = vmul.f32 %v1644, %v1692
    %v1696 = vrot.slane %v1694, 7
    %v1698 = vadd.f32 %v1691, %v1696
    %v1699 = vsub.f32 0.0, %v1698
    %v1700 = vadd.f32 %v1674, 1e-10
    %v1701 = vrcp.pop %v1700
    %v1703 = vrot.slane %v1701, 3
    %v1705 = vmul.f32 %v1699, %v1703
    %v1707 = vrot.slane %v1644, 7
    %v1709 = vmul.f32 %v1705, %v1707
    %v1711 = vrot.slane %v1709, 4
    %v1713 = vadd.f32 %v1652, %v1711
    %v1715 = vrot.slane %v1668, 6
    %v1717 = vmul.f32 %v1705, %v1715
    %v1719 = vrot.slane %v1717, 3
    %v1721 = vadd.f32 %v1660, %v1719
    %v1723 = vrot.slane %v1660, 5
    %v1725 = vmul.f32 %v1705, %v1723
    %v1727 = vrot.slane %v1725, 2
    %v1729 = vadd.f32 %v1668, %v1727
    %v1731 = vrot.slane %v1652, 4
    %v1733 = vmul.f32 %v1705, %v1731
    %v1735 = vrot.slane %v1733, 1
    %v1737 = vadd.f32 %v1644, %v1735
    %v1738 = vmul.f32 %v1705, %v1705
    %v1739 = vsub.f32 1.0, %v1738
    %v1741 = vrot.slane %v1739, 5
    %v1743 = vmul.f32 %v1674, %v1741
    %v1744 = vrot.slane %v1528, 4
    %v1746 = vmul.f32 %v1713, %v1744
    %v1748 = vrot.slane %v1746, 3
    %v1750 = vadd.f32 %v1528, %v1748
    %v1751 = vmul.f32 %v1721, %v1619
    %v1753 = vrot.slane %v1751, 4
    %v1755 = vadd.f32 %v1750, %v1753
    %v1756 = vmul.f32 %v1729, %v1528
    %v1758 = vrot.slane %v1756, 5
    %v1760 = vadd.f32 %v1755, %v1758
    %v1761 = vmul.f32 %v1737, %v1631
    %v1763 = vrot.slane %v1761, 6
    %v1765 = vadd.f32 %v1760, %v1763
    %v1766 = vmul.f32 %v1705, %v1744
    %v1768 = vrot.slane %v1766, 7
    %v1770 = vadd.f32 %v1765, %v1768
    %v1771 = vsub.f32 0.0, %v1770
    %v1772 = vadd.f32 %v1743, 1e-10
    %v1773 = vrcp.pop %v1772
    %v1775 = vrot.slane %v1773, 2
    %v1777 = vmul.f32 %v1771, %v1775
    %v1779 = vrot.slane %v1705, 7
    %v1781 = vmul.f32 %v1777, %v1779
    %v1783 = vrot.slane %v1781, 5
    %v1785 = vadd.f32 %v1713, %v1783
    %v1787 = vrot.slane %v1737, 6
    %v1789 = vmul.f32 %v1777, %v1787
    %v1791 = vrot.slane %v1789, 4
    %v1793 = vadd.f32 %v1721, %v1791
    %v1795 = vrot.slane %v1729, 5
    %v1797 = vmul.f32 %v1777, %v1795
    %v1799 = vrot.slane %v1797, 3
    %v1801 = vadd.f32 %v1729, %v1799
    %v1803 = vrot.slane %v1721, 4
    %v1805 = vmul.f32 %v1777, %v1803
    %v1807 = vrot.slane %v1805, 2
    %v1809 = vadd.f32 %v1737, %v1807
    %v1811 = vrot.slane %v1713, 3
    %v1813 = vmul.f32 %v1777, %v1811
    %v1815 = vrot.slane %v1813, 1
    %v1817 = vadd.f32 %v1705, %v1815
    %v1818 = vmul.f32 %v1777, %v1777
    %v1819 = vsub.f32 1.0, %v1818
    %v1821 = vrot.slane %v1819, 6
    %v1823 = vmul.f32 %v1743, %v1821
    %v1824 = vmul.f32 %v1785, %v1692
    %v1826 = vrot.slane %v1824, 2
    %v1828 = vadd.f32 %v1528, %v1826
    %v1829 = vmul.f32 %v1793, %v1675
    %v1831 = vrot.slane %v1829, 3
    %v1833 = vadd.f32 %v1828, %v1831
    %v1834 = vmul.f32 %v1801, %v1576
    %v1836 = vrot.slane %v1834, 4
    %v1838 = vadd.f32 %v1833, %v1836
    %v1839 = vmul.f32 %v1809, %v1583
    %v1841 = vrot.slane %v1839, 5
    %v1843 = vadd.f32 %v1838, %v1841
    %v1844 = vmul.f32 %v1817, %v1692
    %v1846 = vrot.slane %v1844, 6
    %v1848 = vadd.f32 %v1843, %v1846
    %v1849 = vmul.f32 %v1777, %v1675
    %v1851 = vrot.slane %v1849, 7
    %v1853 = vadd.f32 %v1848, %v1851
    %v1854 = vsub.f32 0.0, %v1853
    %v1855 = vadd.f32 %v1823, 1e-10
    %v1856 = vrcp.pop %v1855
    %v1858 = vrot.slane %v1856, 1
    %v1860 = vmul.f32 %v1854, %v1858
    %v1862 = vrot.slane %v1777, 7
    %v1864 = vmul.f32 %v1860, %v1862
    %v1866 = vrot.slane %v1864, 6
    %v1868 = vadd.f32 %v1785, %v1866
    %v1870 = vrot.slane %v1817, 6
    %v1872 = vmul.f32 %v1860, %v1870
    %v1874 = vrot.slane %v1872, 5
    %v1876 = vadd.f32 %v1793, %v1874
    %v1878 = vrot.slane %v1809, 5
    %v1880 = vmul.f32 %v1860, %v1878
    %v1882 = vrot.slane %v1880, 4
    %v1884 = vadd.f32 %v1801, %v1882
    %v1886 = vrot.slane %v1801, 4
    %v1888 = vmul.f32 %v1860, %v1886
    %v1890 = vrot.slane %v1888, 3
    %v1892 = vadd.f32 %v1809, %v1890
    %v1894 = vrot.slane %v1793, 3
    %v1896 = vmul.f32 %v1860, %v1894
    %v1898 = vrot.slane %v1896, 2
    %v1900 = vadd.f32 %v1817, %v1898
    %v1902 = vrot.slane %v1785, 2
    %v1904 = vmul.f32 %v1860, %v1902
    %v1906 = vrot.slane %v1904, 1
    %v1908 = vadd.f32 %v1777, %v1906
    %v1909 = vmul.f32 %v1860, %v1860
    %v1910 = vsub.f32 1.0, %v1909
    %v1912 = vrot.slane %v1910, 7
    %v1914 = vmul.f32 %v1823, %v1912
    %v1915 = vmul.f32 %v1868, %v1631
    %v1917 = vrot.slane %v1915, 1
    %v1919 = vadd.f32 %v1531, %v1917
    %v1920 = vmul.f32 %v1876, %v1744
    %v1922 = vrot.slane %v1920, 2
    %v1924 = vadd.f32 %v1919, %v1922
    %v1925 = vmul.f32 %v1884, %v1619
    %v1927 = vrot.slane %v1925, 3
    %v1929 = vadd.f32 %v1924, %v1927
    %v1930 = vmul.f32 %v1892, %v1528
    %v1932 = vrot.slane %v1930, 4
    %v1934 = vadd.f32 %v1929, %v1932
    %v1935 = vmul.f32 %v1900, %v1631
    %v1937 = vrot.slane %v1935, 5
    %v1939 = vadd.f32 %v1934, %v1937
    %v1940 = vmul.f32 %v1908, %v1744
    %v1942 = vrot.slane %v1940, 6
    %v1944 = vadd.f32 %v1939, %v1942
    %v1945 = vmul.f32 %v1860, %v1619
    %v1947 = vrot.slane %v1945, 7
    %v1949 = vadd.f32 %v1944, %v1947
    %v1950 = vsub.f32 0.0, %v1949
    %v1951 = vadd.f32 %v1914, 1e-10
    %v1952 = vrcp.pop %v1951
    %v1953 = vmul.f32 %v1950, %v1952
    %v1955 = vrot.slane %v1860, 7
    %v1957 = vmul.f32 %v1953, %v1955
    %v1959 = vrot.slane %v1957, 7
    %v1961 = vadd.f32 %v1868, %v1959
    %v1963 = vrot.slane %v1908, 6
    %v1965 = vmul.f32 %v1953, %v1963
    %v1967 = vrot.slane %v1965, 6
    %v1969 = vadd.f32 %v1876, %v1967
    %v1971 = vrot.slane %v1900, 5
    %v1973 = vmul.f32 %v1953, %v1971
    %v1975 = vrot.slane %v1973, 5
    %v1977 = vadd.f32 %v1884, %v1975
    %v1979 = vrot.slane %v1892, 4
    %v1981 = vmul.f32 %v1953, %v1979
    %v1983 = vrot.slane %v1981, 4
    %v1985 = vadd.f32 %v1892, %v1983
    %v1987 = vrot.slane %v1884, 3
    %v1989 = vmul.f32 %v1953, %v1987
    %v1991 = vrot.slane %v1989, 3
    %v1993 = vadd.f32 %v1900, %v1991
    %v1995 = vrot.slane %v1876, 2
    %v1997 = vmul.f32 %v1953, %v1995
    %v1999 = vrot.slane %v1997, 2
    %v2001 = vadd.f32 %v1908, %v1999
    %v2003 = vrot.slane %v1868, 1
    %v2005 = vmul.f32 %v1953, %v2003
    %v2007 = vrot.slane %v2005, 1
    %v2009 = vadd.f32 %v1860, %v2007
    %v2010 = vmul.f32 %v1953, %v1953
    %v2011 = vsub.f32 1.0, %v2010
    %v2012 = vmul.f32 %v1914, %v2011
    %v2014 = vrot.slane %v1531, 7
    %v2016 = vmul.f32 %v1961, %v2014
    %v2017 = vadd.f32 %v1531, %v2016
    %v2018 = vmul.f32 %v1969, %v1692
    %v2020 = vrot.slane %v2018, 1
    %v2022 = vadd.f32 %v2017, %v2020
    %v2023 = vmul.f32 %v1977, %v1675
    %v2025 = vrot.slane %v2023, 2
    %v2027 = vadd.f32 %v2022, %v2025
    %v2028 = vmul.f32 %v1985, %v1576
    %v2030 = vrot.slane %v2028, 3
    %v2032 = vadd.f32 %v2027, %v2030
    %v2033 = vmul.f32 %v1993, %v1583
    %v2035 = vrot.slane %v2033, 4
    %v2037 = vadd.f32 %v2032, %v2035
    %v2038 = vmul.f32 %v2001, %v1692
    %v2040 = vrot.slane %v2038, 5
    %v2042 = vadd.f32 %v2037, %v2040
    %v2043 = vmul.f32 %v2009, %v1675
    %v2045 = vrot.slane %v2043, 6
    %v2047 = vadd.f32 %v2042, %v2045
    %v2048 = vmul.f32 %v1953, %v1576
    %v2050 = vrot.slane %v2048, 7
    %v2052 = vadd.f32 %v2047, %v2050
    %v2053 = vsub.f32 0.0, %v2052
    %v2054 = vadd.f32 %v2012, 1e-10
    %v2055 = vrcp.pop %v2054
    %v2057 = vrot.slane %v2055, 7
    %v2059 = vmul.f32 %v2053, %v2057
    %v2061 = vrot.slane %v1953, 7
    %v2063 = vmul.f32 %v2059, %v2061
    %v2064 = vadd.f32 %v1961, %v2063
    %v2066 = vrot.slane %v2009, 6
    %v2068 = vmul.f32 %v2059, %v2066
    %v2070 = vrot.slane %v2068, 7
    %v2072 = vadd.f32 %v1969, %v2070
    %v2074 = vrot.slane %v2001, 5
    %v2076 = vmul.f32 %v2059, %v2074
    %v2078 = vrot.slane %v2076, 6
    %v2080 = vadd.f32 %v1977, %v2078
    %v2082 = vrot.slane %v1993, 4
    %v2084 = vmul.f32 %v2059, %v2082
    %v2086 = vrot.slane %v2084, 5
    %v2088 = vadd.f32 %v1985, %v2086
    %v2090 = vrot.slane %v1985, 3
    %v2092 = vmul.f32 %v2059, %v2090
    %v2094 = vrot.slane %v2092, 4
    %v2096 = vadd.f32 %v1993, %v2094
    %v2098 = vrot.slane %v1977, 2
    %v2100 = vmul.f32 %v2059, %v2098
    %v2102 = vrot.slane %v2100, 3
    %v2104 = vadd.f32 %v2001, %v2102
    %v2106 = vrot.slane %v1969, 1
    %v2108 = vmul.f32 %v2059, %v2106
    %v2110 = vrot.slane %v2108, 2
    %v2112 = vadd.f32 %v2009, %v2110
    %v2113 = vmul.f32 %v2059, %v1961
    %v2115 = vrot.slane %v2113, 1
    %v2117 = vadd.f32 %v1953, %v2115
    %v2118 = vmul.f32 %v2059, %v2059
    %v2119 = vsub.f32 1.0, %v2118
    %v2121 = vrot.slane %v2119, 1
    %v2123 = vmul.f32 %v2012, %v2121
    %v2124 = vmul.f32 %v2064, %v1531
    %v2126 = vrot.slane %v2124, 7
    %v2128 = vadd.f32 %v1531, %v2126
    %v2129 = vrot.slane %v1531, 6
    %v2131 = vmul.f32 %v2072, %v2129
    %v2132 = vadd.f32 %v2128, %v2131
    %v2133 = vmul.f32 %v2080, %v1744
    %v2135 = vrot.slane %v2133, 1
    %v2137 = vadd.f32 %v2132, %v2135
    %v2138 = vmul.f32 %v2088, %v1619
    %v2140 = vrot.slane %v2138, 2
    %v2142 = vadd.f32 %v2137, %v2140
    %v2143 = vmul.f32 %v2096, %v1528
    %v2145 = vrot.slane %v2143, 3
    %v2147 = vadd.f32 %v2142, %v2145
    %v2148 = vmul.f32 %v2104, %v1631
    %v2150 = vrot.slane %v2148, 4
    %v2152 = vadd.f32 %v2147, %v2150
    %v2153 = vmul.f32 %v2112, %v1744
    %v2155 = vrot.slane %v2153, 5
    %v2157 = vadd.f32 %v2152, %v2155
    %v2158 = vmul.f32 %v2117, %v1619
    %v2160 = vrot.slane %v2158, 6
    %v2162 = vadd.f32 %v2157, %v2160
    %v2163 = vmul.f32 %v2059, %v1528
    %v2165 = vrot.slane %v2163, 7
    %v2167 = vadd.f32 %v2162, %v2165
    %v2168 = vsub.f32 0.0, %v2167
    %v2169 = vadd.f32 %v2123, 1e-10
    %v2170 = vrcp.pop %v2169
    %v2172 = vrot.slane %v2170, 6
    %v2174 = vmul.f32 %v2168, %v2172
    %v2176 = vrot.slane %v2059, 7
    %v2178 = vmul.f32 %v2174, %v2176
    %v2180 = vrot.slane %v2178, 1
    %v2182 = vadd.f32 %v2064, %v2180
    %v2184 = vrot.slane %v2117, 6
    %v2186 = vmul.f32 %v2174, %v2184
    %v2187 = vadd.f32 %v2072, %v2186
    %v2189 = vrot.slane %v2112, 5
    %v2191 = vmul.f32 %v2174, %v2189
    %v2193 = vrot.slane %v2191, 7
    %v2195 = vadd.f32 %v2080, %v2193
    %v2197 = vrot.slane %v2104, 4
    %v2199 = vmul.f32 %v2174, %v2197
    %v2201 = vrot.slane %v2199, 6
    %v2203 = vadd.f32 %v2088, %v2201
    %v2205 = vrot.slane %v2096, 3
    %v2207 = vmul.f32 %v2174, %v2205
    %v2209 = vrot.slane %v2207, 5
    %v2211 = vadd.f32 %v2096, %v2209
    %v2213 = vrot.slane %v2088, 2
    %v2215 = vmul.f32 %v2174, %v2213
    %v2217 = vrot.slane %v2215, 4
    %v2219 = vadd.f32 %v2104, %v2217
    %v2221 = vrot.slane %v2080, 1
    %v2223 = vmul.f32 %v2174, %v2221
    %v2225 = vrot.slane %v2223, 3
    %v2227 = vadd.f32 %v2112, %v2225
    %v2228 = vmul.f32 %v2174, %v2072
    %v2230 = vrot.slane %v2228, 2
    %v2232 = vadd.f32 %v2117, %v2230
    %v2234 = vrot.slane %v2064, 7
    %v2236 = vmul.f32 %v2174, %v2234
    %v2238 = vrot.slane %v2236, 1
    %v2240 = vadd.f32 %v2059, %v2238
    %v2241 = vmul.f32 %v2174, %v2174
    %v2242 = vsub.f32 1.0, %v2241
    %v2244 = vrot.slane %v2242, 2
    %v2246 = vmul.f32 %v2123, %v2244
    %v2247 = vrot.slane %v1531, 1
    %v2249 = vmul.f32 %v2182, %v2247
    %v2251 = vrot.slane %v2249, 6
    %v2253 = vadd.f32 %v1531, %v2251
    %v2254 = vmul.f32 %v2187, %v2014
    %v2256 = vrot.slane %v2254, 7
    %v2258 = vadd.f32 %v2253, %v2256
    %v2259 = vrot.slane %v1531, 5
    %v2261 = vmul.f32 %v2195, %v2259
    %v2262 = vadd.f32 %v2258, %v2261
    %v2263 = vmul.f32 %v2203, %v1675
    %v2265 = vrot.slane %v2263, 1
    %v2267 = vadd.f32 %v2262, %v2265
    %v2268 = vmul.f32 %v2211, %v1576
    %v2270 = vrot.slane %v2268, 2
    %v2272 = vadd.f32 %v2267, %v2270
    %v2273 = vmul.f32 %v2219, %v1583
    %v2275 = vrot.slane %v2273, 3
    %v2277 = vadd.f32 %v2272, %v2275
    %v2278 = vmul.f32 %v2227, %v1692
    %v2280 = vrot.slane %v2278, 4
    %v2282 = vadd.f32 %v2277, %v2280
    %v2283 = vmul.f32 %v2232, %v1675
    %v2285 = vrot.slane %v2283, 5
    %v2287 = vadd.f32 %v2282, %v2285
    %v2288 = vmul.f32 %v2240, %v1576
    %v2290 = vrot.slane %v2288, 6
    %v2292 = vadd.f32 %v2287, %v2290
    %v2293 = vmul.f32 %v2174, %v1583
    %v2295 = vrot.slane %v2293, 7
    %v2297 = vadd.f32 %v2292, %v2295
    %v2298 = vsub.f32 0.0, %v2297
    %v2299 = vadd.f32 %v2246, 1e-10
    %v2300 = vrcp.pop %v2299
    %v2302 = vrot.slane %v2300, 5
    %v2304 = vmul.f32 %v2298, %v2302
    %v2306 = vrot.slane %v2174, 7
    %v2308 = vmul.f32 %v2304, %v2306
    %v2310 = vrot.slane %v2308, 2
    %v2312 = vadd.f32 %v2182, %v2310
    %v2314 = vrot.slane %v2240, 6
    %v2316 = vmul.f32 %v2304, %v2314
    %v2318 = vrot.slane %v2316, 1
    %v2320 = vadd.f32 %v2187, %v2318
    %v2322 = vrot.slane %v2232, 5
    %v2324 = vmul.f32 %v2304, %v2322
    %v2325 = vadd.f32 %v2195, %v2324
    %v2327 = vrot.slane %v2227, 4
    %v2329 = vmul.f32 %v2304, %v2327
    %v2331 = vrot.slane %v2329, 7
    %v2333 = vadd.f32 %v2203, %v2331
    %v2335 = vrot.slane %v2219, 3
    %v2337 = vmul.f32 %v2304, %v2335
    %v2339 = vrot.slane %v2337, 6
    %v2341 = vadd.f32 %v2211, %v2339
    %v2343 = vrot.slane %v2211, 2
    %v2345 = vmul.f32 %v2304, %v2343
    %v2347 = vrot.slane %v2345, 5
    %v2349 = vadd.f32 %v2219, %v2347
    %v2351 = vrot.slane %v2203, 1
    %v2353 = vmul.f32 %v2304, %v2351
    %v2355 = vrot.slane %v2353, 4
    %v2357 = vadd.f32 %v2227, %v2355
    %v2358 = vmul.f32 %v2304, %v2195
    %v2360 = vrot.slane %v2358, 3
    %v2362 = vadd.f32 %v2232, %v2360
    %v2364 = vrot.slane %v2187, 7
    %v2366 = vmul.f32 %v2304, %v2364
    %v2368 = vrot.slane %v2366, 2
    %v2370 = vadd.f32 %v2240, %v2368
    %v2372 = vrot.slane %v2182, 6
    %v2374 = vmul.f32 %v2304, %v2372
    %v2376 = vrot.slane %v2374, 1
    %v2378 = vadd.f32 %v2174, %v2376
    %v2379 = vmul.f32 %v2304, %v2304
    %v2380 = vsub.f32 1.0, %v2379
    %v2382 = vrot.slane %v2380, 3
    %v2384 = vmul.f32 %v2246, %v2382
    %v2385 = vrot.slane %v1531, 2
    %v2387 = vmul.f32 %v2312, %v2385
    %v2389 = vrot.slane %v2387, 5
    %v2391 = vadd.f32 %v1531, %v2389
    %v2392 = vmul.f32 %v2320, %v1531
    %v2394 = vrot.slane %v2392, 6
    %v2396 = vadd.f32 %v2391, %v2394
    %v2397 = vmul.f32 %v2325, %v2129
    %v2399 = vrot.slane %v2397, 7
    %v2401 = vadd.f32 %v2396, %v2399
    %v2402 = vrot.slane %v1531, 4
    %v2404 = vmul.f32 %v2333, %v2402
    %v2405 = vadd.f32 %v2401, %v2404
    %v2406 = vmul.f32 %v2341, %v1619
    %v2408 = vrot.slane %v2406, 1
    %v2410 = vadd.f32 %v2405, %v2408
    %v2411 = vmul.f32 %v2349, %v1528
    %v2413 = vrot.slane %v2411, 2
    %v2415 = vadd.f32 %v2410, %v2413
    %v2416 = vmul.f32 %v2357, %v1631
    %v2418 = vrot.slane %v2416, 3
    %v2420 = vadd.f32 %v2415, %v2418
    %v2421 = vmul.f32 %v2362, %v1744
    %v2423 = vrot.slane %v2421, 4
    %v2425 = vadd.f32 %v2420, %v2423
    %v2426 = vmul.f32 %v2370, %v1619
    %v2428 = vrot.slane %v2426, 5
    %v2430 = vadd.f32 %v2425, %v2428
    %v2431 = vmul.f32 %v2378, %v1528
    %v2433 = vrot.slane %v2431, 6
    %v2435 = vadd.f32 %v2430, %v2433
    %v2436 = vmul.f32 %v2304, %v1631
    %v2438 = vrot.slane %v2436, 7
    %v2440 = vadd.f32 %v2435, %v2438
    %v2441 = vsub.f32 0.0, %v2440
    %v2442 = vadd.f32 %v2384, 1e-10
    %v2443 = vrcp.pop %v2442
    %v2445 = vrot.slane %v2443, 4
    %v2447 = vmul.f32 %v2441, %v2445
    %v2449 = vrot.slane %v2304, 7
    %v2451 = vmul.f32 %v2447, %v2449
    %v2453 = vrot.slane %v2451, 3
    %v2455 = vadd.f32 %v2312, %v2453
    %v2457 = vrot.slane %v2378, 6
    %v2459 = vmul.f32 %v2447, %v2457
    %v2461 = vrot.slane %v2459, 2
    %v2463 = vadd.f32 %v2320, %v2461
    %v2465 = vrot.slane %v2370, 5
    %v2467 = vmul.f32 %v2447, %v2465
    %v2469 = vrot.slane %v2467, 1
    %v2471 = vadd.f32 %v2325, %v2469
    %v2473 = vrot.slane %v2362, 4
    %v2475 = vmul.f32 %v2447, %v2473
    %v2476 = vadd.f32 %v2333, %v2475
    %v2478 = vrot.slane %v2357, 3
    %v2480 = vmul.f32 %v2447, %v2478
    %v2482 = vrot.slane %v2480, 7
    %v2484 = vadd.f32 %v2341, %v2482
    %v2486 = vrot.slane %v2349, 2
    %v2488 = vmul.f32 %v2447, %v2486
    %v2490 = vrot.slane %v2488, 6
    %v2492 = vadd.f32 %v2349, %v2490
    %v2494 = vrot.slane %v2341, 1
    %v2496 = vmul.f32 %v2447, %v2494
    %v2498 = vrot.slane %v2496, 5
    %v2500 = vadd.f32 %v2357, %v2498
    %v2501 = vmul.f32 %v2447, %v2333
    %v2503 = vrot.slane %v2501, 4
    %v2505 = vadd.f32 %v2362, %v2503
    %v2507 = vrot.slane %v2325, 7
    %v2509 = vmul.f32 %v2447, %v2507
    %v2511 = vrot.slane %v2509, 3
    %v2513 = vadd.f32 %v2370, %v2511
    %v2515 = vrot.slane %v2320, 6
    %v2517 = vmul.f32 %v2447, %v2515
    %v2519 = vrot.slane %v2517, 2
    %v2521 = vadd.f32 %v2378, %v2519
    %v2523 = vrot.slane %v2312, 5
    %v2525 = vmul.f32 %v2447, %v2523
    %v2527 = vrot.slane %v2525, 1
    %v2529 = vadd.f32 %v2304, %v2527
    %v2530 = vmul.f32 %v2447, %v2447
    %v2531 = vsub.f32 1.0, %v2530
    %v2533 = vrot.slane %v2531, 4
    %v2535 = vmul.f32 %v2384, %v2533
    %v2536 = vrot.slane %v1531, 3
    %v2538 = vmul.f32 %v2455, %v2536
    %v2540 = vrot.slane %v2538, 4
    %v2542 = vadd.f32 %v1531, %v2540
    %v2543 = vmul.f32 %v2463, %v2247
    %v2545 = vrot.slane %v2543, 5
    %v2547 = vadd.f32 %v2542, %v2545
    %v2548 = vmul.f32 %v2471, %v2014
    %v2550 = vrot.slane %v2548, 6
    %v2552 = vadd.f32 %v2547, %v2550
    %v2553 = vmul.f32 %v2476, %v2259
    %v2555 = vrot.slane %v2553, 7
    %v2557 = vadd.f32 %v2552, %v2555
    %v2558 = vmul.f32 %v2484, %v2536
    %v2559 = vadd.f32 %v2557, %v2558
    %v2560 = vmul.f32 %v2492, %v1576
    %v2562 = vrot.slane %v2560, 1
    %v2564 = vadd.f32 %v2559, %v2562
    %v2565 = vmul.f32 %v2500, %v1583
    %v2567 = vrot.slane %v2565, 2
    %v2569 = vadd.f32 %v2564, %v2567
    %v2570 = vmul.f32 %v2505, %v1692
    %v2572 = vrot.slane %v2570, 3
    %v2574 = vadd.f32 %v2569, %v2572
    %v2575 = vmul.f32 %v2513, %v1675
    %v2577 = vrot.slane %v2575, 4
    %v2579 = vadd.f32 %v2574, %v2577
    %v2580 = vmul.f32 %v2521, %v1576
    %v2582 = vrot.slane %v2580, 5
    %v2584 = vadd.f32 %v2579, %v2582
    %v2585 = vmul.f32 %v2529, %v1583
    %v2587 = vrot.slane %v2585, 6
    %v2589 = vadd.f32 %v2584, %v2587
    %v2590 = vmul.f32 %v2447, %v1692
    %v2592 = vrot.slane %v2590, 7
    %v2594 = vadd.f32 %v2589, %v2592
    %v2595 = vsub.f32 0.0, %v2594
    %v2596 = vadd.f32 %v2535, 1e-10
    %v2597 = vrcp.pop %v2596
    %v2599 = vrot.slane %v2597, 3
    %v2601 = vmul.f32 %v2595, %v2599
    %v2603 = vrot.slane %v2447, 7
    %v2605 = vmul.f32 %v2601, %v2603
    %v2607 = vrot.slane %v2605, 4
    %v2609 = vadd.f32 %v2455, %v2607
    %v2611 = vrot.slane %v2529, 6
    %v2613 = vmul.f32 %v2601, %v2611
    %v2615 = vrot.slane %v2613, 3
    %v2617 = vadd.f32 %v2463, %v2615
    %v2619 = vrot.slane %v2521, 5
    %v2621 = vmul.f32 %v2601, %v2619
    %v2623 = vrot.slane %v2621, 2
    %v2625 = vadd.f32 %v2471, %v2623
    %v2627 = vrot.slane %v2513, 4
    %v2629 = vmul.f32 %v2601, %v2627
    %v2631 = vrot.slane %v2629, 1
    %v2633 = vadd.f32 %v2476, %v2631
    %v2635 = vrot.slane %v2505, 3
    %v2637 = vmul.f32 %v2601, %v2635
    %v2638 = vadd.f32 %v2484, %v2637
    %v2640 = vrot.slane %v2500, 2
    %v2642 = vmul.f32 %v2601, %v2640
    %v2644 = vrot.slane %v2642, 7
    %v2646 = vadd.f32 %v2492, %v2644
    %v2648 = vrot.slane %v2492, 1
    %v2650 = vmul.f32 %v2601, %v2648
    %v2652 = vrot.slane %v2650, 6
    %v2654 = vadd.f32 %v2500, %v2652
    %v2655 = vmul.f32 %v2601, %v2484
    %v2657 = vrot.slane %v2655, 5
    %v2659 = vadd.f32 %v2505, %v2657
    %v2661 = vrot.slane %v2476, 7
    %v2663 = vmul.f32 %v2601, %v2661
    %v2665 = vrot.slane %v2663, 4
    %v2667 = vadd.f32 %v2513, %v2665
    %v2669 = vrot.slane %v2471, 6
    %v2671 = vmul.f32 %v2601, %v2669
    %v2673 = vrot.slane %v2671, 3
    %v2675 = vadd.f32 %v2521, %v2673
    %v2677 = vrot.slane %v2463, 5
    %v2679 = vmul.f32 %v2601, %v2677
    %v2681 = vrot.slane %v2679, 2
    %v2683 = vadd.f32 %v2529, %v2681
    %v2685 = vrot.slane %v2455, 4
    %v2687 = vmul.f32 %v2601, %v2685
    %v2689 = vrot.slane %v2687, 1
    %v2691 = vadd.f32 %v2447, %v2689
    %v2692 = vmul.f32 %v2601, %v2601
    %v2693 = vsub.f32 1.0, %v2692
    %v2695 = vrot.slane %v2693, 5
    %v2697 = vmul.f32 %v2535, %v2695
    %v2698 = vmul.f32 %v2609, %v2402
    %v2700 = vrot.slane %v2698, 3
    %v2702 = vadd.f32 %v1531, %v2700
    %v2703 = vmul.f32 %v2617, %v2385
    %v2705 = vrot.slane %v2703, 4
    %v2707 = vadd.f32 %v2702, %v2705
    %v2708 = vmul.f32 %v2625, %v1531
    %v2710 = vrot.slane %v2708, 5
    %v2712 = vadd.f32 %v2707, %v2710
    %v2713 = vmul.f32 %v2633, %v2129
    %v2715 = vrot.slane %v2713, 6
    %v2717 = vadd.f32 %v2712, %v2715
    %v2718 = vmul.f32 %v2638, %v2402
    %v2720 = vrot.slane %v2718, 7
    %v2722 = vadd.f32 %v2717, %v2720
    %v2723 = vmul.f32 %v2646, %v2385
    %v2724 = vadd.f32 %v2722, %v2723
    %v2725 = vmul.f32 %v2654, %v1528
    %v2727 = vrot.slane %v2725, 1
    %v2729 = vadd.f32 %v2724, %v2727
    %v2730 = vmul.f32 %v2659, %v1631
    %v2732 = vrot.slane %v2730, 2
    %v2734 = vadd.f32 %v2729, %v2732
    %v2735 = vmul.f32 %v2667, %v1744
    %v2737 = vrot.slane %v2735, 3
    %v2739 = vadd.f32 %v2734, %v2737
    %v2740 = vmul.f32 %v2675, %v1619
    %v2742 = vrot.slane %v2740, 4
    %v2744 = vadd.f32 %v2739, %v2742
    %v2745 = vmul.f32 %v2683, %v1528
    %v2747 = vrot.slane %v2745, 5
    %v2749 = vadd.f32 %v2744, %v2747
    %v2750 = vmul.f32 %v2691, %v1631
    %v2752 = vrot.slane %v2750, 6
    %v2754 = vadd.f32 %v2749, %v2752
    %v2755 = vmul.f32 %v2601, %v1744
    %v2757 = vrot.slane %v2755, 7
    %v2759 = vadd.f32 %v2754, %v2757
    %v2760 = vsub.f32 0.0, %v2759
    %v2761 = vadd.f32 %v2697, 1e-10
    %v2762 = vrcp.pop %v2761
    %v2764 = vrot.slane %v2762, 2
    %v2766 = vmul.f32 %v2760, %v2764
    %v2768 = vrot.slane %v2601, 7
    %v2770 = vmul.f32 %v2766, %v2768
    %v2772 = vrot.slane %v2770, 5
    %v2774 = vadd.f32 %v2609, %v2772
    %v2776 = vrot.slane %v2691, 6
    %v2778 = vmul.f32 %v2766, %v2776
    %v2780 = vrot.slane %v2778, 4
    %v2782 = vadd.f32 %v2617, %v2780
    %v2784 = vrot.slane %v2683, 5
    %v2786 = vmul.f32 %v2766, %v2784
    %v2788 = vrot.slane %v2786, 3
    %v2790 = vadd.f32 %v2625, %v2788
    %v2792 = vrot.slane %v2675, 4
    %v2794 = vmul.f32 %v2766, %v2792
    %v2796 = vrot.slane %v2794, 2
    %v2798 = vadd.f32 %v2633, %v2796
    %v2800 = vrot.slane %v2667, 3
    %v2802 = vmul.f32 %v2766, %v2800
    %v2804 = vrot.slane %v2802, 1
    %v2806 = vadd.f32 %v2638, %v2804
    %v2808 = vrot.slane %v2659, 2
    %v2810 = vmul.f32 %v2766, %v2808
    %v2811 = vadd.f32 %v2646, %v2810
    %v2813 = vrot.slane %v2654, 1
    %v2815 = vmul.f32 %v2766, %v2813
    %v2817 = vrot.slane %v2815, 7
    %v2819 = vadd.f32 %v2654, %v2817
    %v2820 = vmul.f32 %v2766, %v2646
    %v2822 = vrot.slane %v2820, 6
    %v2824 = vadd.f32 %v2659, %v2822
    %v2826 = vrot.slane %v2638, 7
    %v2828 = vmul.f32 %v2766, %v2826
    %v2830 = vrot.slane %v2828, 5
    %v2832 = vadd.f32 %v2667, %v2830
    %v2834 = vrot.slane %v2633, 6
    %v2836 = vmul.f32 %v2766, %v2834
    %v2838 = vrot.slane %v2836, 4
    %v2840 = vadd.f32 %v2675, %v2838
    %v2842 = vrot.slane %v2625, 5
    %v2844 = vmul.f32 %v2766, %v2842
    %v2846 = vrot.slane %v2844, 3
    %v2848 = vadd.f32 %v2683, %v2846
    %v2850 = vrot.slane %v2617, 4
    %v2852 = vmul.f32 %v2766, %v2850
    %v2854 = vrot.slane %v2852, 2
    %v2856 = vadd.f32 %v2691, %v2854
    %v2858 = vrot.slane %v2609, 3
    %v2860 = vmul.f32 %v2766, %v2858
    %v2862 = vrot.slane %v2860, 1
    %v2864 = vadd.f32 %v2601, %v2862
    %v2865 = vmul.f32 %v2766, %v2766
    %v2866 = vsub.f32 1.0, %v2865
    %v2868 = vrot.slane %v2866, 6
    %v2870 = vmul.f32 %v2697, %v2868
    %v2871 = vmul.f32 %v2774, %v2259
    %v2873 = vrot.slane %v2871, 2
    %v2875 = vadd.f32 %v1531, %v2873
    %v2876 = vmul.f32 %v2782, %v2536
    %v2878 = vrot.slane %v2876, 3
    %v2880 = vadd.f32 %v2875, %v2878
    %v2881 = vmul.f32 %v2790, %v2247
    %v2883 = vrot.slane %v2881, 4
    %v2885 = vadd.f32 %v2880, %v2883
    %v2886 = vmul.f32 %v2798, %v2014
    %v2888 = vrot.slane %v2886, 5
    %v2890 = vadd.f32 %v2885, %v2888
    %v2891 = vmul.f32 %v2806, %v2259
    %v2893 = vrot.slane %v2891, 6
    %v2895 = vadd.f32 %v2890, %v2893
    %v2896 = vmul.f32 %v2811, %v2536
    %v2898 = vrot.slane %v2896, 7
    %v2900 = vadd.f32 %v2895, %v2898
    %v2901 = vmul.f32 %v2819, %v2247
    %v2902 = vadd.f32 %v2900, %v2901
    %v2903 = vmul.f32 %v2824, %v1583
    %v2905 = vrot.slane %v2903, 1
    %v2907 = vadd.f32 %v2902, %v2905
    %v2908 = vmul.f32 %v2832, %v1692
    %v2910 = vrot.slane %v2908, 2
    %v2912 = vadd.f32 %v2907, %v2910
    %v2913 = vmul.f32 %v2840, %v1675
    %v2915 = vrot.slane %v2913, 3
    %v2917 = vadd.f32 %v2912, %v2915
    %v2918 = vmul.f32 %v2848, %v1576
    %v2920 = vrot.slane %v2918, 4
    %v2922 = vadd.f32 %v2917, %v2920
    %v2923 = vmul.f32 %v2856, %v1583
    %v2925 = vrot.slane %v2923, 5
    %v2927 = vadd.f32 %v2922, %v2925
    %v2928 = vmul.f32 %v2864, %v1692
    %v2930 = vrot.slane %v2928, 6
    %v2932 = vadd.f32 %v2927, %v2930
    %v2933 = vmul.f32 %v2766, %v1675
    %v2935 = vrot.slane %v2933, 7
    %v2937 = vadd.f32 %v2932, %v2935
    %v2938 = vsub.f32 0.0, %v2937
    %v2939 = vadd.f32 %v2870, 1e-10
    %v2940 = vrcp.pop %v2939
    %v2942 = vrot.slane %v2940, 1
    %v2944 = vmul.f32 %v2938, %v2942
    %v2946 = vrot.slane %v2766, 7
    %v2948 = vmul.f32 %v2944, %v2946
    %v2950 = vrot.slane %v2948, 6
    %v2952 = vadd.f32 %v2774, %v2950
    %v2954 = vrot.slane %v2864, 6
    %v2956 = vmul.f32 %v2944, %v2954
    %v2958 = vrot.slane %v2956, 5
    %v2960 = vadd.f32 %v2782, %v2958
    %v2962 = vrot.slane %v2856, 5
    %v2964 = vmul.f32 %v2944, %v2962
    %v2966 = vrot.slane %v2964, 4
    %v2968 = vadd.f32 %v2790, %v2966
    %v2970 = vrot.slane %v2848, 4
    %v2972 = vmul.f32 %v2944, %v2970
    %v2974 = vrot.slane %v2972, 3
    %v2976 = vadd.f32 %v2798, %v2974
    %v2978 = vrot.slane %v2840, 3
    %v2980 = vmul.f32 %v2944, %v2978
    %v2982 = vrot.slane %v2980, 2
    %v2984 = vadd.f32 %v2806, %v2982
    %v2986 = vrot.slane %v2832, 2
    %v2988 = vmul.f32 %v2944, %v2986
    %v2990 = vrot.slane %v2988, 1
    %v2992 = vadd.f32 %v2811, %v2990
    %v2994 = vrot.slane %v2824, 1
    %v2996 = vmul.f32 %v2944, %v2994
    %v2997 = vadd.f32 %v2819, %v2996
    %v2998 = vmul.f32 %v2944, %v2819
    %v3000 = vrot.slane %v2998, 7
    %v3002 = vadd.f32 %v2824, %v3000
    %v3004 = vrot.slane %v2811, 7
    %v3006 = vmul.f32 %v2944, %v3004
    %v3008 = vrot.slane %v3006, 6
    %v3010 = vadd.f32 %v2832, %v3008
    %v3012 = vrot.slane %v2806, 6
    %v3014 = vmul.f32 %v2944, %v3012
    %v3016 = vrot.slane %v3014, 5
    %v3018 = vadd.f32 %v2840, %v3016
    %v3020 = vrot.slane %v2798, 5
    %v3022 = vmul.f32 %v2944, %v3020
    %v3024 = vrot.slane %v3022, 4
    %v3026 = vadd.f32 %v2848, %v3024
    %v3028 = vrot.slane %v2790, 4
    %v3030 = vmul.f32 %v2944, %v3028
    %v3032 = vrot.slane %v3030, 3
    %v3034 = vadd.f32 %v2856, %v3032
    %v3036 = vrot.slane %v2782, 3
    %v3038 = vmul.f32 %v2944, %v3036
    %v3040 = vrot.slane %v3038, 2
    %v3042 = vadd.f32 %v2864, %v3040
    %v3044 = vrot.slane %v2774, 2
    %v3046 = vmul.f32 %v2944, %v3044
    %v3048 = vrot.slane %v3046, 1
    %v3050 = vadd.f32 %v2766, %v3048
    %v3051 = vmul.f32 %v2944, %v2944
    %v3052 = vsub.f32 1.0, %v3051
    %v3054 = vrot.slane %v3052, 7
    %v3056 = vmul.f32 %v2870, %v3054
    %v3057 = vmul.f32 %v2952, %v2129
    %v3059 = vrot.slane %v3057, 1
    %v3061 = vadd.f32 %v1534, %v3059
    %v3062 = vmul.f32 %v2960, %v2402
    %v3064 = vrot.slane %v3062, 2
    %v3066 = vadd.f32 %v3061, %v3064
    %v3067 = vmul.f32 %v2968, %v2385
    %v3069 = vrot.slane %v3067, 3
    %v3071 = vadd.f32 %v3066, %v3069
    %v3072 = vmul.f32 %v2976, %v1531
    %v3074 = vrot.slane %v3072, 4
    %v3076 = vadd.f32 %v3071, %v3074
    %v3077 = vmul.f32 %v2984, %v2129
    %v3079 = vrot.slane %v3077, 5
    %v3081 = vadd.f32 %v3076, %v3079
    %v3082 = vmul.f32 %v2992, %v2402
    %v3084 = vrot.slane %v3082, 6
    %v3086 = vadd.f32 %v3081, %v3084
    %v3087 = vmul.f32 %v2997, %v2385
    %v3089 = vrot.slane %v3087, 7
    %v3091 = vadd.f32 %v3086, %v3089
    %v3092 = vmul.f32 %v3002, %v1531
    %v3093 = vadd.f32 %v3091, %v3092
    %v3094 = vmul.f32 %v3010, %v1631
    %v3096 = vrot.slane %v3094, 1
    %v3098 = vadd.f32 %v3093, %v3096
    %v3099 = vmul.f32 %v3018, %v1744
    %v3101 = vrot.slane %v3099, 2
    %v3103 = vadd.f32 %v3098, %v3101
    %v3104 = vmul.f32 %v3026, %v1619
    %v3106 = vrot.slane %v3104, 3
    %v3108 = vadd.f32 %v3103, %v3106
    %v3109 = vmul.f32 %v3034, %v1528
    %v3111 = vrot.slane %v3109, 4
    %v3113 = vadd.f32 %v3108, %v3111
    %v3114 = vmul.f32 %v3042, %v1631
    %v3116 = vrot.slane %v3114, 5
    %v3118 = vadd.f32 %v3113, %v3116
    %v3119 = vmul.f32 %v3050, %v1744
    %v3121 = vrot.slane %v3119, 6
    %v3123 = vadd.f32 %v3118, %v3121
    %v3124 = vmul.f32 %v2944, %v1619
    %v3126 = vrot.slane %v3124, 7
    %v3128 = vadd.f32 %v3123, %v3126
    %v3129 = vsub.f32 0.0, %v3128
    %v3130 = vadd.f32 %v3056, 1e-10
    %v3131 = vrcp.pop %v3130
    %v3132 = vmul.f32 %v3129, %v3131
    %v3134 = vrot.slane %v2944, 7
    %v3136 = vmul.f32 %v3132, %v3134
    %v3138 = vrot.slane %v3136, 7
    %v3140 = vadd.f32 %v2952, %v3138
    %v3142 = vrot.slane %v3050, 6
    %v3144 = vmul.f32 %v3132, %v3142
    %v3146 = vrot.slane %v3144, 6
    %v3148 = vadd.f32 %v2960, %v3146
    %v3150 = vrot.slane %v3042, 5
    %v3152 = vmul.f32 %v3132, %v3150
    %v3154 = vrot.slane %v3152, 5
    %v3156 = vadd.f32 %v2968, %v3154
    %v3158 = vrot.slane %v3034, 4
    %v3160 = vmul.f32 %v3132, %v3158
    %v3162 = vrot.slane %v3160, 4
    %v3164 = vadd.f32 %v2976, %v3162
    %v3166 = vrot.slane %v3026, 3
    %v3168 = vmul.f32 %v3132, %v3166
    %v3170 = vrot.slane %v3168, 3
    %v3172 = vadd.f32 %v2984, %v3170
    %v3174 = vrot.slane %v3018, 2
    %v3176 = vmul.f32 %v3132, %v3174
    %v3178 = vrot.slane %v3176, 2
    %v3180 = vadd.f32 %v2992, %v3178
    %v3182 = vrot.slane %v3010, 1
    %v3184 = vmul.f32 %v3132, %v3182
    %v3186 = vrot.slane %v3184, 1
    %v3188 = vadd.f32 %v2997, %v3186
    %v3189 = vmul.f32 %v3132, %v3002
    %v3190 = vadd.f32 %v3002, %v3189
    %v3192 = vrot.slane %v2997, 7
    %v3194 = vmul.f32 %v3132, %v3192
    %v3196 = vrot.slane %v3194, 7
    %v3198 = vadd.f32 %v3010, %v3196
    %v3200 = vrot.slane %v2992, 6
    %v3202 = vmul.f32 %v3132, %v3200
    %v3204 = vrot.slane %v3202, 6
    %v3206 = vadd.f32 %v3018, %v3204
    %v3208 = vrot.slane %v2984, 5
    %v3210 = vmul.f32 %v3132, %v3208
    %v3212 = vrot.slane %v3210, 5
    %v3214 = vadd.f32 %v3026, %v3212
    %v3216 = vrot.slane %v2976, 4
    %v3218 = vmul.f32 %v3132, %v3216
    %v3220 = vrot.slane %v3218, 4
    %v3222 = vadd.f32 %v3034, %v3220
    %v3224 = vrot.slane %v2968, 3
    %v3226 = vmul.f32 %v3132, %v3224
    %v3228 = vrot.slane %v3226, 3
    %v3230 = vadd.f32 %v3042, %v3228
    %v3232 = vrot.slane %v2960, 2
    %v3234 = vmul.f32 %v3132, %v3232
    %v3236 = vrot.slane %v3234, 2
    %v3238 = vadd.f32 %v3050, %v3236
    %v3240 = vrot.slane %v2952, 1
    %v3242 = vmul.f32 %v3132, %v3240
    %v3244 = vrot.slane %v3242, 1
    %v3246 = vadd.f32 %v2944, %v3244
    %vm3247 = vcmask 1040384
    %v3248 = vsel %vm3247, 1.0, %v3140
    %vm3249 = vcmask 1041408
    %v3250 = vsel %vm3249, %v3248, %v3148
    %vm3251 = vcmask 1042432
    %v3252 = vsel %vm3251, %v3250, %v3156
    %vm3253 = vcmask 1043456
    %v3254 = vsel %vm3253, %v3252, %v3164
    %vm3255 = vcmask 1044480
    %v3256 = vsel %vm3255, %v3254, %v3172
    %vm3257 = vcmask 1045504
    %v3258 = vsel %vm3257, %v3256, %v3180
    %vm3259 = vcmask 1046528
    %v3260 = vsel %vm3259, %v3258, %v3188
    %v3261 = vsel %vm3247, %v3190, %v3198
    %v3262 = vsel %vm3249, %v3261, %v3206
    %v3263 = vsel %vm3251, %v3262, %v3214
    %v3264 = vsel %vm3253, %v3263, %v3222
    %v3265 = vsel %vm3255, %v3264, %v3230
    %v3266 = vsel %vm3257, %v3265, %v3238
    %v3267 = vsel %vm3259, %v3266, %v3246
    %v3268 = vsel %vm3247, %v3132, 0.0
    %v3269 = vsel %vm3249, %v3268, 0.0
    %v3270 = vsel %vm3251, %v3269, 0.0
    %v3271 = vsel %vm3253, %v3270, 0.0
    %v3272 = vsel %vm3255, %v3271, 0.0
    %v3273 = vsel %vm3257, %v3272, 0.0
    %v3274 = vsel %vm3259, %v3273, 0.0
    %v3275 = vld [vmem:[%s3] sm:$0xff]
    %v3276 = vld [vmem:[%s3 + $0x8] sm:$0xff]
    %v3277 = vld [vmem:[%s3 + $0x10] sm:$0xff]
    %v3278 = vld [vmem:[%s3 + $0x18] sm:$0xff]
    %v3279 = vld [vmem:[%s3 + $0x20] sm:$0xff]
    %v3280 = vld [vmem:[%s3 + $0x28] sm:$0xff]
    %v3281 = vld [vmem:[%s3 + $0x30] sm:$0xff]
    %v3282 = vld [vmem:[%s3 + $0x38] sm:$0xff]
    %v3283 = vld [vmem:[%s3 + $0x40] sm:$0xff]
    %v3284 = vld [vmem:[%s3 + $0x48] sm:$0xff]
    %v3285 = vld [vmem:[%s3 + $0x50] sm:$0xff]
    %v3286 = vld [vmem:[%s3 + $0x58] sm:$0xff]
    %v3287 = vld [vmem:[%s3 + $0x60] sm:$0xff]
    %v3288 = vld [vmem:[%s3 + $0x68] sm:$0xff]
    %v3289 = vld [vmem:[%s3 + $0x70] sm:$0xff]
    %v3290 = vld [vmem:[%s3 + $0x78] sm:$0xff]
    %v3291 = vld [vmem:[%s3 + $0x80] sm:$0xff]
    %v3292 = vld [vmem:[%s3 + $0x88] sm:$0xff]
    %v3293 = vld [vmem:[%s3 + $0x90] sm:$0xff]
    %v3294 = vld [vmem:[%s3 + $0x98] sm:$0xff]
    %v3295 = vld [vmem:[%s3 + $0xa0] sm:$0xff]
    %v3296 = vld [vmem:[%s3 + $0xa8] sm:$0xff]
    %v3297 = vld [vmem:[%s3 + $0xb0] sm:$0xff]
    %v3298 = vld [vmem:[%s3 + $0xb8] sm:$0xff]
    %v3299 = vld [vmem:[%s3 + $0xc0] sm:$0xff]
    %v3300 = vld [vmem:[%s3 + $0xc8] sm:$0xff]
    %v3301 = vld [vmem:[%s3 + $0xd0] sm:$0xff]
    %v3302 = vld [vmem:[%s3 + $0xd8] sm:$0xff]
    %v3303 = vld [vmem:[%s3 + $0xe0] sm:$0xff]
    %v3304 = vld [vmem:[%s3 + $0xe8] sm:$0xff]
    %v3305 = vld [vmem:[%s3 + $0xf0] sm:$0xff]
    %v3306 = vld [vmem:[%s3 + $0xf8] sm:$0xff]
    %v3307 = vld [vmem:[%s3 + $0x100] sm:$0xff]
    %v3308 = vld [vmem:[%s3 + $0x108] sm:$0xff]
    %v3309 = vld [vmem:[%s3 + $0x110] sm:$0xff]
    %v3310 = vld [vmem:[%s3 + $0x118] sm:$0xff]
    %v3311 = vld [vmem:[%s3 + $0x120] sm:$0xff]
    %v3312 = vld [vmem:[%s3 + $0x128] sm:$0xff]
    %v3313 = vld [vmem:[%s3 + $0x130] sm:$0xff]
    %v3314 = vld [vmem:[%s3 + $0x138] sm:$0xff]
    %v3315 = vld [vmem:[%s3 + $0x140] sm:$0xff]
    %v3316 = vld [vmem:[%s3 + $0x148] sm:$0xff]
    %v3317 = vld [vmem:[%s3 + $0x150] sm:$0xff]
    %v3318 = vld [vmem:[%s3 + $0x158] sm:$0xff]
    %v3319 = vld [vmem:[%s3 + $0x160] sm:$0xff]
    %v3320 = vld [vmem:[%s3 + $0x168] sm:$0xff]
    %v3321 = vld [vmem:[%s3 + $0x170] sm:$0xff]
    %v3322 = vld [vmem:[%s3 + $0x178] sm:$0xff]
    %v3323 = vld [vmem:[%s3 + $0x180] sm:$0xff]
    %v3324 = vld [vmem:[%s3 + $0x188] sm:$0xff]
    %v3325 = vld [vmem:[%s3 + $0x190] sm:$0xff]
    %v3326 = vld [vmem:[%s3 + $0x198] sm:$0xff]
    %v3327 = vld [vmem:[%s3 + $0x1a0] sm:$0xff]
    %v3328 = vld [vmem:[%s3 + $0x1a8] sm:$0xff]
    %v3329 = vld [vmem:[%s3 + $0x1b0] sm:$0xff]
    %v3330 = vld [vmem:[%s3 + $0x1b8] sm:$0xff]
    %v3331 = vld [vmem:[%s3 + $0x1c0] sm:$0xff]
    %v3332 = vld [vmem:[%s3 + $0x1c8] sm:$0xff]
    %v3333 = vld [vmem:[%s3 + $0x1d0] sm:$0xff]
    %v3334 = vld [vmem:[%s3 + $0x1d8] sm:$0xff]
    %v3335 = vld [vmem:[%s3 + $0x1e0] sm:$0xff]
    %v3336 = vld [vmem:[%s3 + $0x1e8] sm:$0xff]
    %v3337 = vld [vmem:[%s3 + $0x1f0] sm:$0xff]
    %v3338 = vld [vmem:[%s3 + $0x1f8] sm:$0xff]
    %v3339 = vld [vmem:[%s3 + $0x200] sm:$0xff]
    %v3340 = vld [vmem:[%s3 + $0x208] sm:$0xff]
    %vm3341 = vcmask 195584
    %v3343 = vsel %vm3341, %v3275, 0
    %v3346 = vsel %vm3341, %v3276, 0
    %v3349 = vsel %vm3341, %v3277, 0
    %v3352 = vsel %vm3341, %v3278, 0
    %v3355 = vsel %vm3341, %v3279, 0
    %v3358 = vsel %vm3341, %v3280, 0
    %v3361 = vsel %vm3341, %v3281, 0
    %v3364 = vsel %vm3341, %v3282, 0
    %v3367 = vsel %vm3341, %v3283, 0
    %v3370 = vsel %vm3341, %v3284, 0
    %v3373 = vsel %vm3341, %v3285, 0
    %v3376 = vsel %vm3341, %v3286, 0
    %v3379 = vsel %vm3341, %v3287, 0
    %v3382 = vsel %vm3341, %v3288, 0
    %v3385 = vsel %vm3341, %v3289, 0
    %v3388 = vsel %vm3341, %v3290, 0
    %v3391 = vsel %vm3341, %v3291, 0
    %v3394 = vsel %vm3341, %v3292, 0
    %v3397 = vsel %vm3341, %v3293, 0
    %v3400 = vsel %vm3341, %v3294, 0
    %v3403 = vsel %vm3341, %v3295, 0
    %v3406 = vsel %vm3341, %v3296, 0
    %v3409 = vsel %vm3341, %v3297, 0
    %v3412 = vsel %vm3341, %v3298, 0
    %v3415 = vsel %vm3341, %v3299, 0
    %v3418 = vsel %vm3341, %v3300, 0
    %v3421 = vsel %vm3341, %v3301, 0
    %v3424 = vsel %vm3341, %v3302, 0
    %v3427 = vsel %vm3341, %v3303, 0
    %v3430 = vsel %vm3341, %v3304, 0
    %v3433 = vsel %vm3341, %v3305, 0
    %v3436 = vsel %vm3341, %v3306, 0
    %v3439 = vsel %vm3341, %v3307, 0
    %v3442 = vsel %vm3341, %v3308, 0
    %v3445 = vsel %vm3341, %v3309, 0
    %v3448 = vsel %vm3341, %v3310, 0
    %v3451 = vsel %vm3341, %v3311, 0
    %v3454 = vsel %vm3341, %v3312, 0
    %v3457 = vsel %vm3341, %v3313, 0
    %v3460 = vsel %vm3341, %v3314, 0
    %v3463 = vsel %vm3341, %v3315, 0
    %v3466 = vsel %vm3341, %v3316, 0
    %v3469 = vsel %vm3341, %v3317, 0
    %v3472 = vsel %vm3341, %v3318, 0
    %v3475 = vsel %vm3341, %v3319, 0
    %v3478 = vsel %vm3341, %v3320, 0
    %v3481 = vsel %vm3341, %v3321, 0
    %v3484 = vsel %vm3341, %v3322, 0
    %v3487 = vsel %vm3341, %v3323, 0
    %v3490 = vsel %vm3341, %v3324, 0
    %v3493 = vsel %vm3341, %v3325, 0
    %v3496 = vsel %vm3341, %v3326, 0
    %v3499 = vsel %vm3341, %v3327, 0
    %v3502 = vsel %vm3341, %v3328, 0
    %v3505 = vsel %vm3341, %v3329, 0
    %v3508 = vsel %vm3341, %v3330, 0
    %v3511 = vsel %vm3341, %v3331, 0
    %v3514 = vsel %vm3341, %v3332, 0
    %v3517 = vsel %vm3341, %v3333, 0
    %v3520 = vsel %vm3341, %v3334, 0
    %v3523 = vsel %vm3341, %v3335, 0
    %v3526 = vsel %vm3341, %v3336, 0
    %v3529 = vsel %vm3341, %v3337, 0
    %v3532 = vsel %vm3341, %v3338, 0
    %v3535 = vsel %vm3341, %v3339, 0
    %v3538 = vsel %vm3341, %v3340, 0
    %3540 = vmatpush.msra.mxu0 0.0
    %3541 = vmatpush.msra.mxu0 0.0
    %3542 = vmatpush.msra.mxu0 0.0
    %3543 = vmatpush.msra.mxu0 0.0
    %3544 = vmatpush.msra.mxu0 0.0
    %3545 = vmatpush.msra.mxu0 0.0
    %3546 = vmatpush.msra.mxu0 0.0
    %3547 = vmatpush.msra.mxu0 0.0
    %3548 = vmatpush.msra.mxu0 0.0
    %3549 = vmatpush.msra.mxu0 0.0
    %3550 = vmatpush.msra.mxu0 0.0
    %3551 = vmatpush.msra.mxu0 0.0
    %3552 = vmatpush.msra.mxu0 0.0
    %3553 = vmatpush.msra.mxu0 %v3274
    %3554 = vmatpush.msra.mxu0 %v3267
    %3555 = vmatpush.msra.mxu0 %v3260
    %3556 = vmatmul.f32.gmra.mxu0 %v3343
    %v3557 = vpop.f32.mrf.mxu0
    %v3558 = vadd.f32 0.0, %v3557
    %3559 = vmatmul.f32.gmra.mxu0 %v3346
    %v3560 = vpop.f32.mrf.mxu0
    %v3561 = vadd.f32 0.0, %v3560
    %3562 = vmatmul.f32.gmra.mxu0 %v3349
    %v3563 = vpop.f32.mrf.mxu0
    %v3564 = vadd.f32 0.0, %v3563
    %3565 = vmatmul.f32.gmra.mxu0 %v3352
    %v3566 = vpop.f32.mrf.mxu0
    %v3567 = vadd.f32 0.0, %v3566
    %3568 = vmatmul.f32.gmra.mxu0 %v3355
    %v3569 = vpop.f32.mrf.mxu0
    %v3570 = vadd.f32 0.0, %v3569
    %3571 = vmatmul.f32.gmra.mxu0 %v3358
    %v3572 = vpop.f32.mrf.mxu0
    %v3573 = vadd.f32 0.0, %v3572
    %3574 = vmatmul.f32.gmra.mxu0 %v3361
    %v3575 = vpop.f32.mrf.mxu0
    %v3576 = vadd.f32 0.0, %v3575
    %3577 = vmatmul.f32.gmra.mxu0 %v3364
    %v3578 = vpop.f32.mrf.mxu0
    %v3579 = vadd.f32 0.0, %v3578
    %3580 = vmatmul.f32.gmra.mxu0 %v3367
    %v3581 = vpop.f32.mrf.mxu0
    %v3582 = vadd.f32 0.0, %v3581
    %3583 = vmatmul.f32.gmra.mxu0 %v3370
    %v3584 = vpop.f32.mrf.mxu0
    %v3585 = vadd.f32 0.0, %v3584
    %3586 = vmatmul.f32.gmra.mxu0 %v3373
    %v3587 = vpop.f32.mrf.mxu0
    %v3588 = vadd.f32 0.0, %v3587
    %3589 = vmatmul.f32.gmra.mxu0 %v3376
    %v3590 = vpop.f32.mrf.mxu0
    %v3591 = vadd.f32 0.0, %v3590
    %3592 = vmatmul.f32.gmra.mxu0 %v3379
    %v3593 = vpop.f32.mrf.mxu0
    %v3594 = vadd.f32 0.0, %v3593
    %3595 = vmatmul.f32.gmra.mxu0 %v3382
    %v3596 = vpop.f32.mrf.mxu0
    %v3597 = vadd.f32 0.0, %v3596
    %3598 = vmatmul.f32.gmra.mxu0 %v3385
    %v3599 = vpop.f32.mrf.mxu0
    %v3600 = vadd.f32 0.0, %v3599
    %3601 = vmatmul.f32.gmra.mxu0 %v3388
    %v3602 = vpop.f32.mrf.mxu0
    %v3603 = vadd.f32 0.0, %v3602
    %3604 = vmatmul.f32.gmra.mxu0 %v3391
    %v3605 = vpop.f32.mrf.mxu0
    %v3606 = vadd.f32 0.0, %v3605
    %3607 = vmatmul.f32.gmra.mxu0 %v3394
    %v3608 = vpop.f32.mrf.mxu0
    %v3609 = vadd.f32 0.0, %v3608
    %3610 = vmatmul.f32.gmra.mxu0 %v3397
    %v3611 = vpop.f32.mrf.mxu0
    %v3612 = vadd.f32 0.0, %v3611
    %3613 = vmatmul.f32.gmra.mxu0 %v3400
    %v3614 = vpop.f32.mrf.mxu0
    %v3615 = vadd.f32 0.0, %v3614
    %3616 = vmatmul.f32.gmra.mxu0 %v3403
    %v3617 = vpop.f32.mrf.mxu0
    %v3618 = vadd.f32 0.0, %v3617
    %3619 = vmatmul.f32.gmra.mxu0 %v3406
    %v3620 = vpop.f32.mrf.mxu0
    %v3621 = vadd.f32 0.0, %v3620
    %3622 = vmatmul.f32.gmra.mxu0 %v3409
    %v3623 = vpop.f32.mrf.mxu0
    %v3624 = vadd.f32 0.0, %v3623
    %3625 = vmatmul.f32.gmra.mxu0 %v3412
    %v3626 = vpop.f32.mrf.mxu0
    %v3627 = vadd.f32 0.0, %v3626
    %3628 = vmatmul.f32.gmra.mxu0 %v3415
    %v3629 = vpop.f32.mrf.mxu0
    %v3630 = vadd.f32 0.0, %v3629
    %3631 = vmatmul.f32.gmra.mxu0 %v3418
    %v3632 = vpop.f32.mrf.mxu0
    %v3633 = vadd.f32 0.0, %v3632
    %3634 = vmatmul.f32.gmra.mxu0 %v3421
    %v3635 = vpop.f32.mrf.mxu0
    %v3636 = vadd.f32 0.0, %v3635
    %3637 = vmatmul.f32.gmra.mxu0 %v3424
    %v3638 = vpop.f32.mrf.mxu0
    %v3639 = vadd.f32 0.0, %v3638
    %3640 = vmatmul.f32.gmra.mxu0 %v3427
    %v3641 = vpop.f32.mrf.mxu0
    %v3642 = vadd.f32 0.0, %v3641
    %3643 = vmatmul.f32.gmra.mxu0 %v3430
    %v3644 = vpop.f32.mrf.mxu0
    %v3645 = vadd.f32 0.0, %v3644
    %3646 = vmatmul.f32.gmra.mxu0 %v3433
    %v3647 = vpop.f32.mrf.mxu0
    %v3648 = vadd.f32 0.0, %v3647
    %3649 = vmatmul.f32.gmra.mxu0 %v3436
    %v3650 = vpop.f32.mrf.mxu0
    %v3651 = vadd.f32 0.0, %v3650
    %3652 = vmatmul.f32.gmra.mxu0 %v3439
    %v3653 = vpop.f32.mrf.mxu0
    %v3654 = vadd.f32 0.0, %v3653
    %3655 = vmatmul.f32.gmra.mxu0 %v3442
    %v3656 = vpop.f32.mrf.mxu0
    %v3657 = vadd.f32 0.0, %v3656
    %3658 = vmatmul.f32.gmra.mxu0 %v3445
    %v3659 = vpop.f32.mrf.mxu0
    %v3660 = vadd.f32 0.0, %v3659
    %3661 = vmatmul.f32.gmra.mxu0 %v3448
    %v3662 = vpop.f32.mrf.mxu0
    %v3663 = vadd.f32 0.0, %v3662
    %3664 = vmatmul.f32.gmra.mxu0 %v3451
    %v3665 = vpop.f32.mrf.mxu0
    %v3666 = vadd.f32 0.0, %v3665
    %3667 = vmatmul.f32.gmra.mxu0 %v3454
    %v3668 = vpop.f32.mrf.mxu0
    %v3669 = vadd.f32 0.0, %v3668
    %3670 = vmatmul.f32.gmra.mxu0 %v3457
    %v3671 = vpop.f32.mrf.mxu0
    %v3672 = vadd.f32 0.0, %v3671
    %3673 = vmatmul.f32.gmra.mxu0 %v3460
    %v3674 = vpop.f32.mrf.mxu0
    %v3675 = vadd.f32 0.0, %v3674
    %3676 = vmatmul.f32.gmra.mxu0 %v3463
    %v3677 = vpop.f32.mrf.mxu0
    %v3678 = vadd.f32 0.0, %v3677
    %3679 = vmatmul.f32.gmra.mxu0 %v3466
    %v3680 = vpop.f32.mrf.mxu0
    %v3681 = vadd.f32 0.0, %v3680
    %3682 = vmatmul.f32.gmra.mxu0 %v3469
    %v3683 = vpop.f32.mrf.mxu0
    %v3684 = vadd.f32 0.0, %v3683
    %3685 = vmatmul.f32.gmra.mxu0 %v3472
    %v3686 = vpop.f32.mrf.mxu0
    %v3687 = vadd.f32 0.0, %v3686
    %3688 = vmatmul.f32.gmra.mxu0 %v3475
    %v3689 = vpop.f32.mrf.mxu0
    %v3690 = vadd.f32 0.0, %v3689
    %3691 = vmatmul.f32.gmra.mxu0 %v3478
    %v3692 = vpop.f32.mrf.mxu0
    %v3693 = vadd.f32 0.0, %v3692
    %3694 = vmatmul.f32.gmra.mxu0 %v3481
    %v3695 = vpop.f32.mrf.mxu0
    %v3696 = vadd.f32 0.0, %v3695
    %3697 = vmatmul.f32.gmra.mxu0 %v3484
    %v3698 = vpop.f32.mrf.mxu0
    %v3699 = vadd.f32 0.0, %v3698
    %3700 = vmatmul.f32.gmra.mxu0 %v3487
    %v3701 = vpop.f32.mrf.mxu0
    %v3702 = vadd.f32 0.0, %v3701
    %3703 = vmatmul.f32.gmra.mxu0 %v3490
    %v3704 = vpop.f32.mrf.mxu0
    %v3705 = vadd.f32 0.0, %v3704
    %3706 = vmatmul.f32.gmra.mxu0 %v3493
    %v3707 = vpop.f32.mrf.mxu0
    %v3708 = vadd.f32 0.0, %v3707
    %3709 = vmatmul.f32.gmra.mxu0 %v3496
    %v3710 = vpop.f32.mrf.mxu0
    %v3711 = vadd.f32 0.0, %v3710
    %3712 = vmatmul.f32.gmra.mxu0 %v3499
    %v3713 = vpop.f32.mrf.mxu0
    %v3714 = vadd.f32 0.0, %v3713
    %3715 = vmatmul.f32.gmra.mxu0 %v3502
    %v3716 = vpop.f32.mrf.mxu0
    %v3717 = vadd.f32 0.0, %v3716
    %3718 = vmatmul.f32.gmra.mxu0 %v3505
    %v3719 = vpop.f32.mrf.mxu0
    %v3720 = vadd.f32 0.0, %v3719
    %3721 = vmatmul.f32.gmra.mxu0 %v3508
    %v3722 = vpop.f32.mrf.mxu0
    %v3723 = vadd.f32 0.0, %v3722
    %3724 = vmatmul.f32.gmra.mxu0 %v3511
    %v3725 = vpop.f32.mrf.mxu0
    %v3726 = vadd.f32 0.0, %v3725
    %3727 = vmatmul.f32.gmra.mxu0 %v3514
    %v3728 = vpop.f32.mrf.mxu0
    %v3729 = vadd.f32 0.0, %v3728
    %3730 = vmatmul.f32.gmra.mxu0 %v3517
    %v3731 = vpop.f32.mrf.mxu0
    %v3732 = vadd.f32 0.0, %v3731
    %3733 = vmatmul.f32.gmra.mxu0 %v3520
    %v3734 = vpop.f32.mrf.mxu0
    %v3735 = vadd.f32 0.0, %v3734
    %3736 = vmatmul.f32.gmra.mxu0 %v3523
    %v3737 = vpop.f32.mrf.mxu0
    %v3738 = vadd.f32 0.0, %v3737
    %3739 = vmatmul.f32.gmra.mxu0 %v3526
    %v3740 = vpop.f32.mrf.mxu0
    %v3741 = vadd.f32 0.0, %v3740
    %3742 = vmatmul.f32.gmra.mxu0 %v3529
    %v3743 = vpop.f32.mrf.mxu0
    %v3744 = vadd.f32 0.0, %v3743
    %3745 = vmatmul.f32.gmra.mxu0 %v3532
    %v3746 = vpop.f32.mrf.mxu0
    %v3747 = vadd.f32 0.0, %v3746
    %3748 = vmatmul.f32.gmra.mxu0 %v3535
    %v3749 = vpop.f32.mrf.mxu0
    %v3750 = vadd.f32 0.0, %v3749
    %3751 = vmatmul.f32.gmra.mxu0 %v3538
    %v3752 = vpop.f32.mrf.mxu0
    %v3753 = vadd.f32 0.0, %v3752
    %3754 = vdwg.mxu0
    %vm3755 = vcmp.eq.f32.partialorder %v3558, 0.0
    %vm3756 = vcmp.eq.f32.partialorder %v3561, 0.0
    %vm3757 = vcmp.eq.f32.partialorder %v3564, 0.0
    %vm3758 = vcmp.eq.f32.partialorder %v3567, 0.0
    %vm3759 = vcmp.eq.f32.partialorder %v3570, 0.0
    %vm3760 = vcmp.eq.f32.partialorder %v3573, 0.0
    %vm3761 = vcmp.eq.f32.partialorder %v3576, 0.0
    %vm3762 = vcmp.eq.f32.partialorder %v3579, 0.0
    %vm3763 = vcmp.eq.f32.partialorder %v3582, 0.0
    %vm3764 = vcmp.eq.f32.partialorder %v3585, 0.0
    %vm3765 = vcmp.eq.f32.partialorder %v3588, 0.0
    %vm3766 = vcmp.eq.f32.partialorder %v3591, 0.0
    %vm3767 = vcmp.eq.f32.partialorder %v3594, 0.0
    %vm3768 = vcmp.eq.f32.partialorder %v3597, 0.0
    %vm3769 = vcmp.eq.f32.partialorder %v3600, 0.0
    %vm3770 = vcmp.eq.f32.partialorder %v3603, 0.0
    %vm3771 = vcmp.eq.f32.partialorder %v3606, 0.0
    %vm3772 = vcmp.eq.f32.partialorder %v3609, 0.0
    %vm3773 = vcmp.eq.f32.partialorder %v3612, 0.0
    %vm3774 = vcmp.eq.f32.partialorder %v3615, 0.0
    %vm3775 = vcmp.eq.f32.partialorder %v3618, 0.0
    %vm3776 = vcmp.eq.f32.partialorder %v3621, 0.0
    %vm3777 = vcmp.eq.f32.partialorder %v3624, 0.0
    %vm3778 = vcmp.eq.f32.partialorder %v3627, 0.0
    %vm3779 = vcmp.eq.f32.partialorder %v3630, 0.0
    %vm3780 = vcmp.eq.f32.partialorder %v3633, 0.0
    %vm3781 = vcmp.eq.f32.partialorder %v3636, 0.0
    %vm3782 = vcmp.eq.f32.partialorder %v3639, 0.0
    %vm3783 = vcmp.eq.f32.partialorder %v3642, 0.0
    %vm3784 = vcmp.eq.f32.partialorder %v3645, 0.0
    %vm3785 = vcmp.eq.f32.partialorder %v3648, 0.0
    %vm3786 = vcmp.eq.f32.partialorder %v3651, 0.0
    %vm3787 = vcmp.eq.f32.partialorder %v3654, 0.0
    %v3788 = vsel %vm3755, 1.0, %v3558
    %v3789 = vsel %vm3756, 1.0, %v3561
    %v3790 = vsel %vm3757, 1.0, %v3564
    %v3791 = vsel %vm3758, 1.0, %v3567
    %v3792 = vsel %vm3759, 1.0, %v3570
    %v3793 = vsel %vm3760, 1.0, %v3573
    %v3794 = vsel %vm3761, 1.0, %v3576
    %v3795 = vsel %vm3762, 1.0, %v3579
    %v3796 = vsel %vm3763, 1.0, %v3582
    %v3797 = vsel %vm3764, 1.0, %v3585
    %v3798 = vsel %vm3765, 1.0, %v3588
    %v3799 = vsel %vm3766, 1.0, %v3591
    %v3800 = vsel %vm3767, 1.0, %v3594
    %v3801 = vsel %vm3768, 1.0, %v3597
    %v3802 = vsel %vm3769, 1.0, %v3600
    %v3803 = vsel %vm3770, 1.0, %v3603
    %v3804 = vsel %vm3771, 1.0, %v3606
    %v3805 = vsel %vm3772, 1.0, %v3609
    %v3806 = vsel %vm3773, 1.0, %v3612
    %v3807 = vsel %vm3774, 1.0, %v3615
    %v3808 = vsel %vm3775, 1.0, %v3618
    %v3809 = vsel %vm3776, 1.0, %v3621
    %v3810 = vsel %vm3777, 1.0, %v3624
    %v3811 = vsel %vm3778, 1.0, %v3627
    %v3812 = vsel %vm3779, 1.0, %v3630
    %v3813 = vsel %vm3780, 1.0, %v3633
    %v3814 = vsel %vm3781, 1.0, %v3636
    %v3815 = vsel %vm3782, 1.0, %v3639
    %v3816 = vsel %vm3783, 1.0, %v3642
    %v3817 = vsel %vm3784, 1.0, %v3645
    %v3818 = vsel %vm3785, 1.0, %v3648
    %v3819 = vsel %vm3786, 1.0, %v3651
    %v3820 = vsel %vm3787, 1.0, %v3654
    %v3821 = vrcp.pop %v3788
    %v3822 = vrcp.pop %v3789
    %v3823 = vrcp.pop %v3790
    %v3824 = vrcp.pop %v3791
    %v3825 = vrcp.pop %v3792
    %v3826 = vrcp.pop %v3793
    %v3827 = vrcp.pop %v3794
    %v3828 = vrcp.pop %v3795
    %v3829 = vrcp.pop %v3796
    %v3830 = vrcp.pop %v3797
    %v3831 = vrcp.pop %v3798
    %v3832 = vrcp.pop %v3799
    %v3833 = vrcp.pop %v3800
    %v3834 = vrcp.pop %v3801
    %v3835 = vrcp.pop %v3802
    %v3836 = vrcp.pop %v3803
    %v3837 = vrcp.pop %v3804
    %v3838 = vrcp.pop %v3805
    %v3839 = vrcp.pop %v3806
    %v3840 = vrcp.pop %v3807
    %v3841 = vrcp.pop %v3808
    %v3842 = vrcp.pop %v3809
    %v3843 = vrcp.pop %v3810
    %v3844 = vrcp.pop %v3811
    %v3845 = vrcp.pop %v3812
    %v3846 = vrcp.pop %v3813
    %v3847 = vrcp.pop %v3814
    %v3848 = vrcp.pop %v3815
    %v3849 = vrcp.pop %v3816
    %v3850 = vrcp.pop %v3817
    %v3851 = vrcp.pop %v3818
    %v3852 = vrcp.pop %v3819
    %v3853 = vrcp.pop %v3820
    %v3854 = vmul.f32 %v3657, %v3821
    %v3855 = vmul.f32 %v3660, %v3822
    %v3856 = vmul.f32 %v3663, %v3823
    %v3857 = vmul.f32 %v3666, %v3824
    %v3858 = vmul.f32 %v3669, %v3825
    %v3859 = vmul.f32 %v3672, %v3826
    %v3860 = vmul.f32 %v3675, %v3827
    %v3861 = vmul.f32 %v3678, %v3828
    %v3862 = vmul.f32 %v3681, %v3829
    %v3863 = vmul.f32 %v3684, %v3830
    %v3864 = vmul.f32 %v3687, %v3831
    %v3865 = vmul.f32 %v3690, %v3832
    %v3866 = vmul.f32 %v3693, %v3833
    %v3867 = vmul.f32 %v3696, %v3834
    %v3868 = vmul.f32 %v3699, %v3835
    %v3869 = vmul.f32 %v3702, %v3836
    %v3870 = vmul.f32 %v3705, %v3837
    %v3871 = vmul.f32 %v3708, %v3838
    %v3872 = vmul.f32 %v3711, %v3839
    %v3873 = vmul.f32 %v3714, %v3840
    %v3874 = vmul.f32 %v3717, %v3841
    %v3875 = vmul.f32 %v3720, %v3842
    %v3876 = vmul.f32 %v3723, %v3843
    %v3877 = vmul.f32 %v3726, %v3844
    %v3878 = vmul.f32 %v3729, %v3845
    %v3879 = vmul.f32 %v3732, %v3846
    %v3880 = vmul.f32 %v3735, %v3847
    %v3881 = vmul.f32 %v3738, %v3848
    %v3882 = vmul.f32 %v3741, %v3849
    %v3883 = vmul.f32 %v3744, %v3850
    %v3884 = vmul.f32 %v3747, %v3851
    %v3885 = vmul.f32 %v3750, %v3852
    %v3886 = vmul.f32 %v3753, %v3853
    %vm3887 = vcmp.lt.f32.partialorder %v3854, 0.0
    %vm3888 = vcmp.lt.f32.partialorder %v3855, 0.0
    %vm3889 = vcmp.lt.f32.partialorder %v3856, 0.0
    %vm3890 = vcmp.lt.f32.partialorder %v3857, 0.0
    %vm3891 = vcmp.lt.f32.partialorder %v3858, 0.0
    %vm3892 = vcmp.lt.f32.partialorder %v3859, 0.0
    %vm3893 = vcmp.lt.f32.partialorder %v3860, 0.0
    %vm3894 = vcmp.lt.f32.partialorder %v3861, 0.0
    %vm3895 = vcmp.lt.f32.partialorder %v3862, 0.0
    %vm3896 = vcmp.lt.f32.partialorder %v3863, 0.0
    %vm3897 = vcmp.lt.f32.partialorder %v3864, 0.0
    %vm3898 = vcmp.lt.f32.partialorder %v3865, 0.0
    %vm3899 = vcmp.lt.f32.partialorder %v3866, 0.0
    %vm3900 = vcmp.lt.f32.partialorder %v3867, 0.0
    %vm3901 = vcmp.lt.f32.partialorder %v3868, 0.0
    %vm3902 = vcmp.lt.f32.partialorder %v3869, 0.0
    %vm3903 = vcmp.lt.f32.partialorder %v3870, 0.0
    %vm3904 = vcmp.lt.f32.partialorder %v3871, 0.0
    %vm3905 = vcmp.lt.f32.partialorder %v3872, 0.0
    %vm3906 = vcmp.lt.f32.partialorder %v3873, 0.0
    %vm3907 = vcmp.lt.f32.partialorder %v3874, 0.0
    %vm3908 = vcmp.lt.f32.partialorder %v3875, 0.0
    %vm3909 = vcmp.lt.f32.partialorder %v3876, 0.0
    %vm3910 = vcmp.lt.f32.partialorder %v3877, 0.0
    %vm3911 = vcmp.lt.f32.partialorder %v3878, 0.0
    %vm3912 = vcmp.lt.f32.partialorder %v3879, 0.0
    %vm3913 = vcmp.lt.f32.partialorder %v3880, 0.0
    %vm3914 = vcmp.lt.f32.partialorder %v3881, 0.0
    %vm3915 = vcmp.lt.f32.partialorder %v3882, 0.0
    %vm3916 = vcmp.lt.f32.partialorder %v3883, 0.0
    %vm3917 = vcmp.lt.f32.partialorder %v3884, 0.0
    %vm3918 = vcmp.lt.f32.partialorder %v3885, 0.0
    %vm3919 = vcmp.lt.f32.partialorder %v3886, 0.0
    %v3920 = vsel %vm3887, -1.0, 1.0
    %v3921 = vsel %vm3888, -1.0, 1.0
    %v3922 = vsel %vm3889, -1.0, 1.0
    %v3923 = vsel %vm3890, -1.0, 1.0
    %v3924 = vsel %vm3891, -1.0, 1.0
    %v3925 = vsel %vm3892, -1.0, 1.0
    %v3926 = vsel %vm3893, -1.0, 1.0
    %v3927 = vsel %vm3894, -1.0, 1.0
    %v3928 = vsel %vm3895, -1.0, 1.0
    %v3929 = vsel %vm3896, -1.0, 1.0
    %v3930 = vsel %vm3897, -1.0, 1.0
    %v3931 = vsel %vm3898, -1.0, 1.0
    %v3932 = vsel %vm3899, -1.0, 1.0
    %v3933 = vsel %vm3900, -1.0, 1.0
    %v3934 = vsel %vm3901, -1.0, 1.0
    %v3935 = vsel %vm3902, -1.0, 1.0
    %v3936 = vsel %vm3903, -1.0, 1.0
    %v3937 = vsel %vm3904, -1.0, 1.0
    %v3938 = vsel %vm3905, -1.0, 1.0
    %v3939 = vsel %vm3906, -1.0, 1.0
    %v3940 = vsel %vm3907, -1.0, 1.0
    %v3941 = vsel %vm3908, -1.0, 1.0
    %v3942 = vsel %vm3909, -1.0, 1.0
    %v3943 = vsel %vm3910, -1.0, 1.0
    %v3944 = vsel %vm3911, -1.0, 1.0
    %v3945 = vsel %vm3912, -1.0, 1.0
    %v3946 = vsel %vm3913, -1.0, 1.0
    %v3947 = vsel %vm3914, -1.0, 1.0
    %v3948 = vsel %vm3915, -1.0, 1.0
    %v3949 = vsel %vm3916, -1.0, 1.0
    %v3950 = vsel %vm3917, -1.0, 1.0
    %v3951 = vsel %vm3918, -1.0, 1.0
    %v3952 = vsel %vm3919, -1.0, 1.0
    %v3953 = vand.u32 2147483647, %v3854
    %v3954 = vand.u32 2147483647, %v3855
    %v3955 = vand.u32 2147483647, %v3856
    %v3956 = vand.u32 2147483647, %v3857
    %v3957 = vand.u32 2147483647, %v3858
    %v3958 = vand.u32 2147483647, %v3859
    %v3959 = vand.u32 2147483647, %v3860
    %v3960 = vand.u32 2147483647, %v3861
    %v3961 = vand.u32 2147483647, %v3862
    %v3962 = vand.u32 2147483647, %v3863
    %v3963 = vand.u32 2147483647, %v3864
    %v3964 = vand.u32 2147483647, %v3865
    %v3965 = vand.u32 2147483647, %v3866
    %v3966 = vand.u32 2147483647, %v3867
    %v3967 = vand.u32 2147483647, %v3868
    %v3968 = vand.u32 2147483647, %v3869
    %v3969 = vand.u32 2147483647, %v3870
    %v3970 = vand.u32 2147483647, %v3871
    %v3971 = vand.u32 2147483647, %v3872
    %v3972 = vand.u32 2147483647, %v3873
    %v3973 = vand.u32 2147483647, %v3874
    %v3974 = vand.u32 2147483647, %v3875
    %v3975 = vand.u32 2147483647, %v3876
    %v3976 = vand.u32 2147483647, %v3877
    %v3977 = vand.u32 2147483647, %v3878
    %v3978 = vand.u32 2147483647, %v3879
    %v3979 = vand.u32 2147483647, %v3880
    %v3980 = vand.u32 2147483647, %v3881
    %v3981 = vand.u32 2147483647, %v3882
    %v3982 = vand.u32 2147483647, %v3883
    %v3983 = vand.u32 2147483647, %v3884
    %v3984 = vand.u32 2147483647, %v3885
    %v3985 = vand.u32 2147483647, %v3886
    %vm3986 = vcmp.gt.f32.partialorder %v3953, 2.4142137
    %vm3987 = vcmp.gt.f32.partialorder %v3954, 2.4142137
    %vm3988 = vcmp.gt.f32.partialorder %v3955, 2.4142137
    %vm3989 = vcmp.gt.f32.partialorder %v3956, 2.4142137
    %vm3990 = vcmp.gt.f32.partialorder %v3957, 2.4142137
    %vm3991 = vcmp.gt.f32.partialorder %v3958, 2.4142137
    %vm3992 = vcmp.gt.f32.partialorder %v3959, 2.4142137
    %vm3993 = vcmp.gt.f32.partialorder %v3960, 2.4142137
    %vm3994 = vcmp.gt.f32.partialorder %v3961, 2.4142137
    %vm3995 = vcmp.gt.f32.partialorder %v3962, 2.4142137
    %vm3996 = vcmp.gt.f32.partialorder %v3963, 2.4142137
    %vm3997 = vcmp.gt.f32.partialorder %v3964, 2.4142137
    %vm3998 = vcmp.gt.f32.partialorder %v3965, 2.4142137
    %vm3999 = vcmp.gt.f32.partialorder %v3966, 2.4142137
    %vm4000 = vcmp.gt.f32.partialorder %v3967, 2.4142137
    %vm4001 = vcmp.gt.f32.partialorder %v3968, 2.4142137
    %vm4002 = vcmp.gt.f32.partialorder %v3969, 2.4142137
    %vm4003 = vcmp.gt.f32.partialorder %v3970, 2.4142137
    %vm4004 = vcmp.gt.f32.partialorder %v3971, 2.4142137
    %vm4005 = vcmp.gt.f32.partialorder %v3972, 2.4142137
    %vm4006 = vcmp.gt.f32.partialorder %v3973, 2.4142137
    %vm4007 = vcmp.gt.f32.partialorder %v3974, 2.4142137
    %vm4008 = vcmp.gt.f32.partialorder %v3975, 2.4142137
    %vm4009 = vcmp.gt.f32.partialorder %v3976, 2.4142137
    %vm4010 = vcmp.gt.f32.partialorder %v3977, 2.4142137
    %vm4011 = vcmp.gt.f32.partialorder %v3978, 2.4142137
    %vm4012 = vcmp.gt.f32.partialorder %v3979, 2.4142137
    %vm4013 = vcmp.gt.f32.partialorder %v3980, 2.4142137
    %vm4014 = vcmp.gt.f32.partialorder %v3981, 2.4142137
    %vm4015 = vcmp.gt.f32.partialorder %v3982, 2.4142137
    %vm4016 = vcmp.gt.f32.partialorder %v3983, 2.4142137
    %vm4017 = vcmp.gt.f32.partialorder %v3984, 2.4142137
    %vm4018 = vcmp.gt.f32.partialorder %v3985, 2.4142137
    %vm4019 = vcmp.gt.f32.partialorder %v3953, 0.41421357
    %vm4020 = vcmp.gt.f32.partialorder %v3954, 0.41421357
    %vm4021 = vcmp.gt.f32.partialorder %v3955, 0.41421357
    %vm4022 = vcmp.gt.f32.partialorder %v3956, 0.41421357
    %vm4023 = vcmp.gt.f32.partialorder %v3957, 0.41421357
    %vm4024 = vcmp.gt.f32.partialorder %v3958, 0.41421357
    %vm4025 = vcmp.gt.f32.partialorder %v3959, 0.41421357
    %vm4026 = vcmp.gt.f32.partialorder %v3960, 0.41421357
    %vm4027 = vcmp.gt.f32.partialorder %v3961, 0.41421357
    %vm4028 = vcmp.gt.f32.partialorder %v3962, 0.41421357
    %vm4029 = vcmp.gt.f32.partialorder %v3963, 0.41421357
    %vm4030 = vcmp.gt.f32.partialorder %v3964, 0.41421357
    %vm4031 = vcmp.gt.f32.partialorder %v3965, 0.41421357
    %vm4032 = vcmp.gt.f32.partialorder %v3966, 0.41421357
    %vm4033 = vcmp.gt.f32.partialorder %v3967, 0.41421357
    %vm4034 = vcmp.gt.f32.partialorder %v3968, 0.41421357
    %vm4035 = vcmp.gt.f32.partialorder %v3969, 0.41421357
    %vm4036 = vcmp.gt.f32.partialorder %v3970, 0.41421357
    %vm4037 = vcmp.gt.f32.partialorder %v3971, 0.41421357
    %vm4038 = vcmp.gt.f32.partialorder %v3972, 0.41421357
    %vm4039 = vcmp.gt.f32.partialorder %v3973, 0.41421357
    %vm4040 = vcmp.gt.f32.partialorder %v3974, 0.41421357
    %vm4041 = vcmp.gt.f32.partialorder %v3975, 0.41421357
    %vm4042 = vcmp.gt.f32.partialorder %v3976, 0.41421357
    %vm4043 = vcmp.gt.f32.partialorder %v3977, 0.41421357
    %vm4044 = vcmp.gt.f32.partialorder %v3978, 0.41421357
    %vm4045 = vcmp.gt.f32.partialorder %v3979, 0.41421357
    %vm4046 = vcmp.gt.f32.partialorder %v3980, 0.41421357
    %vm4047 = vcmp.gt.f32.partialorder %v3981, 0.41421357
    %vm4048 = vcmp.gt.f32.partialorder %v3982, 0.41421357
    %vm4049 = vcmp.gt.f32.partialorder %v3983, 0.41421357
    %vm4050 = vcmp.gt.f32.partialorder %v3984, 0.41421357
    %vm4051 = vcmp.gt.f32.partialorder %v3985, 0.41421357
    %vm4052 = vmxor %vm3986, 1
    %vm4053 = vmxor %vm3987, 1
    %vm4054 = vmxor %vm3988, 1
    %vm4055 = vmxor %vm3989, 1
    %vm4056 = vmxor %vm3990, 1
    %vm4057 = vmxor %vm3991, 1
    %vm4058 = vmxor %vm3992, 1
    %vm4059 = vmxor %vm3993, 1
    %vm4060 = vmxor %vm3994, 1
    %vm4061 = vmxor %vm3995, 1
    %vm4062 = vmxor %vm3996, 1
    %vm4063 = vmxor %vm3997, 1
    %vm4064 = vmxor %vm3998, 1
    %vm4065 = vmxor %vm3999, 1
    %vm4066 = vmxor %vm4000, 1
    %vm4067 = vmxor %vm4001, 1
    %vm4068 = vmxor %vm4002, 1
    %vm4069 = vmxor %vm4003, 1
    %vm4070 = vmxor %vm4004, 1
    %vm4071 = vmxor %vm4005, 1
    %vm4072 = vmxor %vm4006, 1
    %vm4073 = vmxor %vm4007, 1
    %vm4074 = vmxor %vm4008, 1
    %vm4075 = vmxor %vm4009, 1
    %vm4076 = vmxor %vm4010, 1
    %vm4077 = vmxor %vm4011, 1
    %vm4078 = vmxor %vm4012, 1
    %vm4079 = vmxor %vm4013, 1
    %vm4080 = vmxor %vm4014, 1
    %vm4081 = vmxor %vm4015, 1
    %vm4082 = vmxor %vm4016, 1
    %vm4083 = vmxor %vm4017, 1
    %vm4084 = vmxor %vm4018, 1
    %vm4085 = vmand %vm4019, %vm4052
    %vm4086 = vmand %vm4020, %vm4053
    %vm4087 = vmand %vm4021, %vm4054
    %vm4088 = vmand %vm4022, %vm4055
    %vm4089 = vmand %vm4023, %vm4056
    %vm4090 = vmand %vm4024, %vm4057
    %vm4091 = vmand %vm4025, %vm4058
    %vm4092 = vmand %vm4026, %vm4059
    %vm4093 = vmand %vm4027, %vm4060
    %vm4094 = vmand %vm4028, %vm4061
    %vm4095 = vmand %vm4029, %vm4062
    %vm4096 = vmand %vm4030, %vm4063
    %vm4097 = vmand %vm4031, %vm4064
    %vm4098 = vmand %vm4032, %vm4065
    %vm4099 = vmand %vm4033, %vm4066
    %vm4100 = vmand %vm4034, %vm4067
    %vm4101 = vmand %vm4035, %vm4068
    %vm4102 = vmand %vm4036, %vm4069
    %vm4103 = vmand %vm4037, %vm4070
    %vm4104 = vmand %vm4038, %vm4071
    %vm4105 = vmand %vm4039, %vm4072
    %vm4106 = vmand %vm4040, %vm4073
    %vm4107 = vmand %vm4041, %vm4074
    %vm4108 = vmand %vm4042, %vm4075
    %vm4109 = vmand %vm4043, %vm4076
    %vm4110 = vmand %vm4044, %vm4077
    %vm4111 = vmand %vm4045, %vm4078
    %vm4112 = vmand %vm4046, %vm4079
    %vm4113 = vmand %vm4047, %vm4080
    %vm4114 = vmand %vm4048, %vm4081
    %vm4115 = vmand %vm4049, %vm4082
    %vm4116 = vmand %vm4050, %vm4083
    %vm4117 = vmand %vm4051, %vm4084
    %v4118 = vsub.f32 %v3953, 1.0
    %v4119 = vsub.f32 %v3954, 1.0
    %v4120 = vsub.f32 %v3955, 1.0
    %v4121 = vsub.f32 %v3956, 1.0
    %v4122 = vsub.f32 %v3957, 1.0
    %v4123 = vsub.f32 %v3958, 1.0
    %v4124 = vsub.f32 %v3959, 1.0
    %v4125 = vsub.f32 %v3960, 1.0
    %v4126 = vsub.f32 %v3961, 1.0
    %v4127 = vsub.f32 %v3962, 1.0
    %v4128 = vsub.f32 %v3963, 1.0
    %v4129 = vsub.f32 %v3964, 1.0
    %v4130 = vsub.f32 %v3965, 1.0
    %v4131 = vsub.f32 %v3966, 1.0
    %v4132 = vsub.f32 %v3967, 1.0
    %v4133 = vsub.f32 %v3968, 1.0
    %v4134 = vsub.f32 %v3969, 1.0
    %v4135 = vsub.f32 %v3970, 1.0
    %v4136 = vsub.f32 %v3971, 1.0
    %v4137 = vsub.f32 %v3972, 1.0
    %v4138 = vsub.f32 %v3973, 1.0
    %v4139 = vsub.f32 %v3974, 1.0
    %v4140 = vsub.f32 %v3975, 1.0
    %v4141 = vsub.f32 %v3976, 1.0
    %v4142 = vsub.f32 %v3977, 1.0
    %v4143 = vsub.f32 %v3978, 1.0
    %v4144 = vsub.f32 %v3979, 1.0
    %v4145 = vsub.f32 %v3980, 1.0
    %v4146 = vsub.f32 %v3981, 1.0
    %v4147 = vsub.f32 %v3982, 1.0
    %v4148 = vsub.f32 %v3983, 1.0
    %v4149 = vsub.f32 %v3984, 1.0
    %v4150 = vsub.f32 %v3985, 1.0
    %v4151 = vsel %vm4085, %v4118, %v3953
    %v4152 = vsel %vm4086, %v4119, %v3954
    %v4153 = vsel %vm4087, %v4120, %v3955
    %v4154 = vsel %vm4088, %v4121, %v3956
    %v4155 = vsel %vm4089, %v4122, %v3957
    %v4156 = vsel %vm4090, %v4123, %v3958
    %v4157 = vsel %vm4091, %v4124, %v3959
    %v4158 = vsel %vm4092, %v4125, %v3960
    %v4159 = vsel %vm4093, %v4126, %v3961
    %v4160 = vsel %vm4094, %v4127, %v3962
    %v4161 = vsel %vm4095, %v4128, %v3963
    %v4162 = vsel %vm4096, %v4129, %v3964
    %v4163 = vsel %vm4097, %v4130, %v3965
    %v4164 = vsel %vm4098, %v4131, %v3966
    %v4165 = vsel %vm4099, %v4132, %v3967
    %v4166 = vsel %vm4100, %v4133, %v3968
    %v4167 = vsel %vm4101, %v4134, %v3969
    %v4168 = vsel %vm4102, %v4135, %v3970
    %v4169 = vsel %vm4103, %v4136, %v3971
    %v4170 = vsel %vm4104, %v4137, %v3972
    %v4171 = vsel %vm4105, %v4138, %v3973
    %v4172 = vsel %vm4106, %v4139, %v3974
    %v4173 = vsel %vm4107, %v4140, %v3975
    %v4174 = vsel %vm4108, %v4141, %v3976
    %v4175 = vsel %vm4109, %v4142, %v3977
    %v4176 = vsel %vm4110, %v4143, %v3978
    %v4177 = vsel %vm4111, %v4144, %v3979
    %v4178 = vsel %vm4112, %v4145, %v3980
    %v4179 = vsel %vm4113, %v4146, %v3981
    %v4180 = vsel %vm4114, %v4147, %v3982
    %v4181 = vsel %vm4115, %v4148, %v3983
    %v4182 = vsel %vm4116, %v4149, %v3984
    %v4183 = vsel %vm4117, %v4150, %v3985
    %v4184 = vsel %vm3986, -1.0, %v4151
    %v4185 = vsel %vm3987, -1.0, %v4152
    %v4186 = vsel %vm3988, -1.0, %v4153
    %v4187 = vsel %vm3989, -1.0, %v4154
    %v4188 = vsel %vm3990, -1.0, %v4155
    %v4189 = vsel %vm3991, -1.0, %v4156
    %v4190 = vsel %vm3992, -1.0, %v4157
    %v4191 = vsel %vm3993, -1.0, %v4158
    %v4192 = vsel %vm3994, -1.0, %v4159
    %v4193 = vsel %vm3995, -1.0, %v4160
    %v4194 = vsel %vm3996, -1.0, %v4161
    %v4195 = vsel %vm3997, -1.0, %v4162
    %v4196 = vsel %vm3998, -1.0, %v4163
    %v4197 = vsel %vm3999, -1.0, %v4164
    %v4198 = vsel %vm4000, -1.0, %v4165
    %v4199 = vsel %vm4001, -1.0, %v4166
    %v4200 = vsel %vm4002, -1.0, %v4167
    %v4201 = vsel %vm4003, -1.0, %v4168
    %v4202 = vsel %vm4004, -1.0, %v4169
    %v4203 = vsel %vm4005, -1.0, %v4170
    %v4204 = vsel %vm4006, -1.0, %v4171
    %v4205 = vsel %vm4007, -1.0, %v4172
    %v4206 = vsel %vm4008, -1.0, %v4173
    %v4207 = vsel %vm4009, -1.0, %v4174
    %v4208 = vsel %vm4010, -1.0, %v4175
    %v4209 = vsel %vm4011, -1.0, %v4176
    %v4210 = vsel %vm4012, -1.0, %v4177
    %v4211 = vsel %vm4013, -1.0, %v4178
    %v4212 = vsel %vm4014, -1.0, %v4179
    %v4213 = vsel %vm4015, -1.0, %v4180
    %v4214 = vsel %vm4016, -1.0, %v4181
    %v4215 = vsel %vm4017, -1.0, %v4182
    %v4216 = vsel %vm4018, -1.0, %v4183
    %v4217 = vadd.f32 %v3953, 1.0
    %v4218 = vadd.f32 %v3954, 1.0
    %v4219 = vadd.f32 %v3955, 1.0
    %v4220 = vadd.f32 %v3956, 1.0
    %v4221 = vadd.f32 %v3957, 1.0
    %v4222 = vadd.f32 %v3958, 1.0
    %v4223 = vadd.f32 %v3959, 1.0
    %v4224 = vadd.f32 %v3960, 1.0
    %v4225 = vadd.f32 %v3961, 1.0
    %v4226 = vadd.f32 %v3962, 1.0
    %v4227 = vadd.f32 %v3963, 1.0
    %v4228 = vadd.f32 %v3964, 1.0
    %v4229 = vadd.f32 %v3965, 1.0
    %v4230 = vadd.f32 %v3966, 1.0
    %v4231 = vadd.f32 %v3967, 1.0
    %v4232 = vadd.f32 %v3968, 1.0
    %v4233 = vadd.f32 %v3969, 1.0
    %v4234 = vadd.f32 %v3970, 1.0
    %v4235 = vadd.f32 %v3971, 1.0
    %v4236 = vadd.f32 %v3972, 1.0
    %v4237 = vadd.f32 %v3973, 1.0
    %v4238 = vadd.f32 %v3974, 1.0
    %v4239 = vadd.f32 %v3975, 1.0
    %v4240 = vadd.f32 %v3976, 1.0
    %v4241 = vadd.f32 %v3977, 1.0
    %v4242 = vadd.f32 %v3978, 1.0
    %v4243 = vadd.f32 %v3979, 1.0
    %v4244 = vadd.f32 %v3980, 1.0
    %v4245 = vadd.f32 %v3981, 1.0
    %v4246 = vadd.f32 %v3982, 1.0
    %v4247 = vadd.f32 %v3983, 1.0
    %v4248 = vadd.f32 %v3984, 1.0
    %v4249 = vadd.f32 %v3985, 1.0
    %v4250 = vsel %vm4085, %v4217, 1.0
    %v4251 = vsel %vm4086, %v4218, 1.0
    %v4252 = vsel %vm4087, %v4219, 1.0
    %v4253 = vsel %vm4088, %v4220, 1.0
    %v4254 = vsel %vm4089, %v4221, 1.0
    %v4255 = vsel %vm4090, %v4222, 1.0
    %v4256 = vsel %vm4091, %v4223, 1.0
    %v4257 = vsel %vm4092, %v4224, 1.0
    %v4258 = vsel %vm4093, %v4225, 1.0
    %v4259 = vsel %vm4094, %v4226, 1.0
    %v4260 = vsel %vm4095, %v4227, 1.0
    %v4261 = vsel %vm4096, %v4228, 1.0
    %v4262 = vsel %vm4097, %v4229, 1.0
    %v4263 = vsel %vm4098, %v4230, 1.0
    %v4264 = vsel %vm4099, %v4231, 1.0
    %v4265 = vsel %vm4100, %v4232, 1.0
    %v4266 = vsel %vm4101, %v4233, 1.0
    %v4267 = vsel %vm4102, %v4234, 1.0
    %v4268 = vsel %vm4103, %v4235, 1.0
    %v4269 = vsel %vm4104, %v4236, 1.0
    %v4270 = vsel %vm4105, %v4237, 1.0
    %v4271 = vsel %vm4106, %v4238, 1.0
    %v4272 = vsel %vm4107, %v4239, 1.0
    %v4273 = vsel %vm4108, %v4240, 1.0
    %v4274 = vsel %vm4109, %v4241, 1.0
    %v4275 = vsel %vm4110, %v4242, 1.0
    %v4276 = vsel %vm4111, %v4243, 1.0
    %v4277 = vsel %vm4112, %v4244, 1.0
    %v4278 = vsel %vm4113, %v4245, 1.0
    %v4279 = vsel %vm4114, %v4246, 1.0
    %v4280 = vsel %vm4115, %v4247, 1.0
    %v4281 = vsel %vm4116, %v4248, 1.0
    %v4282 = vsel %vm4117, %v4249, 1.0
    %v4283 = vsel %vm3986, %v3953, %v4250
    %v4284 = vsel %vm3987, %v3954, %v4251
    %v4285 = vsel %vm3988, %v3955, %v4252
    %v4286 = vsel %vm3989, %v3956, %v4253
    %v4287 = vsel %vm3990, %v3957, %v4254
    %v4288 = vsel %vm3991, %v3958, %v4255
    %v4289 = vsel %vm3992, %v3959, %v4256
    %v4290 = vsel %vm3993, %v3960, %v4257
    %v4291 = vsel %vm3994, %v3961, %v4258
    %v4292 = vsel %vm3995, %v3962, %v4259
    %v4293 = vsel %vm3996, %v3963, %v4260
    %v4294 = vsel %vm3997, %v3964, %v4261
    %v4295 = vsel %vm3998, %v3965, %v4262
    %v4296 = vsel %vm3999, %v3966, %v4263
    %v4297 = vsel %vm4000, %v3967, %v4264
    %v4298 = vsel %vm4001, %v3968, %v4265
    %v4299 = vsel %vm4002, %v3969, %v4266
    %v4300 = vsel %vm4003, %v3970, %v4267
    %v4301 = vsel %vm4004, %v3971, %v4268
    %v4302 = vsel %vm4005, %v3972, %v4269
    %v4303 = vsel %vm4006, %v3973, %v4270
    %v4304 = vsel %vm4007, %v3974, %v4271
    %v4305 = vsel %vm4008, %v3975, %v4272
    %v4306 = vsel %vm4009, %v3976, %v4273
    %v4307 = vsel %vm4010, %v3977, %v4274
    %v4308 = vsel %vm4011, %v3978, %v4275
    %v4309 = vsel %vm4012, %v3979, %v4276
    %v4310 = vsel %vm4013, %v3980, %v4277
    %v4311 = vsel %vm4014, %v3981, %v4278
    %v4312 = vsel %vm4015, %v3982, %v4279
    %v4313 = vsel %vm4016, %v3983, %v4280
    %v4314 = vsel %vm4017, %v3984, %v4281
    %v4315 = vsel %vm4018, %v3985, %v4282
    %v4316 = vrcp.pop %v4283
    %v4317 = vrcp.pop %v4284
    %v4318 = vrcp.pop %v4285
    %v4319 = vrcp.pop %v4286
    %v4320 = vrcp.pop %v4287
    %v4321 = vrcp.pop %v4288
    %v4322 = vrcp.pop %v4289
    %v4323 = vrcp.pop %v4290
    %v4324 = vrcp.pop %v4291
    %v4325 = vrcp.pop %v4292
    %v4326 = vrcp.pop %v4293
    %v4327 = vrcp.pop %v4294
    %v4328 = vrcp.pop %v4295
    %v4329 = vrcp.pop %v4296
    %v4330 = vrcp.pop %v4297
    %v4331 = vrcp.pop %v4298
    %v4332 = vrcp.pop %v4299
    %v4333 = vrcp.pop %v4300
    %v4334 = vrcp.pop %v4301
    %v4335 = vrcp.pop %v4302
    %v4336 = vrcp.pop %v4303
    %v4337 = vrcp.pop %v4304
    %v4338 = vrcp.pop %v4305
    %v4339 = vrcp.pop %v4306
    %v4340 = vrcp.pop %v4307
    %v4341 = vrcp.pop %v4308
    %v4342 = vrcp.pop %v4309
    %v4343 = vrcp.pop %v4310
    %v4344 = vrcp.pop %v4311
    %v4345 = vrcp.pop %v4312
    %v4346 = vrcp.pop %v4313
    %v4347 = vrcp.pop %v4314
    %v4348 = vrcp.pop %v4315
    %v4349 = vmul.f32 %v4184, %v4316
    %v4350 = vmul.f32 %v4185, %v4317
    %v4351 = vmul.f32 %v4186, %v4318
    %v4352 = vmul.f32 %v4187, %v4319
    %v4353 = vmul.f32 %v4188, %v4320
    %v4354 = vmul.f32 %v4189, %v4321
    %v4355 = vmul.f32 %v4190, %v4322
    %v4356 = vmul.f32 %v4191, %v4323
    %v4357 = vmul.f32 %v4192, %v4324
    %v4358 = vmul.f32 %v4193, %v4325
    %v4359 = vmul.f32 %v4194, %v4326
    %v4360 = vmul.f32 %v4195, %v4327
    %v4361 = vmul.f32 %v4196, %v4328
    %v4362 = vmul.f32 %v4197, %v4329
    %v4363 = vmul.f32 %v4198, %v4330
    %v4364 = vmul.f32 %v4199, %v4331
    %v4365 = vmul.f32 %v4200, %v4332
    %v4366 = vmul.f32 %v4201, %v4333
    %v4367 = vmul.f32 %v4202, %v4334
    %v4368 = vmul.f32 %v4203, %v4335
    %v4369 = vmul.f32 %v4204, %v4336
    %v4370 = vmul.f32 %v4205, %v4337
    %v4371 = vmul.f32 %v4206, %v4338
    %v4372 = vmul.f32 %v4207, %v4339
    %v4373 = vmul.f32 %v4208, %v4340
    %v4374 = vmul.f32 %v4209, %v4341
    %v4375 = vmul.f32 %v4210, %v4342
    %v4376 = vmul.f32 %v4211, %v4343
    %v4377 = vmul.f32 %v4212, %v4344
    %v4378 = vmul.f32 %v4213, %v4345
    %v4379 = vmul.f32 %v4214, %v4346
    %v4380 = vmul.f32 %v4215, %v4347
    %v4381 = vmul.f32 %v4216, %v4348
    %v4382 = vsel %vm4085, 0.7853982, 0.0
    %v4383 = vsel %vm4086, 0.7853982, 0.0
    %v4384 = vsel %vm4087, 0.7853982, 0.0
    %v4385 = vsel %vm4088, 0.7853982, 0.0
    %v4386 = vsel %vm4089, 0.7853982, 0.0
    %v4387 = vsel %vm4090, 0.7853982, 0.0
    %v4388 = vsel %vm4091, 0.7853982, 0.0
    %v4389 = vsel %vm4092, 0.7853982, 0.0
    %v4390 = vsel %vm4093, 0.7853982, 0.0
    %v4391 = vsel %vm4094, 0.7853982, 0.0
    %v4392 = vsel %vm4095, 0.7853982, 0.0
    %v4393 = vsel %vm4096, 0.7853982, 0.0
    %v4394 = vsel %vm4097, 0.7853982, 0.0
    %v4395 = vsel %vm4098, 0.7853982, 0.0
    %v4396 = vsel %vm4099, 0.7853982, 0.0
    %v4397 = vsel %vm4100, 0.7853982, 0.0
    %v4398 = vsel %vm4101, 0.7853982, 0.0
    %v4399 = vsel %vm4102, 0.7853982, 0.0
    %v4400 = vsel %vm4103, 0.7853982, 0.0
    %v4401 = vsel %vm4104, 0.7853982, 0.0
    %v4402 = vsel %vm4105, 0.7853982, 0.0
    %v4403 = vsel %vm4106, 0.7853982, 0.0
    %v4404 = vsel %vm4107, 0.7853982, 0.0
    %v4405 = vsel %vm4108, 0.7853982, 0.0
    %v4406 = vsel %vm4109, 0.7853982, 0.0
    %v4407 = vsel %vm4110, 0.7853982, 0.0
    %v4408 = vsel %vm4111, 0.7853982, 0.0
    %v4409 = vsel %vm4112, 0.7853982, 0.0
    %v4410 = vsel %vm4113, 0.7853982, 0.0
    %v4411 = vsel %vm4114, 0.7853982, 0.0
    %v4412 = vsel %vm4115, 0.7853982, 0.0
    %v4413 = vsel %vm4116, 0.7853982, 0.0
    %v4414 = vsel %vm4117, 0.7853982, 0.0
    %v4415 = vsel %vm3986, 1.5707964, %v4382
    %v4416 = vsel %vm3987, 1.5707964, %v4383
    %v4417 = vsel %vm3988, 1.5707964, %v4384
    %v4418 = vsel %vm3989, 1.5707964, %v4385
    %v4419 = vsel %vm3990, 1.5707964, %v4386
    %v4420 = vsel %vm3991, 1.5707964, %v4387
    %v4421 = vsel %vm3992, 1.5707964, %v4388
    %v4422 = vsel %vm3993, 1.5707964, %v4389
    %v4423 = vsel %vm3994, 1.5707964, %v4390
    %v4424 = vsel %vm3995, 1.5707964, %v4391
    %v4425 = vsel %vm3996, 1.5707964, %v4392
    %v4426 = vsel %vm3997, 1.5707964, %v4393
    %v4427 = vsel %vm3998, 1.5707964, %v4394
    %v4428 = vsel %vm3999, 1.5707964, %v4395
    %v4429 = vsel %vm4000, 1.5707964, %v4396
    %v4430 = vsel %vm4001, 1.5707964, %v4397
    %v4431 = vsel %vm4002, 1.5707964, %v4398
    %v4432 = vsel %vm4003, 1.5707964, %v4399
    %v4433 = vsel %vm4004, 1.5707964, %v4400
    %v4434 = vsel %vm4005, 1.5707964, %v4401
    %v4435 = vsel %vm4006, 1.5707964, %v4402
    %v4436 = vsel %vm4007, 1.5707964, %v4403
    %v4437 = vsel %vm4008, 1.5707964, %v4404
    %v4438 = vsel %vm4009, 1.5707964, %v4405
    %v4439 = vsel %vm4010, 1.5707964, %v4406
    %v4440 = vsel %vm4011, 1.5707964, %v4407
    %v4441 = vsel %vm4012, 1.5707964, %v4408
    %v4442 = vsel %vm4013, 1.5707964, %v4409
    %v4443 = vsel %vm4014, 1.5707964, %v4410
    %v4444 = vsel %vm4015, 1.5707964, %v4411
    %v4445 = vsel %vm4016, 1.5707964, %v4412
    %v4446 = vsel %vm4017, 1.5707964, %v4413
    %v4447 = vsel %vm4018, 1.5707964, %v4414
    %v4448 = vmul.f32 %v4349, %v4349
    %v4449 = vmul.f32 %v4350, %v4350
    %v4450 = vmul.f32 %v4351, %v4351
    %v4451 = vmul.f32 %v4352, %v4352
    %v4452 = vmul.f32 %v4353, %v4353
    %v4453 = vmul.f32 %v4354, %v4354
    %v4454 = vmul.f32 %v4355, %v4355
    %v4455 = vmul.f32 %v4356, %v4356
    %v4456 = vmul.f32 %v4357, %v4357
    %v4457 = vmul.f32 %v4358, %v4358
    %v4458 = vmul.f32 %v4359, %v4359
    %v4459 = vmul.f32 %v4360, %v4360
    %v4460 = vmul.f32 %v4361, %v4361
    %v4461 = vmul.f32 %v4362, %v4362
    %v4462 = vmul.f32 %v4363, %v4363
    %v4463 = vmul.f32 %v4364, %v4364
    %v4464 = vmul.f32 %v4365, %v4365
    %v4465 = vmul.f32 %v4366, %v4366
    %v4466 = vmul.f32 %v4367, %v4367
    %v4467 = vmul.f32 %v4368, %v4368
    %v4468 = vmul.f32 %v4369, %v4369
    %v4469 = vmul.f32 %v4370, %v4370
    %v4470 = vmul.f32 %v4371, %v4371
    %v4471 = vmul.f32 %v4372, %v4372
    %v4472 = vmul.f32 %v4373, %v4373
    %v4473 = vmul.f32 %v4374, %v4374
    %v4474 = vmul.f32 %v4375, %v4375
    %v4475 = vmul.f32 %v4376, %v4376
    %v4476 = vmul.f32 %v4377, %v4377
    %v4477 = vmul.f32 %v4378, %v4378
    %v4478 = vmul.f32 %v4379, %v4379
    %v4479 = vmul.f32 %v4380, %v4380
    %v4480 = vmul.f32 %v4381, %v4381
    %v4481 = vmul.f32 %v4448, 0.080537446
    %v4482 = vmul.f32 %v4449, 0.080537446
    %v4483 = vmul.f32 %v4450, 0.080537446
    %v4484 = vmul.f32 %v4451, 0.080537446
    %v4485 = vmul.f32 %v4452, 0.080537446
    %v4486 = vmul.f32 %v4453, 0.080537446
    %v4487 = vmul.f32 %v4454, 0.080537446
    %v4488 = vmul.f32 %v4455, 0.080537446
    %v4489 = vmul.f32 %v4456, 0.080537446
    %v4490 = vmul.f32 %v4457, 0.080537446
    %v4491 = vmul.f32 %v4458, 0.080537446
    %v4492 = vmul.f32 %v4459, 0.080537446
    %v4493 = vmul.f32 %v4460, 0.080537446
    %v4494 = vmul.f32 %v4461, 0.080537446
    %v4495 = vmul.f32 %v4462, 0.080537446
    %v4496 = vmul.f32 %v4463, 0.080537446
    %v4497 = vmul.f32 %v4464, 0.080537446
    %v4498 = vmul.f32 %v4465, 0.080537446
    %v4499 = vmul.f32 %v4466, 0.080537446
    %v4500 = vmul.f32 %v4467, 0.080537446
    %v4501 = vmul.f32 %v4468, 0.080537446
    %v4502 = vmul.f32 %v4469, 0.080537446
    %v4503 = vmul.f32 %v4470, 0.080537446
    %v4504 = vmul.f32 %v4471, 0.080537446
    %v4505 = vmul.f32 %v4472, 0.080537446
    %v4506 = vmul.f32 %v4473, 0.080537446
    %v4507 = vmul.f32 %v4474, 0.080537446
    %v4508 = vmul.f32 %v4475, 0.080537446
    %v4509 = vmul.f32 %v4476, 0.080537446
    %v4510 = vmul.f32 %v4477, 0.080537446
    %v4511 = vmul.f32 %v4478, 0.080537446
    %v4512 = vmul.f32 %v4479, 0.080537446
    %v4513 = vmul.f32 %v4480, 0.080537446
    %v4514 = vsub.f32 %v4481, 0.13877685
    %v4515 = vsub.f32 %v4482, 0.13877685
    %v4516 = vsub.f32 %v4483, 0.13877685
    %v4517 = vsub.f32 %v4484, 0.13877685
    %v4518 = vsub.f32 %v4485, 0.13877685
    %v4519 = vsub.f32 %v4486, 0.13877685
    %v4520 = vsub.f32 %v4487, 0.13877685
    %v4521 = vsub.f32 %v4488, 0.13877685
    %v4522 = vsub.f32 %v4489, 0.13877685
    %v4523 = vsub.f32 %v4490, 0.13877685
    %v4524 = vsub.f32 %v4491, 0.13877685
    %v4525 = vsub.f32 %v4492, 0.13877685
    %v4526 = vsub.f32 %v4493, 0.13877685
    %v4527 = vsub.f32 %v4494, 0.13877685
    %v4528 = vsub.f32 %v4495, 0.13877685
    %v4529 = vsub.f32 %v4496, 0.13877685
    %v4530 = vsub.f32 %v4497, 0.13877685
    %v4531 = vsub.f32 %v4498, 0.13877685
    %v4532 = vsub.f32 %v4499, 0.13877685
    %v4533 = vsub.f32 %v4500, 0.13877685
    %v4534 = vsub.f32 %v4501, 0.13877685
    %v4535 = vsub.f32 %v4502, 0.13877685
    %v4536 = vsub.f32 %v4503, 0.13877685
    %v4537 = vsub.f32 %v4504, 0.13877685
    %v4538 = vsub.f32 %v4505, 0.13877685
    %v4539 = vsub.f32 %v4506, 0.13877685
    %v4540 = vsub.f32 %v4507, 0.13877685
    %v4541 = vsub.f32 %v4508, 0.13877685
    %v4542 = vsub.f32 %v4509, 0.13877685
    %v4543 = vsub.f32 %v4510, 0.13877685
    %v4544 = vsub.f32 %v4511, 0.13877685
    %v4545 = vsub.f32 %v4512, 0.13877685
    %v4546 = vsub.f32 %v4513, 0.13877685
    %v4547 = vmul.f32 %v4514, %v4448
    %v4548 = vmul.f32 %v4515, %v4449
    %v4549 = vmul.f32 %v4516, %v4450
    %v4550 = vmul.f32 %v4517, %v4451
    %v4551 = vmul.f32 %v4518, %v4452
    %v4552 = vmul.f32 %v4519, %v4453
    %v4553 = vmul.f32 %v4520, %v4454
    %v4554 = vmul.f32 %v4521, %v4455
    %v4555 = vmul.f32 %v4522, %v4456
    %v4556 = vmul.f32 %v4523, %v4457
    %v4557 = vmul.f32 %v4524, %v4458
    %v4558 = vmul.f32 %v4525, %v4459
    %v4559 = vmul.f32 %v4526, %v4460
    %v4560 = vmul.f32 %v4527, %v4461
    %v4561 = vmul.f32 %v4528, %v4462
    %v4562 = vmul.f32 %v4529, %v4463
    %v4563 = vmul.f32 %v4530, %v4464
    %v4564 = vmul.f32 %v4531, %v4465
    %v4565 = vmul.f32 %v4532, %v4466
    %v4566 = vmul.f32 %v4533, %v4467
    %v4567 = vmul.f32 %v4534, %v4468
    %v4568 = vmul.f32 %v4535, %v4469
    %v4569 = vmul.f32 %v4536, %v4470
    %v4570 = vmul.f32 %v4537, %v4471
    %v4571 = vmul.f32 %v4538, %v4472
    %v4572 = vmul.f32 %v4539, %v4473
    %v4573 = vmul.f32 %v4540, %v4474
    %v4574 = vmul.f32 %v4541, %v4475
    %v4575 = vmul.f32 %v4542, %v4476
    %v4576 = vmul.f32 %v4543, %v4477
    %v4577 = vmul.f32 %v4544, %v4478
    %v4578 = vmul.f32 %v4545, %v4479
    %v4579 = vmul.f32 %v4546, %v4480
    %v4580 = vadd.f32 %v4547, 0.19977711
    %v4581 = vadd.f32 %v4548, 0.19977711
    %v4582 = vadd.f32 %v4549, 0.19977711
    %v4583 = vadd.f32 %v4550, 0.19977711
    %v4584 = vadd.f32 %v4551, 0.19977711
    %v4585 = vadd.f32 %v4552, 0.19977711
    %v4586 = vadd.f32 %v4553, 0.19977711
    %v4587 = vadd.f32 %v4554, 0.19977711
    %v4588 = vadd.f32 %v4555, 0.19977711
    %v4589 = vadd.f32 %v4556, 0.19977711
    %v4590 = vadd.f32 %v4557, 0.19977711
    %v4591 = vadd.f32 %v4558, 0.19977711
    %v4592 = vadd.f32 %v4559, 0.19977711
    %v4593 = vadd.f32 %v4560, 0.19977711
    %v4594 = vadd.f32 %v4561, 0.19977711
    %v4595 = vadd.f32 %v4562, 0.19977711
    %v4596 = vadd.f32 %v4563, 0.19977711
    %v4597 = vadd.f32 %v4564, 0.19977711
    %v4598 = vadd.f32 %v4565, 0.19977711
    %v4599 = vadd.f32 %v4566, 0.19977711
    %v4600 = vadd.f32 %v4567, 0.19977711
    %v4601 = vadd.f32 %v4568, 0.19977711
    %v4602 = vadd.f32 %v4569, 0.19977711
    %v4603 = vadd.f32 %v4570, 0.19977711
    %v4604 = vadd.f32 %v4571, 0.19977711
    %v4605 = vadd.f32 %v4572, 0.19977711
    %v4606 = vadd.f32 %v4573, 0.19977711
    %v4607 = vadd.f32 %v4574, 0.19977711
    %v4608 = vadd.f32 %v4575, 0.19977711
    %v4609 = vadd.f32 %v4576, 0.19977711
    %v4610 = vadd.f32 %v4577, 0.19977711
    %v4611 = vadd.f32 %v4578, 0.19977711
    %v4612 = vadd.f32 %v4579, 0.19977711
    %v4613 = vmul.f32 %v4580, %v4448
    %v4614 = vmul.f32 %v4581, %v4449
    %v4615 = vmul.f32 %v4582, %v4450
    %v4616 = vmul.f32 %v4583, %v4451
    %v4617 = vmul.f32 %v4584, %v4452
    %v4618 = vmul.f32 %v4585, %v4453
    %v4619 = vmul.f32 %v4586, %v4454
    %v4620 = vmul.f32 %v4587, %v4455
    %v4621 = vmul.f32 %v4588, %v4456
    %v4622 = vmul.f32 %v4589, %v4457
    %v4623 = vmul.f32 %v4590, %v4458
    %v4624 = vmul.f32 %v4591, %v4459
    %v4625 = vmul.f32 %v4592, %v4460
    %v4626 = vmul.f32 %v4593, %v4461
    %v4627 = vmul.f32 %v4594, %v4462
    %v4628 = vmul.f32 %v4595, %v4463
    %v4629 = vmul.f32 %v4596, %v4464
    %v4630 = vmul.f32 %v4597, %v4465
    %v4631 = vmul.f32 %v4598, %v4466
    %v4632 = vmul.f32 %v4599, %v4467
    %v4633 = vmul.f32 %v4600, %v4468
    %v4634 = vmul.f32 %v4601, %v4469
    %v4635 = vmul.f32 %v4602, %v4470
    %v4636 = vmul.f32 %v4603, %v4471
    %v4637 = vmul.f32 %v4604, %v4472
    %v4638 = vmul.f32 %v4605, %v4473
    %v4639 = vmul.f32 %v4606, %v4474
    %v4640 = vmul.f32 %v4607, %v4475
    %v4641 = vmul.f32 %v4608, %v4476
    %v4642 = vmul.f32 %v4609, %v4477
    %v4643 = vmul.f32 %v4610, %v4478
    %v4644 = vmul.f32 %v4611, %v4479
    %v4645 = vmul.f32 %v4612, %v4480
    %v4646 = vsub.f32 %v4613, 0.3333295
    %v4647 = vsub.f32 %v4614, 0.3333295
    %v4648 = vsub.f32 %v4615, 0.3333295
    %v4649 = vsub.f32 %v4616, 0.3333295
    %v4650 = vsub.f32 %v4617, 0.3333295
    %v4651 = vsub.f32 %v4618, 0.3333295
    %v4652 = vsub.f32 %v4619, 0.3333295
    %v4653 = vsub.f32 %v4620, 0.3333295
    %v4654 = vsub.f32 %v4621, 0.3333295
    %v4655 = vsub.f32 %v4622, 0.3333295
    %v4656 = vsub.f32 %v4623, 0.3333295
    %v4657 = vsub.f32 %v4624, 0.3333295
    %v4658 = vsub.f32 %v4625, 0.3333295
    %v4659 = vsub.f32 %v4626, 0.3333295
    %v4660 = vsub.f32 %v4627, 0.3333295
    %v4661 = vsub.f32 %v4628, 0.3333295
    %v4662 = vsub.f32 %v4629, 0.3333295
    %v4663 = vsub.f32 %v4630, 0.3333295
    %v4664 = vsub.f32 %v4631, 0.3333295
    %v4665 = vsub.f32 %v4632, 0.3333295
    %v4666 = vsub.f32 %v4633, 0.3333295
    %v4667 = vsub.f32 %v4634, 0.3333295
    %v4668 = vsub.f32 %v4635, 0.3333295
    %v4669 = vsub.f32 %v4636, 0.3333295
    %v4670 = vsub.f32 %v4637, 0.3333295
    %v4671 = vsub.f32 %v4638, 0.3333295
    %v4672 = vsub.f32 %v4639, 0.3333295
    %v4673 = vsub.f32 %v4640, 0.3333295
    %v4674 = vsub.f32 %v4641, 0.3333295
    %v4675 = vsub.f32 %v4642, 0.3333295
    %v4676 = vsub.f32 %v4643, 0.3333295
    %v4677 = vsub.f32 %v4644, 0.3333295
    %v4678 = vsub.f32 %v4645, 0.3333295
    %v4679 = vmul.f32 %v4646, %v4448
    %v4680 = vmul.f32 %v4647, %v4449
    %v4681 = vmul.f32 %v4648, %v4450
    %v4682 = vmul.f32 %v4649, %v4451
    %v4683 = vmul.f32 %v4650, %v4452
    %v4684 = vmul.f32 %v4651, %v4453
    %v4685 = vmul.f32 %v4652, %v4454
    %v4686 = vmul.f32 %v4653, %v4455
    %v4687 = vmul.f32 %v4654, %v4456
    %v4688 = vmul.f32 %v4655, %v4457
    %v4689 = vmul.f32 %v4656, %v4458
    %v4690 = vmul.f32 %v4657, %v4459
    %v4691 = vmul.f32 %v4658, %v4460
    %v4692 = vmul.f32 %v4659, %v4461
    %v4693 = vmul.f32 %v4660, %v4462
    %v4694 = vmul.f32 %v4661, %v4463
    %v4695 = vmul.f32 %v4662, %v4464
    %v4696 = vmul.f32 %v4663, %v4465
    %v4697 = vmul.f32 %v4664, %v4466
    %v4698 = vmul.f32 %v4665, %v4467
    %v4699 = vmul.f32 %v4666, %v4468
    %v4700 = vmul.f32 %v4667, %v4469
    %v4701 = vmul.f32 %v4668, %v4470
    %v4702 = vmul.f32 %v4669, %v4471
    %v4703 = vmul.f32 %v4670, %v4472
    %v4704 = vmul.f32 %v4671, %v4473
    %v4705 = vmul.f32 %v4672, %v4474
    %v4706 = vmul.f32 %v4673, %v4475
    %v4707 = vmul.f32 %v4674, %v4476
    %v4708 = vmul.f32 %v4675, %v4477
    %v4709 = vmul.f32 %v4676, %v4478
    %v4710 = vmul.f32 %v4677, %v4479
    %v4711 = vmul.f32 %v4678, %v4480
    %v4712 = vmul.f32 %v4679, %v4349
    %v4713 = vmul.f32 %v4680, %v4350
    %v4714 = vmul.f32 %v4681, %v4351
    %v4715 = vmul.f32 %v4682, %v4352
    %v4716 = vmul.f32 %v4683, %v4353
    %v4717 = vmul.f32 %v4684, %v4354
    %v4718 = vmul.f32 %v4685, %v4355
    %v4719 = vmul.f32 %v4686, %v4356
    %v4720 = vmul.f32 %v4687, %v4357
    %v4721 = vmul.f32 %v4688, %v4358
    %v4722 = vmul.f32 %v4689, %v4359
    %v4723 = vmul.f32 %v4690, %v4360
    %v4724 = vmul.f32 %v4691, %v4361
    %v4725 = vmul.f32 %v4692, %v4362
    %v4726 = vmul.f32 %v4693, %v4363
    %v4727 = vmul.f32 %v4694, %v4364
    %v4728 = vmul.f32 %v4695, %v4365
    %v4729 = vmul.f32 %v4696, %v4366
    %v4730 = vmul.f32 %v4697, %v4367
    %v4731 = vmul.f32 %v4698, %v4368
    %v4732 = vmul.f32 %v4699, %v4369
    %v4733 = vmul.f32 %v4700, %v4370
    %v4734 = vmul.f32 %v4701, %v4371
    %v4735 = vmul.f32 %v4702, %v4372
    %v4736 = vmul.f32 %v4703, %v4373
    %v4737 = vmul.f32 %v4704, %v4374
    %v4738 = vmul.f32 %v4705, %v4375
    %v4739 = vmul.f32 %v4706, %v4376
    %v4740 = vmul.f32 %v4707, %v4377
    %v4741 = vmul.f32 %v4708, %v4378
    %v4742 = vmul.f32 %v4709, %v4379
    %v4743 = vmul.f32 %v4710, %v4380
    %v4744 = vmul.f32 %v4711, %v4381
    %v4745 = vadd.f32 %v4712, %v4349
    %v4746 = vadd.f32 %v4713, %v4350
    %v4747 = vadd.f32 %v4714, %v4351
    %v4748 = vadd.f32 %v4715, %v4352
    %v4749 = vadd.f32 %v4716, %v4353
    %v4750 = vadd.f32 %v4717, %v4354
    %v4751 = vadd.f32 %v4718, %v4355
    %v4752 = vadd.f32 %v4719, %v4356
    %v4753 = vadd.f32 %v4720, %v4357
    %v4754 = vadd.f32 %v4721, %v4358
    %v4755 = vadd.f32 %v4722, %v4359
    %v4756 = vadd.f32 %v4723, %v4360
    %v4757 = vadd.f32 %v4724, %v4361
    %v4758 = vadd.f32 %v4725, %v4362
    %v4759 = vadd.f32 %v4726, %v4363
    %v4760 = vadd.f32 %v4727, %v4364
    %v4761 = vadd.f32 %v4728, %v4365
    %v4762 = vadd.f32 %v4729, %v4366
    %v4763 = vadd.f32 %v4730, %v4367
    %v4764 = vadd.f32 %v4731, %v4368
    %v4765 = vadd.f32 %v4732, %v4369
    %v4766 = vadd.f32 %v4733, %v4370
    %v4767 = vadd.f32 %v4734, %v4371
    %v4768 = vadd.f32 %v4735, %v4372
    %v4769 = vadd.f32 %v4736, %v4373
    %v4770 = vadd.f32 %v4737, %v4374
    %v4771 = vadd.f32 %v4738, %v4375
    %v4772 = vadd.f32 %v4739, %v4376
    %v4773 = vadd.f32 %v4740, %v4377
    %v4774 = vadd.f32 %v4741, %v4378
    %v4775 = vadd.f32 %v4742, %v4379
    %v4776 = vadd.f32 %v4743, %v4380
    %v4777 = vadd.f32 %v4744, %v4381
    %v4778 = vadd.f32 %v4415, %v4745
    %v4779 = vadd.f32 %v4416, %v4746
    %v4780 = vadd.f32 %v4417, %v4747
    %v4781 = vadd.f32 %v4418, %v4748
    %v4782 = vadd.f32 %v4419, %v4749
    %v4783 = vadd.f32 %v4420, %v4750
    %v4784 = vadd.f32 %v4421, %v4751
    %v4785 = vadd.f32 %v4422, %v4752
    %v4786 = vadd.f32 %v4423, %v4753
    %v4787 = vadd.f32 %v4424, %v4754
    %v4788 = vadd.f32 %v4425, %v4755
    %v4789 = vadd.f32 %v4426, %v4756
    %v4790 = vadd.f32 %v4427, %v4757
    %v4791 = vadd.f32 %v4428, %v4758
    %v4792 = vadd.f32 %v4429, %v4759
    %v4793 = vadd.f32 %v4430, %v4760
    %v4794 = vadd.f32 %v4431, %v4761
    %v4795 = vadd.f32 %v4432, %v4762
    %v4796 = vadd.f32 %v4433, %v4763
    %v4797 = vadd.f32 %v4434, %v4764
    %v4798 = vadd.f32 %v4435, %v4765
    %v4799 = vadd.f32 %v4436, %v4766
    %v4800 = vadd.f32 %v4437, %v4767
    %v4801 = vadd.f32 %v4438, %v4768
    %v4802 = vadd.f32 %v4439, %v4769
    %v4803 = vadd.f32 %v4440, %v4770
    %v4804 = vadd.f32 %v4441, %v4771
    %v4805 = vadd.f32 %v4442, %v4772
    %v4806 = vadd.f32 %v4443, %v4773
    %v4807 = vadd.f32 %v4444, %v4774
    %v4808 = vadd.f32 %v4445, %v4775
    %v4809 = vadd.f32 %v4446, %v4776
    %v4810 = vadd.f32 %v4447, %v4777
    %v4811 = vmul.f32 %v3920, %v4778
    %v4812 = vmul.f32 %v3921, %v4779
    %v4813 = vmul.f32 %v3922, %v4780
    %v4814 = vmul.f32 %v3923, %v4781
    %v4815 = vmul.f32 %v3924, %v4782
    %v4816 = vmul.f32 %v3925, %v4783
    %v4817 = vmul.f32 %v3926, %v4784
    %v4818 = vmul.f32 %v3927, %v4785
    %v4819 = vmul.f32 %v3928, %v4786
    %v4820 = vmul.f32 %v3929, %v4787
    %v4821 = vmul.f32 %v3930, %v4788
    %v4822 = vmul.f32 %v3931, %v4789
    %v4823 = vmul.f32 %v3932, %v4790
    %v4824 = vmul.f32 %v3933, %v4791
    %v4825 = vmul.f32 %v3934, %v4792
    %v4826 = vmul.f32 %v3935, %v4793
    %v4827 = vmul.f32 %v3936, %v4794
    %v4828 = vmul.f32 %v3937, %v4795
    %v4829 = vmul.f32 %v3938, %v4796
    %v4830 = vmul.f32 %v3939, %v4797
    %v4831 = vmul.f32 %v3940, %v4798
    %v4832 = vmul.f32 %v3941, %v4799
    %v4833 = vmul.f32 %v3942, %v4800
    %v4834 = vmul.f32 %v3943, %v4801
    %v4835 = vmul.f32 %v3944, %v4802
    %v4836 = vmul.f32 %v3945, %v4803
    %v4837 = vmul.f32 %v3946, %v4804
    %v4838 = vmul.f32 %v3947, %v4805
    %v4839 = vmul.f32 %v3948, %v4806
    %v4840 = vmul.f32 %v3949, %v4807
    %v4841 = vmul.f32 %v3950, %v4808
    %v4842 = vmul.f32 %v3951, %v4809
    %v4843 = vmul.f32 %v3952, %v4810
    %vm4844 = vcmp.lt.f32.partialorder %v3558, 0.0
    %vm4845 = vcmp.lt.f32.partialorder %v3561, 0.0
    %vm4846 = vcmp.lt.f32.partialorder %v3564, 0.0
    %vm4847 = vcmp.lt.f32.partialorder %v3567, 0.0
    %vm4848 = vcmp.lt.f32.partialorder %v3570, 0.0
    %vm4849 = vcmp.lt.f32.partialorder %v3573, 0.0
    %vm4850 = vcmp.lt.f32.partialorder %v3576, 0.0
    %vm4851 = vcmp.lt.f32.partialorder %v3579, 0.0
    %vm4852 = vcmp.lt.f32.partialorder %v3582, 0.0
    %vm4853 = vcmp.lt.f32.partialorder %v3585, 0.0
    %vm4854 = vcmp.lt.f32.partialorder %v3588, 0.0
    %vm4855 = vcmp.lt.f32.partialorder %v3591, 0.0
    %vm4856 = vcmp.lt.f32.partialorder %v3594, 0.0
    %vm4857 = vcmp.lt.f32.partialorder %v3597, 0.0
    %vm4858 = vcmp.lt.f32.partialorder %v3600, 0.0
    %vm4859 = vcmp.lt.f32.partialorder %v3603, 0.0
    %vm4860 = vcmp.lt.f32.partialorder %v3606, 0.0
    %vm4861 = vcmp.lt.f32.partialorder %v3609, 0.0
    %vm4862 = vcmp.lt.f32.partialorder %v3612, 0.0
    %vm4863 = vcmp.lt.f32.partialorder %v3615, 0.0
    %vm4864 = vcmp.lt.f32.partialorder %v3618, 0.0
    %vm4865 = vcmp.lt.f32.partialorder %v3621, 0.0
    %vm4866 = vcmp.lt.f32.partialorder %v3624, 0.0
    %vm4867 = vcmp.lt.f32.partialorder %v3627, 0.0
    %vm4868 = vcmp.lt.f32.partialorder %v3630, 0.0
    %vm4869 = vcmp.lt.f32.partialorder %v3633, 0.0
    %vm4870 = vcmp.lt.f32.partialorder %v3636, 0.0
    %vm4871 = vcmp.lt.f32.partialorder %v3639, 0.0
    %vm4872 = vcmp.lt.f32.partialorder %v3642, 0.0
    %vm4873 = vcmp.lt.f32.partialorder %v3645, 0.0
    %vm4874 = vcmp.lt.f32.partialorder %v3648, 0.0
    %vm4875 = vcmp.lt.f32.partialorder %v3651, 0.0
    %vm4876 = vcmp.lt.f32.partialorder %v3654, 0.0
    %vm4877 = vcmp.lt.f32.partialorder %v3657, 0.0
    %vm4878 = vcmp.lt.f32.partialorder %v3660, 0.0
    %vm4879 = vcmp.lt.f32.partialorder %v3663, 0.0
    %vm4880 = vcmp.lt.f32.partialorder %v3666, 0.0
    %vm4881 = vcmp.lt.f32.partialorder %v3669, 0.0
    %vm4882 = vcmp.lt.f32.partialorder %v3672, 0.0
    %vm4883 = vcmp.lt.f32.partialorder %v3675, 0.0
    %vm4884 = vcmp.lt.f32.partialorder %v3678, 0.0
    %vm4885 = vcmp.lt.f32.partialorder %v3681, 0.0
    %vm4886 = vcmp.lt.f32.partialorder %v3684, 0.0
    %vm4887 = vcmp.lt.f32.partialorder %v3687, 0.0
    %vm4888 = vcmp.lt.f32.partialorder %v3690, 0.0
    %vm4889 = vcmp.lt.f32.partialorder %v3693, 0.0
    %vm4890 = vcmp.lt.f32.partialorder %v3696, 0.0
    %vm4891 = vcmp.lt.f32.partialorder %v3699, 0.0
    %vm4892 = vcmp.lt.f32.partialorder %v3702, 0.0
    %vm4893 = vcmp.lt.f32.partialorder %v3705, 0.0
    %vm4894 = vcmp.lt.f32.partialorder %v3708, 0.0
    %vm4895 = vcmp.lt.f32.partialorder %v3711, 0.0
    %vm4896 = vcmp.lt.f32.partialorder %v3714, 0.0
    %vm4897 = vcmp.lt.f32.partialorder %v3717, 0.0
    %vm4898 = vcmp.lt.f32.partialorder %v3720, 0.0
    %vm4899 = vcmp.lt.f32.partialorder %v3723, 0.0
    %vm4900 = vcmp.lt.f32.partialorder %v3726, 0.0
    %vm4901 = vcmp.lt.f32.partialorder %v3729, 0.0
    %vm4902 = vcmp.lt.f32.partialorder %v3732, 0.0
    %vm4903 = vcmp.lt.f32.partialorder %v3735, 0.0
    %vm4904 = vcmp.lt.f32.partialorder %v3738, 0.0
    %vm4905 = vcmp.lt.f32.partialorder %v3741, 0.0
    %vm4906 = vcmp.lt.f32.partialorder %v3744, 0.0
    %vm4907 = vcmp.lt.f32.partialorder %v3747, 0.0
    %vm4908 = vcmp.lt.f32.partialorder %v3750, 0.0
    %vm4909 = vcmp.lt.f32.partialorder %v3753, 0.0
    %v4910 = vsel %vm4877, -3.1415927, 3.1415927
    %v4911 = vsel %vm4878, -3.1415927, 3.1415927
    %v4912 = vsel %vm4879, -3.1415927, 3.1415927
    %v4913 = vsel %vm4880, -3.1415927, 3.1415927
    %v4914 = vsel %vm4881, -3.1415927, 3.1415927
    %v4915 = vsel %vm4882, -3.1415927, 3.1415927
    %v4916 = vsel %vm4883, -3.1415927, 3.1415927
    %v4917 = vsel %vm4884, -3.1415927, 3.1415927
    %v4918 = vsel %vm4885, -3.1415927, 3.1415927
    %v4919 = vsel %vm4886, -3.1415927, 3.1415927
    %v4920 = vsel %vm4887, -3.1415927, 3.1415927
    %v4921 = vsel %vm4888, -3.1415927, 3.1415927
    %v4922 = vsel %vm4889, -3.1415927, 3.1415927
    %v4923 = vsel %vm4890, -3.1415927, 3.1415927
    %v4924 = vsel %vm4891, -3.1415927, 3.1415927
    %v4925 = vsel %vm4892, -3.1415927, 3.1415927
    %v4926 = vsel %vm4893, -3.1415927, 3.1415927
    %v4927 = vsel %vm4894, -3.1415927, 3.1415927
    %v4928 = vsel %vm4895, -3.1415927, 3.1415927
    %v4929 = vsel %vm4896, -3.1415927, 3.1415927
    %v4930 = vsel %vm4897, -3.1415927, 3.1415927
    %v4931 = vsel %vm4898, -3.1415927, 3.1415927
    %v4932 = vsel %vm4899, -3.1415927, 3.1415927
    %v4933 = vsel %vm4900, -3.1415927, 3.1415927
    %v4934 = vsel %vm4901, -3.1415927, 3.1415927
    %v4935 = vsel %vm4902, -3.1415927, 3.1415927
    %v4936 = vsel %vm4903, -3.1415927, 3.1415927
    %v4937 = vsel %vm4904, -3.1415927, 3.1415927
    %v4938 = vsel %vm4905, -3.1415927, 3.1415927
    %v4939 = vsel %vm4906, -3.1415927, 3.1415927
    %v4940 = vsel %vm4907, -3.1415927, 3.1415927
    %v4941 = vsel %vm4908, -3.1415927, 3.1415927
    %v4942 = vsel %vm4909, -3.1415927, 3.1415927
    %v4943 = vsel %vm4844, %v4910, 0.0
    %v4944 = vsel %vm4845, %v4911, 0.0
    %v4945 = vsel %vm4846, %v4912, 0.0
    %v4946 = vsel %vm4847, %v4913, 0.0
    %v4947 = vsel %vm4848, %v4914, 0.0
    %v4948 = vsel %vm4849, %v4915, 0.0
    %v4949 = vsel %vm4850, %v4916, 0.0
    %v4950 = vsel %vm4851, %v4917, 0.0
    %v4951 = vsel %vm4852, %v4918, 0.0
    %v4952 = vsel %vm4853, %v4919, 0.0
    %v4953 = vsel %vm4854, %v4920, 0.0
    %v4954 = vsel %vm4855, %v4921, 0.0
    %v4955 = vsel %vm4856, %v4922, 0.0
    %v4956 = vsel %vm4857, %v4923, 0.0
    %v4957 = vsel %vm4858, %v4924, 0.0
    %v4958 = vsel %vm4859, %v4925, 0.0
    %v4959 = vsel %vm4860, %v4926, 0.0
    %v4960 = vsel %vm4861, %v4927, 0.0
    %v4961 = vsel %vm4862, %v4928, 0.0
    %v4962 = vsel %vm4863, %v4929, 0.0
    %v4963 = vsel %vm4864, %v4930, 0.0
    %v4964 = vsel %vm4865, %v4931, 0.0
    %v4965 = vsel %vm4866, %v4932, 0.0
    %v4966 = vsel %vm4867, %v4933, 0.0
    %v4967 = vsel %vm4868, %v4934, 0.0
    %v4968 = vsel %vm4869, %v4935, 0.0
    %v4969 = vsel %vm4870, %v4936, 0.0
    %v4970 = vsel %vm4871, %v4937, 0.0
    %v4971 = vsel %vm4872, %v4938, 0.0
    %v4972 = vsel %vm4873, %v4939, 0.0
    %v4973 = vsel %vm4874, %v4940, 0.0
    %v4974 = vsel %vm4875, %v4941, 0.0
    %v4975 = vsel %vm4876, %v4942, 0.0
    %v4976 = vadd.f32 %v4943, %v4811
    %v4977 = vadd.f32 %v4944, %v4812
    %v4978 = vadd.f32 %v4945, %v4813
    %v4979 = vadd.f32 %v4946, %v4814
    %v4980 = vadd.f32 %v4947, %v4815
    %v4981 = vadd.f32 %v4948, %v4816
    %v4982 = vadd.f32 %v4949, %v4817
    %v4983 = vadd.f32 %v4950, %v4818
    %v4984 = vadd.f32 %v4951, %v4819
    %v4985 = vadd.f32 %v4952, %v4820
    %v4986 = vadd.f32 %v4953, %v4821
    %v4987 = vadd.f32 %v4954, %v4822
    %v4988 = vadd.f32 %v4955, %v4823
    %v4989 = vadd.f32 %v4956, %v4824
    %v4990 = vadd.f32 %v4957, %v4825
    %v4991 = vadd.f32 %v4958, %v4826
    %v4992 = vadd.f32 %v4959, %v4827
    %v4993 = vadd.f32 %v4960, %v4828
    %v4994 = vadd.f32 %v4961, %v4829
    %v4995 = vadd.f32 %v4962, %v4830
    %v4996 = vadd.f32 %v4963, %v4831
    %v4997 = vadd.f32 %v4964, %v4832
    %v4998 = vadd.f32 %v4965, %v4833
    %v4999 = vadd.f32 %v4966, %v4834
    %v5000 = vadd.f32 %v4967, %v4835
    %v5001 = vadd.f32 %v4968, %v4836
    %v5002 = vadd.f32 %v4969, %v4837
    %v5003 = vadd.f32 %v4970, %v4838
    %v5004 = vadd.f32 %v4971, %v4839
    %v5005 = vadd.f32 %v4972, %v4840
    %v5006 = vadd.f32 %v4973, %v4841
    %v5007 = vadd.f32 %v4974, %v4842
    %v5008 = vadd.f32 %v4975, %v4843
    %vm5009 = vcmp.gt.f32.partialorder %v3657, 0.0
    %vm5010 = vcmp.gt.f32.partialorder %v3660, 0.0
    %vm5011 = vcmp.gt.f32.partialorder %v3663, 0.0
    %vm5012 = vcmp.gt.f32.partialorder %v3666, 0.0
    %vm5013 = vcmp.gt.f32.partialorder %v3669, 0.0
    %vm5014 = vcmp.gt.f32.partialorder %v3672, 0.0
    %vm5015 = vcmp.gt.f32.partialorder %v3675, 0.0
    %vm5016 = vcmp.gt.f32.partialorder %v3678, 0.0
    %vm5017 = vcmp.gt.f32.partialorder %v3681, 0.0
    %vm5018 = vcmp.gt.f32.partialorder %v3684, 0.0
    %vm5019 = vcmp.gt.f32.partialorder %v3687, 0.0
    %vm5020 = vcmp.gt.f32.partialorder %v3690, 0.0
    %vm5021 = vcmp.gt.f32.partialorder %v3693, 0.0
    %vm5022 = vcmp.gt.f32.partialorder %v3696, 0.0
    %vm5023 = vcmp.gt.f32.partialorder %v3699, 0.0
    %vm5024 = vcmp.gt.f32.partialorder %v3702, 0.0
    %vm5025 = vcmp.gt.f32.partialorder %v3705, 0.0
    %vm5026 = vcmp.gt.f32.partialorder %v3708, 0.0
    %vm5027 = vcmp.gt.f32.partialorder %v3711, 0.0
    %vm5028 = vcmp.gt.f32.partialorder %v3714, 0.0
    %vm5029 = vcmp.gt.f32.partialorder %v3717, 0.0
    %vm5030 = vcmp.gt.f32.partialorder %v3720, 0.0
    %vm5031 = vcmp.gt.f32.partialorder %v3723, 0.0
    %vm5032 = vcmp.gt.f32.partialorder %v3726, 0.0
    %vm5033 = vcmp.gt.f32.partialorder %v3729, 0.0
    %vm5034 = vcmp.gt.f32.partialorder %v3732, 0.0
    %vm5035 = vcmp.gt.f32.partialorder %v3735, 0.0
    %vm5036 = vcmp.gt.f32.partialorder %v3738, 0.0
    %vm5037 = vcmp.gt.f32.partialorder %v3741, 0.0
    %vm5038 = vcmp.gt.f32.partialorder %v3744, 0.0
    %vm5039 = vcmp.gt.f32.partialorder %v3747, 0.0
    %vm5040 = vcmp.gt.f32.partialorder %v3750, 0.0
    %vm5041 = vcmp.gt.f32.partialorder %v3753, 0.0
    %v5042 = vsel %vm4877, -1.5707964, 0.0
    %v5043 = vsel %vm4878, -1.5707964, 0.0
    %v5044 = vsel %vm4879, -1.5707964, 0.0
    %v5045 = vsel %vm4880, -1.5707964, 0.0
    %v5046 = vsel %vm4881, -1.5707964, 0.0
    %v5047 = vsel %vm4882, -1.5707964, 0.0
    %v5048 = vsel %vm4883, -1.5707964, 0.0
    %v5049 = vsel %vm4884, -1.5707964, 0.0
    %v5050 = vsel %vm4885, -1.5707964, 0.0
    %v5051 = vsel %vm4886, -1.5707964, 0.0
    %v5052 = vsel %vm4887, -1.5707964, 0.0
    %v5053 = vsel %vm4888, -1.5707964, 0.0
    %v5054 = vsel %vm4889, -1.5707964, 0.0
    %v5055 = vsel %vm4890, -1.5707964, 0.0
    %v5056 = vsel %vm4891, -1.5707964, 0.0
    %v5057 = vsel %vm4892, -1.5707964, 0.0
    %v5058 = vsel %vm4893, -1.5707964, 0.0
    %v5059 = vsel %vm4894, -1.5707964, 0.0
    %v5060 = vsel %vm4895, -1.5707964, 0.0
    %v5061 = vsel %vm4896, -1.5707964, 0.0
    %v5062 = vsel %vm4897, -1.5707964, 0.0
    %v5063 = vsel %vm4898, -1.5707964, 0.0
    %v5064 = vsel %vm4899, -1.5707964, 0.0
    %v5065 = vsel %vm4900, -1.5707964, 0.0
    %v5066 = vsel %vm4901, -1.5707964, 0.0
    %v5067 = vsel %vm4902, -1.5707964, 0.0
    %v5068 = vsel %vm4903, -1.5707964, 0.0
    %v5069 = vsel %vm4904, -1.5707964, 0.0
    %v5070 = vsel %vm4905, -1.5707964, 0.0
    %v5071 = vsel %vm4906, -1.5707964, 0.0
    %v5072 = vsel %vm4907, -1.5707964, 0.0
    %v5073 = vsel %vm4908, -1.5707964, 0.0
    %v5074 = vsel %vm4909, -1.5707964, 0.0
    %v5075 = vsel %vm5009, 1.5707964, %v5042
    %v5076 = vsel %vm5010, 1.5707964, %v5043
    %v5077 = vsel %vm5011, 1.5707964, %v5044
    %v5078 = vsel %vm5012, 1.5707964, %v5045
    %v5079 = vsel %vm5013, 1.5707964, %v5046
    %v5080 = vsel %vm5014, 1.5707964, %v5047
    %v5081 = vsel %vm5015, 1.5707964, %v5048
    %v5082 = vsel %vm5016, 1.5707964, %v5049
    %v5083 = vsel %vm5017, 1.5707964, %v5050
    %v5084 = vsel %vm5018, 1.5707964, %v5051
    %v5085 = vsel %vm5019, 1.5707964, %v5052
    %v5086 = vsel %vm5020, 1.5707964, %v5053
    %v5087 = vsel %vm5021, 1.5707964, %v5054
    %v5088 = vsel %vm5022, 1.5707964, %v5055
    %v5089 = vsel %vm5023, 1.5707964, %v5056
    %v5090 = vsel %vm5024, 1.5707964, %v5057
    %v5091 = vsel %vm5025, 1.5707964, %v5058
    %v5092 = vsel %vm5026, 1.5707964, %v5059
    %v5093 = vsel %vm5027, 1.5707964, %v5060
    %v5094 = vsel %vm5028, 1.5707964, %v5061
    %v5095 = vsel %vm5029, 1.5707964, %v5062
    %v5096 = vsel %vm5030, 1.5707964, %v5063
    %v5097 = vsel %vm5031, 1.5707964, %v5064
    %v5098 = vsel %vm5032, 1.5707964, %v5065
    %v5099 = vsel %vm5033, 1.5707964, %v5066
    %v5100 = vsel %vm5034, 1.5707964, %v5067
    %v5101 = vsel %vm5035, 1.5707964, %v5068
    %v5102 = vsel %vm5036, 1.5707964, %v5069
    %v5103 = vsel %vm5037, 1.5707964, %v5070
    %v5104 = vsel %vm5038, 1.5707964, %v5071
    %v5105 = vsel %vm5039, 1.5707964, %v5072
    %v5106 = vsel %vm5040, 1.5707964, %v5073
    %v5107 = vsel %vm5041, 1.5707964, %v5074
    %v5108 = vsel %vm3755, %v5075, %v4976
    %v5109 = vsel %vm3756, %v5076, %v4977
    %v5110 = vsel %vm3757, %v5077, %v4978
    %v5111 = vsel %vm3758, %v5078, %v4979
    %v5112 = vsel %vm3759, %v5079, %v4980
    %v5113 = vsel %vm3760, %v5080, %v4981
    %v5114 = vsel %vm3761, %v5081, %v4982
    %v5115 = vsel %vm3762, %v5082, %v4983
    %v5116 = vsel %vm3763, %v5083, %v4984
    %v5117 = vsel %vm3764, %v5084, %v4985
    %v5118 = vsel %vm3765, %v5085, %v4986
    %v5119 = vsel %vm3766, %v5086, %v4987
    %v5120 = vsel %vm3767, %v5087, %v4988
    %v5121 = vsel %vm3768, %v5088, %v4989
    %v5122 = vsel %vm3769, %v5089, %v4990
    %v5123 = vsel %vm3770, %v5090, %v4991
    %v5124 = vsel %vm3771, %v5091, %v4992
    %v5125 = vsel %vm3772, %v5092, %v4993
    %v5126 = vsel %vm3773, %v5093, %v4994
    %v5127 = vsel %vm3774, %v5094, %v4995
    %v5128 = vsel %vm3775, %v5095, %v4996
    %v5129 = vsel %vm3776, %v5096, %v4997
    %v5130 = vsel %vm3777, %v5097, %v4998
    %v5131 = vsel %vm3778, %v5098, %v4999
    %v5132 = vsel %vm3779, %v5099, %v5000
    %v5133 = vsel %vm3780, %v5100, %v5001
    %v5134 = vsel %vm3781, %v5101, %v5002
    %v5135 = vsel %vm3782, %v5102, %v5003
    %v5136 = vsel %vm3783, %v5103, %v5004
    %v5137 = vsel %vm3784, %v5104, %v5005
    %v5138 = vsel %vm3785, %v5105, %v5006
    %v5139 = vsel %vm3786, %v5106, %v5007
    %v5140 = vsel %vm3787, %v5107, %v5008
    %v5141 = vld [vmem:[%s4] sm:$0xff]
    %v5142 = vld [vmem:[%s4 + $0x8] sm:$0xff]
    %v5143 = vld [vmem:[%s4 + $0x10] sm:$0xff]
    %v5144 = vld [vmem:[%s4 + $0x18] sm:$0xff]
    %v5145 = vld [vmem:[%s4 + $0x20] sm:$0xff]
    %v5146 = vld [vmem:[%s4 + $0x28] sm:$0xff]
    %v5147 = vld [vmem:[%s4 + $0x30] sm:$0xff]
    %v5148 = vld [vmem:[%s4 + $0x38] sm:$0xff]
    %v5149 = vld [vmem:[%s4 + $0x40] sm:$0xff]
    %v5150 = vld [vmem:[%s4 + $0x48] sm:$0xff]
    %v5151 = vld [vmem:[%s4 + $0x50] sm:$0xff]
    %v5152 = vld [vmem:[%s4 + $0x58] sm:$0xff]
    %v5153 = vld [vmem:[%s4 + $0x60] sm:$0xff]
    %v5154 = vld [vmem:[%s4 + $0x68] sm:$0xff]
    %v5155 = vld [vmem:[%s4 + $0x70] sm:$0xff]
    %v5156 = vld [vmem:[%s4 + $0x78] sm:$0xff]
    %v5157 = vld [vmem:[%s4 + $0x80] sm:$0xff]
    %v5158 = vld [vmem:[%s4 + $0x88] sm:$0xff]
    %v5159 = vld [vmem:[%s4 + $0x90] sm:$0xff]
    %v5160 = vld [vmem:[%s4 + $0x98] sm:$0xff]
    %v5161 = vld [vmem:[%s4 + $0xa0] sm:$0xff]
    %v5162 = vld [vmem:[%s4 + $0xa8] sm:$0xff]
    %v5163 = vld [vmem:[%s4 + $0xb0] sm:$0xff]
    %v5164 = vld [vmem:[%s4 + $0xb8] sm:$0xff]
    %v5165 = vld [vmem:[%s4 + $0xc0] sm:$0xff]
    %v5166 = vld [vmem:[%s4 + $0xc8] sm:$0xff]
    %v5167 = vld [vmem:[%s4 + $0xd0] sm:$0xff]
    %v5168 = vld [vmem:[%s4 + $0xd8] sm:$0xff]
    %v5169 = vld [vmem:[%s4 + $0xe0] sm:$0xff]
    %v5170 = vld [vmem:[%s4 + $0xe8] sm:$0xff]
    %vm5171 = vcmask 64512
    %v5173 = vsel %vm5171, %v5143, 0
    %v5176 = vsel %vm5171, %v5146, 0
    %v5179 = vsel %vm5171, %v5149, 0
    %v5182 = vsel %vm5171, %v5152, 0
    %v5185 = vsel %vm5171, %v5155, 0
    %v5188 = vsel %vm5171, %v5158, 0
    %v5191 = vsel %vm5171, %v5161, 0
    %v5194 = vsel %vm5171, %v5164, 0
    %v5197 = vsel %vm5171, %v5167, 0
    %v5200 = vsel %vm5171, %v5170, 0
    %5202 = vmatpush.msra.mxu0 %v5123
    %5203 = vmatpush.msra.mxu0 %v5122
    %5204 = vmatpush.msra.mxu0 %v5121
    %5205 = vmatpush.msra.mxu0 %v5120
    %5206 = vmatpush.msra.mxu0 %v5119
    %5207 = vmatpush.msra.mxu0 %v5118
    %5208 = vmatpush.msra.mxu0 %v5117
    %5209 = vmatpush.msra.mxu0 %v5116
    %5210 = vmatpush.msra.mxu0 %v5115
    %5211 = vmatpush.msra.mxu0 %v5114
    %5212 = vmatpush.msra.mxu0 %v5113
    %5213 = vmatpush.msra.mxu0 %v5112
    %5214 = vmatpush.msra.mxu0 %v5111
    %5215 = vmatpush.msra.mxu0 %v5110
    %5216 = vmatpush.msra.mxu0 %v5109
    %5217 = vmatpush.msra.mxu0 %v5108
    %5218 = vmatmul.f32.gmra.mxu0 %v5141
    %v5219 = vpop.f32.mrf.mxu0
    %v5220 = vadd.f32 1e-08, %v5219
    %5221 = vmatmul.f32.gmra.mxu0 %v5144
    %v5222 = vpop.f32.mrf.mxu0
    %v5223 = vadd.f32 1e-08, %v5222
    %5224 = vmatmul.f32.gmra.mxu0 %v5147
    %v5225 = vpop.f32.mrf.mxu0
    %v5226 = vadd.f32 1e-08, %v5225
    %5227 = vmatmul.f32.gmra.mxu0 %v5150
    %v5228 = vpop.f32.mrf.mxu0
    %v5229 = vadd.f32 1e-08, %v5228
    %5230 = vmatmul.f32.gmra.mxu0 %v5153
    %v5231 = vpop.f32.mrf.mxu0
    %v5232 = vadd.f32 1e-08, %v5231
    %5233 = vmatmul.f32.gmra.mxu0 %v5156
    %v5234 = vpop.f32.mrf.mxu0
    %v5235 = vadd.f32 1e-08, %v5234
    %5236 = vmatmul.f32.gmra.mxu0 %v5159
    %v5237 = vpop.f32.mrf.mxu0
    %v5238 = vadd.f32 1e-08, %v5237
    %5239 = vmatmul.f32.gmra.mxu0 %v5162
    %v5240 = vpop.f32.mrf.mxu0
    %v5241 = vadd.f32 1e-08, %v5240
    %5242 = vmatmul.f32.gmra.mxu0 %v5165
    %v5243 = vpop.f32.mrf.mxu0
    %v5244 = vadd.f32 1e-08, %v5243
    %5245 = vmatmul.f32.gmra.mxu0 %v5168
    %v5246 = vpop.f32.mrf.mxu0
    %v5247 = vadd.f32 1e-08, %v5246
    %5248 = vdwg.mxu0
    %5249 = vmatpush.msra.mxu0 %v5139
    %5250 = vmatpush.msra.mxu0 %v5138
    %5251 = vmatpush.msra.mxu0 %v5137
    %5252 = vmatpush.msra.mxu0 %v5136
    %5253 = vmatpush.msra.mxu0 %v5135
    %5254 = vmatpush.msra.mxu0 %v5134
    %5255 = vmatpush.msra.mxu0 %v5133
    %5256 = vmatpush.msra.mxu0 %v5132
    %5257 = vmatpush.msra.mxu0 %v5131
    %5258 = vmatpush.msra.mxu0 %v5130
    %5259 = vmatpush.msra.mxu0 %v5129
    %5260 = vmatpush.msra.mxu0 %v5128
    %5261 = vmatpush.msra.mxu0 %v5127
    %5262 = vmatpush.msra.mxu0 %v5126
    %5263 = vmatpush.msra.mxu0 %v5125
    %5264 = vmatpush.msra.mxu0 %v5124
    %5265 = vmatmul.f32.gmra.mxu0 %v5142
    %v5266 = vpop.f32.mrf.mxu0
    %v5267 = vadd.f32 %v5220, %v5266
    %5268 = vmatmul.f32.gmra.mxu0 %v5145
    %v5269 = vpop.f32.mrf.mxu0
    %v5270 = vadd.f32 %v5223, %v5269
    %5271 = vmatmul.f32.gmra.mxu0 %v5148
    %v5272 = vpop.f32.mrf.mxu0
    %v5273 = vadd.f32 %v5226, %v5272
    %5274 = vmatmul.f32.gmra.mxu0 %v5151
    %v5275 = vpop.f32.mrf.mxu0
    %v5276 = vadd.f32 %v5229, %v5275
    %5277 = vmatmul.f32.gmra.mxu0 %v5154
    %v5278 = vpop.f32.mrf.mxu0
    %v5279 = vadd.f32 %v5232, %v5278
    %5280 = vmatmul.f32.gmra.mxu0 %v5157
    %v5281 = vpop.f32.mrf.mxu0
    %v5282 = vadd.f32 %v5235, %v5281
    %5283 = vmatmul.f32.gmra.mxu0 %v5160
    %v5284 = vpop.f32.mrf.mxu0
    %v5285 = vadd.f32 %v5238, %v5284
    %5286 = vmatmul.f32.gmra.mxu0 %v5163
    %v5287 = vpop.f32.mrf.mxu0
    %v5288 = vadd.f32 %v5241, %v5287
    %5289 = vmatmul.f32.gmra.mxu0 %v5166
    %v5290 = vpop.f32.mrf.mxu0
    %v5291 = vadd.f32 %v5244, %v5290
    %5292 = vmatmul.f32.gmra.mxu0 %v5169
    %v5293 = vpop.f32.mrf.mxu0
    %v5294 = vadd.f32 %v5247, %v5293
    %5295 = vdwg.mxu0
    %5296 = vmatpush.msra.mxu0 0.0
    %5297 = vmatpush.msra.mxu0 0.0
    %5298 = vmatpush.msra.mxu0 0.0
    %5299 = vmatpush.msra.mxu0 0.0
    %5300 = vmatpush.msra.mxu0 0.0
    %5301 = vmatpush.msra.mxu0 0.0
    %5302 = vmatpush.msra.mxu0 0.0
    %5303 = vmatpush.msra.mxu0 0.0
    %5304 = vmatpush.msra.mxu0 0.0
    %5305 = vmatpush.msra.mxu0 0.0
    %5306 = vmatpush.msra.mxu0 0.0
    %5307 = vmatpush.msra.mxu0 0.0
    %5308 = vmatpush.msra.mxu0 0.0
    %5309 = vmatpush.msra.mxu0 0.0
    %5310 = vmatpush.msra.mxu0 0.0
    %5311 = vmatpush.msra.mxu0 %v5140
    %5312 = vmatmul.f32.gmra.mxu0 %v5173
    %v5313 = vpop.f32.mrf.mxu0
    %v5314 = vadd.f32 %v5267, %v5313
    %5315 = vmatmul.f32.gmra.mxu0 %v5176
    %v5316 = vpop.f32.mrf.mxu0
    %v5317 = vadd.f32 %v5270, %v5316
    %5318 = vmatmul.f32.gmra.mxu0 %v5179
    %v5319 = vpop.f32.mrf.mxu0
    %v5320 = vadd.f32 %v5273, %v5319
    %5321 = vmatmul.f32.gmra.mxu0 %v5182
    %v5322 = vpop.f32.mrf.mxu0
    %v5323 = vadd.f32 %v5276, %v5322
    %5324 = vmatmul.f32.gmra.mxu0 %v5185
    %v5325 = vpop.f32.mrf.mxu0
    %v5326 = vadd.f32 %v5279, %v5325
    %5327 = vmatmul.f32.gmra.mxu0 %v5188
    %v5328 = vpop.f32.mrf.mxu0
    %v5329 = vadd.f32 %v5282, %v5328
    %5330 = vmatmul.f32.gmra.mxu0 %v5191
    %v5331 = vpop.f32.mrf.mxu0
    %v5332 = vadd.f32 %v5285, %v5331
    %5333 = vmatmul.f32.gmra.mxu0 %v5194
    %v5334 = vpop.f32.mrf.mxu0
    %v5335 = vadd.f32 %v5288, %v5334
    %5336 = vmatmul.f32.gmra.mxu0 %v5197
    %v5337 = vpop.f32.mrf.mxu0
    %v5338 = vadd.f32 %v5291, %v5337
    %5339 = vmatmul.f32.gmra.mxu0 %v5200
    %v5340 = vpop.f32.mrf.mxu0
    %v5341 = vadd.f32 %v5294, %v5340
    %5342 = vdwg.mxu0
    %v5343 = vlog2.pop %v5314
    %v5344 = vmul.f32 %v5343, 0.6931472
    %v5345 = vlog2.pop %v5317
    %v5346 = vmul.f32 %v5345, 0.6931472
    %v5347 = vlog2.pop %v5320
    %v5348 = vmul.f32 %v5347, 0.6931472
    %v5349 = vlog2.pop %v5323
    %v5350 = vmul.f32 %v5349, 0.6931472
    %v5351 = vlog2.pop %v5326
    %v5352 = vmul.f32 %v5351, 0.6931472
    %v5353 = vlog2.pop %v5329
    %v5354 = vmul.f32 %v5353, 0.6931472
    %v5355 = vlog2.pop %v5332
    %v5356 = vmul.f32 %v5355, 0.6931472
    %v5357 = vlog2.pop %v5335
    %v5358 = vmul.f32 %v5357, 0.6931472
    %v5359 = vlog2.pop %v5338
    %v5360 = vmul.f32 %v5359, 0.6931472
    %v5361 = vlog2.pop %v5341
    %v5362 = vmul.f32 %v5361, 0.6931472
    %5363 = vst [vmem:[#allocation2] sm:$0xff] %v5344
    %5364 = vst [vmem:[#allocation2 + $0x8] sm:$0xff] %v5346
    %5365 = vst [vmem:[#allocation2 + $0x10] sm:$0xff] %v5348
    %5366 = vst [vmem:[#allocation2 + $0x18] sm:$0xff] %v5350
    %5367 = vst [vmem:[#allocation2 + $0x20] sm:$0xff] %v5352
    %5368 = vst [vmem:[#allocation2 + $0x28] sm:$0xff] %v5354
    %5369 = vst [vmem:[#allocation2 + $0x30] sm:$0xff] %v5356
    %5370 = vst [vmem:[#allocation2 + $0x38] sm:$0xff] %v5358
    %5371 = vst [vmem:[#allocation2 + $0x40] sm:$0xff] %v5360
    %5372 = vst [vmem:[#allocation2 + $0x48] sm:$0xff] %v5362
    // Predicated region
    $region22: #{tpu_custom_call.1} parent=1 // pred_check
      _
    $region23: #{tpu_custom_call.1} parent=1 // pred_check_branch
      %5374 = sbr.rel (0) target = $region25
    $region24: #{tpu_custom_call.1} parent=1 // pred_region
      %5376 = vsyncadd [#allocation3], 0
      %s5377 = sshll.u32 [#allocation2], 4
      %s5378 = int_to_ptr.vmem [resolvable:$true] %s5377
      %s5379 = sshll.u32 %s5, 4
      %s5380 = int_to_ptr.hbm [resolvable:$true] %s5379
      %5385 = dma.vmem_to_hbm [thread:$0]  %s5378, 1280, %s5380, [#allocation3], 128, 128, 8
    $region25: #{tpu_custom_call.1} parent=1 // pred_fallthru
      _
    // Predicated region
    $region26: #{tpu_custom_call.1} parent=1 // pred_check
      _
    $region27: #{tpu_custom_call.1} parent=1 // pred_check_branch
      %5387 = sbr.rel (0) target = $region29
    $region28: #{tpu_custom_call.1} parent=1 // pred_region
      %5389 = dma.done [#allocation3], 1280
    $region29: #{tpu_custom_call.1} parent=1 // pred_fallthru
      _
    %5390 = vsyncpa [#allocation3], 1

</llo_original>
